<compile_context>
chip_gen: v7x
topology: tpu7x:2x2x1
jax: 0.10.0
libtpu: 0.0.40
codegen_flags: <defaults>
</compile_context>

<pallas_src>
import functools

import jax
import jax.numpy as jnp
from jax import lax
from jax.experimental import pallas as pl
from jax.experimental.pallas import tpu as pltpu


# ----------------------------------------------------------------------------
# Fused Pallas kernel: num_layers LSTM layers + linear classifier
# ----------------------------------------------------------------------------
def fused_lstm_kernel(*refs, num_layers, T, B_pad, H_pad):
    """Ref layout (all VMEM):
        refs[0]                  : x          (T*B_pad, D_pad)   time-major, flattened
        refs[1 + 3l + 0]         : w_ih_t[l]  (D_prev_pad, 4*H_pad)  gate blocks lane-aligned
        refs[1 + 3l + 1]         : w_hh_t[l]  (H_pad,      4*H_pad)
        refs[1 + 3l + 2]         : b[l]       (1,          4*H_pad)  (= b_ih + b_hh)
        refs[1 + 3L + 0]         : w_cls_t    (H_pad, O_pad)
        refs[1 + 3L + 1]         : b_cls      (1,     O_pad)
        refs[1 + 3L + 2]         : out        (B_pad, O_pad)          (output)
        refs[1 + 3L + 3]         : seq_scr    (T*B_pad, H_pad)        (scratch)
        refs[1 + 3L + 4]         : xp_scr     (T*B_pad, 4*H_pad)      (scratch)
    Gate order matches PyTorch nn.LSTM: [i, f, g, o], each block H_pad lanes wide.
    """
    x_ref = refs[0]
    layer_refs = refs[1:1 + 3 * num_layers]
    w_cls_t_ref, b_cls_ref, out_ref, seq_scr, xp_scr = refs[1 + 3 * num_layers:]

    in_ref = x_ref
    h_last = None

    for layer in range(num_layers):
        w_ih_t_ref = layer_refs[3 * layer + 0]
        w_hh_t_ref = layer_refs[3 * layer + 1]
        b_ref = layer_refs[3 * layer + 2]
        is_last = (layer == num_layers - 1)

        # ---- hoisted input projection over ALL timesteps (one MXU matmul,
        #      bias folded in), staged in VMEM scratch ------------------------
        xp_scr[...] = (
            jnp.dot(in_ref[...], w_ih_t_ref[...],
                    preferred_element_type=jnp.float32)
            + b_ref[...]
        )

        # ---- serial recurrence: only h @ W_hh^T + gate math per step --------
        def step(t, carry):
            h, c = carry
            row0 = pl.multiple_of(t * B_pad, B_pad)
            rows = pl.ds(row0, B_pad)
            gates = xp_scr[rows, :] + jnp.dot(
                h, w_hh_t_ref[...], preferred_element_type=jnp.float32)
            i = jax.nn.sigmoid(gates[:, 0 * H_pad:1 * H_pad])
            f = jax.nn.sigmoid(gates[:, 1 * H_pad:2 * H_pad])
            g = jnp.tanh(gates[:, 2 * H_pad:3 * H_pad])
            o = jax.nn.sigmoid(gates[:, 3 * H_pad:4 * H_pad])
            c_new = f * c + i * g
            h_new = o * jnp.tanh(c_new)
            if not is_last:
                # Intermediate layers: keep the hidden sequence in VMEM scratch
                # (never touches HBM).
                seq_scr[rows, :] = h_new
            return (h_new, c_new)

        h0 = jnp.zeros((B_pad, H_pad), jnp.float32)
        c0 = jnp.zeros((B_pad, H_pad), jnp.float32)
        h_last, _ = lax.fori_loop(0, T, step, (h0, c0),
                                  unroll=(True if T <= 16 else 8))
        in_ref = seq_scr  # next layer consumes this layer's hidden sequence

    # ---- fused classifier on the last hidden state of the last layer -------
    out_ref[...] = (
        jnp.dot(h_last, w_cls_t_ref[...], preferred_element_type=jnp.float32)
        + b_cls_ref[...]
    ).astype(out_ref.dtype)


# ----------------------------------------------------------------------------
# Wrapper: parameter padding / layout plumbing in plain JAX, hot path in Pallas
# ----------------------------------------------------------------------------
_VMEM = pl.BlockSpec(memory_space=pltpu.MemorySpace.VMEM)


def _round_up(n, m):
    return ((n + m - 1) // m) * m


def _pad_gate_matrix(w_t, rows_pad, H, H_pad):
    """(rows, 4H) gate-ordered [i|f|g|o] -> (rows_pad, 4*H_pad); each gate block
    is placed lane-aligned at g*H_pad, zeros elsewhere."""
    rows = w_t.shape[0]
    out = jnp.zeros((rows_pad, 4 * H_pad), jnp.float32)
    for g in range(4):
        out = out.at[:rows, g * H_pad:g * H_pad + H].set(
            w_t[:, g * H:(g + 1) * H])
    return out


def _pad_gate_bias(b, H, H_pad):
    out = jnp.zeros((1, 4 * H_pad), jnp.float32)
    for g in range(4):
        out = out.at[0, g * H_pad:g * H_pad + H].set(b[g * H:(g + 1) * H])
    return out


def init_params(key, input_dim, hidden_dim, num_layers, output_dim):
    """PyTorch-shaped params, U(-1/sqrt(H), 1/sqrt(H)) init like nn.LSTM/nn.Linear."""
    k = 1.0 / jnp.sqrt(jnp.float32(hidden_dim))
    params = {"lstm": [], "classifier": None}
    for layer in range(num_layers):
        d_in = input_dim if layer == 0 else hidden_dim
        key, k1, k2, k3, k4 = jax.random.split(key, 5)
        w_ih = jax.random.uniform(k1, (4 * hidden_dim, d_in), jnp.float32, -k, k)
        w_hh = jax.random.uniform(k2, (4 * hidden_dim, hidden_dim), jnp.float32, -k, k)
        b_ih = jax.random.uniform(k3, (4 * hidden_dim,), jnp.float32, -k, k)
        b_hh = jax.random.uniform(k4, (4 * hidden_dim,), jnp.float32, -k, k)
        params["lstm"].append((w_ih, w_hh, b_ih, b_hh))
    key, k1, k2 = jax.random.split(key, 3)
    kc = 1.0 / jnp.sqrt(jnp.float32(hidden_dim))
    w_cls = jax.random.uniform(k1, (output_dim, hidden_dim), jnp.float32, -kc, kc)
    b_cls = jax.random.uniform(k2, (output_dim,), jnp.float32, -kc, kc)
    params["classifier"] = (w_cls, b_cls)
    return params


@jax.jit
def my_lstm_forward(x, params):
    """x: (B, T, input_dim) batch-first, like the PyTorch module.
    Returns logits of shape (B, output_dim)."""
    B, T, D_in = x.shape
    num_layers = len(params["lstm"])
    H = params["lstm"][0][1].shape[1]          # w_hh: (4H, H)
    w_cls, b_cls = params["classifier"]
    O = w_cls.shape[0]

    B_pad = _round_up(B, 8)                    # sublane multiple
    D_pad = _round_up(D_in, 128)               # lane multiples
    H_pad = _round_up(H, 128)
    O_pad = _round_up(O, 128)

    # batch-first -> time-major, zero-pad batch & features, flatten to 2-D so
    # the hoisted input projection is one plain MXU matmul.
    seq = jnp.transpose(x, (1, 0, 2)).astype(jnp.float32)            # (T, B, D)
    seq = jnp.pad(seq, ((0, 0), (0, B_pad - B), (0, D_pad - D_in)))  # (T, B_pad, D_pad)
    seq2d = seq.reshape(T * B_pad, D_pad)

    args = [seq2d]
    for layer, (w_ih, w_hh, b_ih, b_hh) in enumerate(params["lstm"]):
        rows_pad = D_pad if layer == 0 else H_pad
        w_ih_t = _pad_gate_matrix(jnp.transpose(w_ih).astype(jnp.float32),
                                  rows_pad, H, H_pad)
        w_hh_t = _pad_gate_matrix(jnp.transpose(w_hh).astype(jnp.float32),
                                  H_pad, H, H_pad)
        b = _pad_gate_bias((b_ih + b_hh).astype(jnp.float32), H, H_pad)
        args += [w_ih_t, w_hh_t, b]

    w_cls_t = jnp.zeros((H_pad, O_pad), jnp.float32).at[:H, :O].set(
        jnp.transpose(w_cls).astype(jnp.float32))
    b_cls_p = jnp.zeros((1, O_pad), jnp.float32).at[0, :O].set(
        b_cls.astype(jnp.float32))
    args += [w_cls_t, b_cls_p]

    kernel = functools.partial(fused_lstm_kernel, num_layers=num_layers,
                               T=T, B_pad=B_pad, H_pad=H_pad)
    y_full = pl.pallas_call(
        kernel,
        out_shape=jax.ShapeDtypeStruct((B_pad, O_pad), jnp.float32),
        in_specs=[_VMEM] * len(args),
        out_specs=_VMEM,
        scratch_shapes=[
            pltpu.VMEM((T * B_pad, H_pad), jnp.float32),      # inter-layer h sequence
            pltpu.VMEM((T * B_pad, 4 * H_pad), jnp.float32),  # hoisted input projection
        ],
    )(*args)
    return y_full[:B, :O]


# ----------------------------------------------------------------------------
# Pure-JAX reference (correctness check)
# ----------------------------------------------------------------------------
def reference_forward(x, params):
    seq = x.astype(jnp.float32)
    B = x.shape[0]
    for (w_ih, w_hh, b_ih, b_hh) in params["lstm"]:
        H = w_hh.shape[1]

        def cell(carry, x_t):
            h, c = carry
            gates = x_t @ w_ih.T + b_ih + h @ w_hh.T + b_hh
            i = jax.nn.sigmoid(gates[:, 0 * H:1 * H])
            f = jax.nn.sigmoid(gates[:, 1 * H:2 * H])
            g = jnp.tanh(gates[:, 2 * H:3 * H])
            o = jax.nn.sigmoid(gates[:, 3 * H:4 * H])
            c_new = f * c + i * g
            h_new = o * jnp.tanh(c_new)
            return (h_new, c_new), h_new

        h0 = jnp.zeros((B, H), jnp.float32)
        c0 = jnp.zeros((B, H), jnp.float32)
        _, hs = lax.scan(cell, (h0, c0), jnp.transpose(seq, (1, 0, 2)))
        seq = jnp.transpose(hs, (1, 0, 2))
    w_cls, b_cls = params["classifier"]
    return seq[:, -1, :] @ w_cls.T + b_cls


# ----------------------------------------------------------------------------
if __name__ == "__main__":
    # module config: input_dim=16, hidden_dim=32, num_layers=2, output_dim=8
    B, T = 2, 8
    input_dim, hidden_dim, num_layers, output_dim = 16, 32, 2, 8

    key = jax.random.PRNGKey(0)
    key, kx, kp = jax.random.split(key, 3)
    x = jax.random.normal(kx, (B, T, input_dim), jnp.float32)
    params = init_params(kp, input_dim, hidden_dim, num_layers, output_dim)

    y = my_lstm_forward(x, params)
    y = jax.block_until_ready(y)

    y_ref = reference_forward(x, params)
    assert y.shape == (B, output_dim), y.shape
    assert jnp.allclose(y, y_ref, atol=1e-4, rtol=1e-4), "mismatch vs reference"

    print("KERNEL_OK")
</pallas_src>

<mosaic_0001>
module attributes {stable_mosaic.version = 11 : i64} {
  func.func @fused_lstm_kernel(%arg0: memref<64x128xf32, #tpu.memory_space<vmem>>, %arg1: memref<128x512xf32, #tpu.memory_space<vmem>>, %arg2: memref<128x512xf32, #tpu.memory_space<vmem>>, %arg3: memref<1x512xf32, #tpu.memory_space<vmem>>, %arg4: memref<128x512xf32, #tpu.memory_space<vmem>>, %arg5: memref<128x512xf32, #tpu.memory_space<vmem>>, %arg6: memref<1x512xf32, #tpu.memory_space<vmem>>, %arg7: memref<128x128xf32, #tpu.memory_space<vmem>>, %arg8: memref<1x128xf32, #tpu.memory_space<vmem>>, %arg9: memref<8x128xf32, #tpu.memory_space<vmem>>, %arg10: memref<64x128xf32, #tpu.memory_space<vmem>>, %arg11: memref<64x512xf32, #tpu.memory_space<vmem>>) attributes {dimension_semantics = [], scalar_prefetch = 0 : i64, scratch_operands = 2 : i64, tpu.core_type = #tpu.core_type<tc>} {
    %c0 = arith.constant 0 : index
    %c0_0 = arith.constant 0 : index
    %0 = vector.load %arg0[%c0, %c0_0] : memref<64x128xf32, #tpu.memory_space<vmem>>, vector<64x128xf32>
    %c0_1 = arith.constant 0 : index
    %c0_2 = arith.constant 0 : index
    %1 = vector.load %arg1[%c0_1, %c0_2] : memref<128x512xf32, #tpu.memory_space<vmem>>, vector<128x512xf32>
    %cst = arith.constant dense<0.000000e+00> : vector<64x512xf32>
    %2 = tpu.matmul %0, %1, %cst {dimension_numbers = #tpu.dot_dimension_numbers<[1], [0], [0], [1], [0, 0, 1, 1], [], []>} : vector<64x128xf32>, vector<128x512xf32>, vector<64x512xf32> -> vector<64x512xf32>
    %c0_3 = arith.constant 0 : index
    %c0_4 = arith.constant 0 : index
    %3 = vector.load %arg3[%c0_3, %c0_4] : memref<1x512xf32, #tpu.memory_space<vmem>>, vector<1x512xf32>
    %4 = vector.broadcast %3 : vector<1x512xf32> to vector<64x512xf32>
    %5 = arith.addf %2, %4 : vector<64x512xf32>
    %c0_5 = arith.constant 0 : index
    %c0_6 = arith.constant 0 : index
    %6 = vector.load %arg11[%c0_5, %c0_6] : memref<64x512xf32, #tpu.memory_space<vmem>>, vector<64x512xf32>
    tpu.vector_store %arg11[%c0_5, %c0_6], %5 {strides = array<i32>} : memref<64x512xf32, #tpu.memory_space<vmem>>, vector<64x512xf32>,
    %cst_7 = arith.constant 0.000000e+00 : f32
    %7 = vector.broadcast %cst_7 : f32 to vector<8x128xf32>
    %cst_8 = arith.constant 0.000000e+00 : f32
    %8 = vector.broadcast %cst_8 : f32 to vector<8x128xf32>
    %c0_i32 = arith.constant 0 : i32
    %c8_i32 = arith.constant 8 : i32
    %9 = arith.muli %c0_i32, %c8_i32 : i32
    %10 = tpu.assume_multiple %9, 8 : i32
    %11 = arith.index_cast %10 : i32 to index
    %c0_9 = arith.constant 0 : index
    %12 = vector.load %arg11[%11, %c0_9] : memref<64x512xf32, #tpu.memory_space<vmem>>, vector<8x512xf32>
    %c0_10 = arith.constant 0 : index
    %c0_11 = arith.constant 0 : index
    %13 = vector.load %arg2[%c0_10, %c0_11] : memref<128x512xf32, #tpu.memory_space<vmem>>, vector<128x512xf32>
    %cst_12 = arith.constant dense<0.000000e+00> : vector<8x512xf32>
    %14 = tpu.matmul %7, %13, %cst_12 {dimension_numbers = #tpu.dot_dimension_numbers<[1], [0], [0], [1], [0, 0, 1, 1], [], []>} : vector<8x128xf32>, vector<128x512xf32>, vector<8x512xf32> -> vector<8x512xf32>
    %15 = arith.addf %12, %14 : vector<8x512xf32>
    %16 = vector.extract_strided_slice %15 {offsets = [0, 0], sizes = [8, 128], strides = [1, 1]} : vector<8x512xf32> to vector<8x128xf32>
    %17 = arith.negf %16 : vector<8x128xf32>
    %18 = math.exp %17 : vector<8x128xf32>
    %cst_13 = arith.constant 1.000000e+00 : f32
    %19 = vector.broadcast %cst_13 : f32 to vector<8x128xf32>
    %20 = arith.addf %19, %18 : vector<8x128xf32>
    %21 = arith.divf %19, %20 : vector<8x128xf32>
    %22 = vector.extract_strided_slice %15 {offsets = [0, 128], sizes = [8, 128], strides = [1, 1]} : vector<8x512xf32> to vector<8x128xf32>
    %23 = arith.negf %22 : vector<8x128xf32>
    %24 = math.exp %23 : vector<8x128xf32>
    %cst_14 = arith.constant 1.000000e+00 : f32
    %25 = vector.broadcast %cst_14 : f32 to vector<8x128xf32>
    %26 = arith.addf %25, %24 : vector<8x128xf32>
    %27 = arith.divf %25, %26 : vector<8x128xf32>
    %28 = vector.extract_strided_slice %15 {offsets = [0, 256], sizes = [8, 128], strides = [1, 1]} : vector<8x512xf32> to vector<8x128xf32>
    %29 = math.tanh %28 : vector<8x128xf32>
    %30 = vector.extract_strided_slice %15 {offsets = [0, 384], sizes = [8, 128], strides = [1, 1]} : vector<8x512xf32> to vector<8x128xf32>
    %31 = arith.negf %30 : vector<8x128xf32>
    %32 = math.exp %31 : vector<8x128xf32>
    %cst_15 = arith.constant 1.000000e+00 : f32
    %33 = vector.broadcast %cst_15 : f32 to vector<8x128xf32>
    %34 = arith.addf %33, %32 : vector<8x128xf32>
    %35 = arith.divf %33, %34 : vector<8x128xf32>
    %36 = arith.mulf %27, %8 : vector<8x128xf32>
    %37 = arith.mulf %21, %29 : vector<8x128xf32>
    %38 = arith.addf %36, %37 : vector<8x128xf32>
    %39 = math.tanh %38 : vector<8x128xf32>
    %40 = arith.mulf %35, %39 : vector<8x128xf32>
    %41 = arith.index_cast %10 : i32 to index
    %c0_16 = arith.constant 0 : index
    %42 = vector.load %arg10[%41, %c0_16] : memref<64x128xf32, #tpu.memory_space<vmem>>, vector<8x128xf32>
    tpu.vector_store %arg10[%41, %c0_16], %40 {strides = array<i32>} : memref<64x128xf32, #tpu.memory_space<vmem>>, vector<8x128xf32>,
    %c1_i32 = arith.constant 1 : i32
    %c8_i32_17 = arith.constant 8 : i32
    %43 = arith.muli %c1_i32, %c8_i32_17 : i32
    %44 = tpu.assume_multiple %43, 8 : i32
    %45 = arith.index_cast %44 : i32 to index
    %c0_18 = arith.constant 0 : index
    %46 = vector.load %arg11[%45, %c0_18] : memref<64x512xf32, #tpu.memory_space<vmem>>, vector<8x512xf32>
    %c0_19 = arith.constant 0 : index
    %c0_20 = arith.constant 0 : index
    %47 = vector.load %arg2[%c0_19, %c0_20] : memref<128x512xf32, #tpu.memory_space<vmem>>, vector<128x512xf32>
    %cst_21 = arith.constant dense<0.000000e+00> : vector<8x512xf32>
    %48 = tpu.matmul %40, %47, %cst_21 {dimension_numbers = #tpu.dot_dimension_numbers<[1], [0], [0], [1], [0, 0, 1, 1], [], []>} : vector<8x128xf32>, vector<128x512xf32>, vector<8x512xf32> -> vector<8x512xf32>
    %49 = arith.addf %46, %48 : vector<8x512xf32>
    %50 = vector.extract_strided_slice %49 {offsets = [0, 0], sizes = [8, 128], strides = [1, 1]} : vector<8x512xf32> to vector<8x128xf32>
    %51 = arith.negf %50 : vector<8x128xf32>
    %52 = math.exp %51 : vector<8x128xf32>
    %cst_22 = arith.constant 1.000000e+00 : f32
    %53 = vector.broadcast %cst_22 : f32 to vector<8x128xf32>
    %54 = arith.addf %53, %52 : vector<8x128xf32>
    %55 = arith.divf %53, %54 : vector<8x128xf32>
    %56 = vector.extract_strided_slice %49 {offsets = [0, 128], sizes = [8, 128], strides = [1, 1]} : vector<8x512xf32> to vector<8x128xf32>
    %57 = arith.negf %56 : vector<8x128xf32>
    %58 = math.exp %57 : vector<8x128xf32>
    %cst_23 = arith.constant 1.000000e+00 : f32
    %59 = vector.broadcast %cst_23 : f32 to vector<8x128xf32>
    %60 = arith.addf %59, %58 : vector<8x128xf32>
    %61 = arith.divf %59, %60 : vector<8x128xf32>
    %62 = vector.extract_strided_slice %49 {offsets = [0, 256], sizes = [8, 128], strides = [1, 1]} : vector<8x512xf32> to vector<8x128xf32>
    %63 = math.tanh %62 : vector<8x128xf32>
    %64 = vector.extract_strided_slice %49 {offsets = [0, 384], sizes = [8, 128], strides = [1, 1]} : vector<8x512xf32> to vector<8x128xf32>
    %65 = arith.negf %64 : vector<8x128xf32>
    %66 = math.exp %65 : vector<8x128xf32>
    %cst_24 = arith.constant 1.000000e+00 : f32
    %67 = vector.broadcast %cst_24 : f32 to vector<8x128xf32>
    %68 = arith.addf %67, %66 : vector<8x128xf32>
    %69 = arith.divf %67, %68 : vector<8x128xf32>
    %70 = arith.mulf %61, %38 : vector<8x128xf32>
    %71 = arith.mulf %55, %63 : vector<8x128xf32>
    %72 = arith.addf %70, %71 : vector<8x128xf32>
    %73 = math.tanh %72 : vector<8x128xf32>
    %74 = arith.mulf %69, %73 : vector<8x128xf32>
    %75 = arith.index_cast %44 : i32 to index
    %c0_25 = arith.constant 0 : index
    %76 = vector.load %arg10[%75, %c0_25] : memref<64x128xf32, #tpu.memory_space<vmem>>, vector<8x128xf32>
    tpu.vector_store %arg10[%75, %c0_25], %74 {strides = array<i32>} : memref<64x128xf32, #tpu.memory_space<vmem>>, vector<8x128xf32>,
    %c2_i32 = arith.constant 2 : i32
    %c8_i32_26 = arith.constant 8 : i32
    %77 = arith.muli %c2_i32, %c8_i32_26 : i32
    %78 = tpu.assume_multiple %77, 8 : i32
    %79 = arith.index_cast %78 : i32 to index
    %c0_27 = arith.constant 0 : index
    %80 = vector.load %arg11[%79, %c0_27] : memref<64x512xf32, #tpu.memory_space<vmem>>, vector<8x512xf32>
    %c0_28 = arith.constant 0 : index
    %c0_29 = arith.constant 0 : index
    %81 = vector.load %arg2[%c0_28, %c0_29] : memref<128x512xf32, #tpu.memory_space<vmem>>, vector<128x512xf32>
    %cst_30 = arith.constant dense<0.000000e+00> : vector<8x512xf32>
    %82 = tpu.matmul %74, %81, %cst_30 {dimension_numbers = #tpu.dot_dimension_numbers<[1], [0], [0], [1], [0, 0, 1, 1], [], []>} : vector<8x128xf32>, vector<128x512xf32>, vector<8x512xf32> -> vector<8x512xf32>
    %83 = arith.addf %80, %82 : vector<8x512xf32>
    %84 = vector.extract_strided_slice %83 {offsets = [0, 0], sizes = [8, 128], strides = [1, 1]} : vector<8x512xf32> to vector<8x128xf32>
    %85 = arith.negf %84 : vector<8x128xf32>
    %86 = math.exp %85 : vector<8x128xf32>
    %cst_31 = arith.constant 1.000000e+00 : f32
    %87 = vector.broadcast %cst_31 : f32 to vector<8x128xf32>
    %88 = arith.addf %87, %86 : vector<8x128xf32>
    %89 = arith.divf %87, %88 : vector<8x128xf32>
    %90 = vector.extract_strided_slice %83 {offsets = [0, 128], sizes = [8, 128], strides = [1, 1]} : vector<8x512xf32> to vector<8x128xf32>
    %91 = arith.negf %90 : vector<8x128xf32>
    %92 = math.exp %91 : vector<8x128xf32>
    %cst_32 = arith.constant 1.000000e+00 : f32
    %93 = vector.broadcast %cst_32 : f32 to vector<8x128xf32>
    %94 = arith.addf %93, %92 : vector<8x128xf32>
    %95 = arith.divf %93, %94 : vector<8x128xf32>
    %96 = vector.extract_strided_slice %83 {offsets = [0, 256], sizes = [8, 128], strides = [1, 1]} : vector<8x512xf32> to vector<8x128xf32>
    %97 = math.tanh %96 : vector<8x128xf32>
    %98 = vector.extract_strided_slice %83 {offsets = [0, 384], sizes = [8, 128], strides = [1, 1]} : vector<8x512xf32> to vector<8x128xf32>
    %99 = arith.negf %98 : vector<8x128xf32>
    %100 = math.exp %99 : vector<8x128xf32>
    %cst_33 = arith.constant 1.000000e+00 : f32
    %101 = vector.broadcast %cst_33 : f32 to vector<8x128xf32>
    %102 = arith.addf %101, %100 : vector<8x128xf32>
    %103 = arith.divf %101, %102 : vector<8x128xf32>
    %104 = arith.mulf %95, %72 : vector<8x128xf32>
    %105 = arith.mulf %89, %97 : vector<8x128xf32>
    %106 = arith.addf %104, %105 : vector<8x128xf32>
    %107 = math.tanh %106 : vector<8x128xf32>
    %108 = arith.mulf %103, %107 : vector<8x128xf32>
    %109 = arith.index_cast %78 : i32 to index
    %c0_34 = arith.constant 0 : index
    %110 = vector.load %arg10[%109, %c0_34] : memref<64x128xf32, #tpu.memory_space<vmem>>, vector<8x128xf32>
    tpu.vector_store %arg10[%109, %c0_34], %108 {strides = array<i32>} : memref<64x128xf32, #tpu.memory_space<vmem>>, vector<8x128xf32>,
    %c3_i32 = arith.constant 3 : i32
    %c8_i32_35 = arith.constant 8 : i32
    %111 = arith.muli %c3_i32, %c8_i32_35 : i32
    %112 = tpu.assume_multiple %111, 8 : i32
    %113 = arith.index_cast %112 : i32 to index
    %c0_36 = arith.constant 0 : index
    %114 = vector.load %arg11[%113, %c0_36] : memref<64x512xf32, #tpu.memory_space<vmem>>, vector<8x512xf32>
    %c0_37 = arith.constant 0 : index
    %c0_38 = arith.constant 0 : index
    %115 = vector.load %arg2[%c0_37, %c0_38] : memref<128x512xf32, #tpu.memory_space<vmem>>, vector<128x512xf32>
    %cst_39 = arith.constant dense<0.000000e+00> : vector<8x512xf32>
    %116 = tpu.matmul %108, %115, %cst_39 {dimension_numbers = #tpu.dot_dimension_numbers<[1], [0], [0], [1], [0, 0, 1, 1], [], []>} : vector<8x128xf32>, vector<128x512xf32>, vector<8x512xf32> -> vector<8x512xf32>
    %117 = arith.addf %114, %116 : vector<8x512xf32>
    %118 = vector.extract_strided_slice %117 {offsets = [0, 0], sizes = [8, 128], strides = [1, 1]} : vector<8x512xf32> to vector<8x128xf32>
    %119 = arith.negf %118 : vector<8x128xf32>
    %120 = math.exp %119 : vector<8x128xf32>
    %cst_40 = arith.constant 1.000000e+00 : f32
    %121 = vector.broadcast %cst_40 : f32 to vector<8x128xf32>
    %122 = arith.addf %121, %120 : vector<8x128xf32>
    %123 = arith.divf %121, %122 : vector<8x128xf32>
    %124 = vector.extract_strided_slice %117 {offsets = [0, 128], sizes = [8, 128], strides = [1, 1]} : vector<8x512xf32> to vector<8x128xf32>
    %125 = arith.negf %124 : vector<8x128xf32>
    %126 = math.exp %125 : vector<8x128xf32>
    %cst_41 = arith.constant 1.000000e+00 : f32
    %127 = vector.broadcast %cst_41 : f32 to vector<8x128xf32>
    %128 = arith.addf %127, %126 : vector<8x128xf32>
    %129 = arith.divf %127, %128 : vector<8x128xf32>
    %130 = vector.extract_strided_slice %117 {offsets = [0, 256], sizes = [8, 128], strides = [1, 1]} : vector<8x512xf32> to vector<8x128xf32>
    %131 = math.tanh %130 : vector<8x128xf32>
    %132 = vector.extract_strided_slice %117 {offsets = [0, 384], sizes = [8, 128], strides = [1, 1]} : vector<8x512xf32> to vector<8x128xf32>
    %133 = arith.negf %132 : vector<8x128xf32>
    %134 = math.exp %133 : vector<8x128xf32>
    %cst_42 = arith.constant 1.000000e+00 : f32
    %135 = vector.broadcast %cst_42 : f32 to vector<8x128xf32>
    %136 = arith.addf %135, %134 : vector<8x128xf32>
    %137 = arith.divf %135, %136 : vector<8x128xf32>
    %138 = arith.mulf %129, %106 : vector<8x128xf32>
    %139 = arith.mulf %123, %131 : vector<8x128xf32>
    %140 = arith.addf %138, %139 : vector<8x128xf32>
    %141 = math.tanh %140 : vector<8x128xf32>
    %142 = arith.mulf %137, %141 : vector<8x128xf32>
    %143 = arith.index_cast %112 : i32 to index
    %c0_43 = arith.constant 0 : index
    %144 = vector.load %arg10[%143, %c0_43] : memref<64x128xf32, #tpu.memory_space<vmem>>, vector<8x128xf32>
    tpu.vector_store %arg10[%143, %c0_43], %142 {strides = array<i32>} : memref<64x128xf32, #tpu.memory_space<vmem>>, vector<8x128xf32>,
    %c4_i32 = arith.constant 4 : i32
    %c8_i32_44 = arith.constant 8 : i32
    %145 = arith.muli %c4_i32, %c8_i32_44 : i32
    %146 = tpu.assume_multiple %145, 8 : i32
    %147 = arith.index_cast %146 : i32 to index
    %c0_45 = arith.constant 0 : index
    %148 = vector.load %arg11[%147, %c0_45] : memref<64x512xf32, #tpu.memory_space<vmem>>, vector<8x512xf32>
    %c0_46 = arith.constant 0 : index
    %c0_47 = arith.constant 0 : index
    %149 = vector.load %arg2[%c0_46, %c0_47] : memref<128x512xf32, #tpu.memory_space<vmem>>, vector<128x512xf32>
    %cst_48 = arith.constant dense<0.000000e+00> : vector<8x512xf32>
    %150 = tpu.matmul %142, %149, %cst_48 {dimension_numbers = #tpu.dot_dimension_numbers<[1], [0], [0], [1], [0, 0, 1, 1], [], []>} : vector<8x128xf32>, vector<128x512xf32>, vector<8x512xf32> -> vector<8x512xf32>
    %151 = arith.addf %148, %150 : vector<8x512xf32>
    %152 = vector.extract_strided_slice %151 {offsets = [0, 0], sizes = [8, 128], strides = [1, 1]} : vector<8x512xf32> to vector<8x128xf32>
    %153 = arith.negf %152 : vector<8x128xf32>
    %154 = math.exp %153 : vector<8x128xf32>
    %cst_49 = arith.constant 1.000000e+00 : f32
    %155 = vector.broadcast %cst_49 : f32 to vector<8x128xf32>
    %156 = arith.addf %155, %154 : vector<8x128xf32>
    %157 = arith.divf %155, %156 : vector<8x128xf32>
    %158 = vector.extract_strided_slice %151 {offsets = [0, 128], sizes = [8, 128], strides = [1, 1]} : vector<8x512xf32> to vector<8x128xf32>
    %159 = arith.negf %158 : vector<8x128xf32>
    %160 = math.exp %159 : vector<8x128xf32>
    %cst_50 = arith.constant 1.000000e+00 : f32
    %161 = vector.broadcast %cst_50 : f32 to vector<8x128xf32>
    %162 = arith.addf %161, %160 : vector<8x128xf32>
    %163 = arith.divf %161, %162 : vector<8x128xf32>
    %164 = vector.extract_strided_slice %151 {offsets = [0, 256], sizes = [8, 128], strides = [1, 1]} : vector<8x512xf32> to vector<8x128xf32>
    %165 = math.tanh %164 : vector<8x128xf32>
    %166 = vector.extract_strided_slice %151 {offsets = [0, 384], sizes = [8, 128], strides = [1, 1]} : vector<8x512xf32> to vector<8x128xf32>
    %167 = arith.negf %166 : vector<8x128xf32>
    %168 = math.exp %167 : vector<8x128xf32>
    %cst_51 = arith.constant 1.000000e+00 : f32
    %169 = vector.broadcast %cst_51 : f32 to vector<8x128xf32>
    %170 = arith.addf %169, %168 : vector<8x128xf32>
    %171 = arith.divf %169, %170 : vector<8x128xf32>
    %172 = arith.mulf %163, %140 : vector<8x128xf32>
    %173 = arith.mulf %157, %165 : vector<8x128xf32>
    %174 = arith.addf %172, %173 : vector<8x128xf32>
    %175 = math.tanh %174 : vector<8x128xf32>
    %176 = arith.mulf %171, %175 : vector<8x128xf32>
    %177 = arith.index_cast %146 : i32 to index
    %c0_52 = arith.constant 0 : index
    %178 = vector.load %arg10[%177, %c0_52] : memref<64x128xf32, #tpu.memory_space<vmem>>, vector<8x128xf32>
    tpu.vector_store %arg10[%177, %c0_52], %176 {strides = array<i32>} : memref<64x128xf32, #tpu.memory_space<vmem>>, vector<8x128xf32>,
    %c5_i32 = arith.constant 5 : i32
    %c8_i32_53 = arith.constant 8 : i32
    %179 = arith.muli %c5_i32, %c8_i32_53 : i32
    %180 = tpu.assume_multiple %179, 8 : i32
    %181 = arith.index_cast %180 : i32 to index
    %c0_54 = arith.constant 0 : index
    %182 = vector.load %arg11[%181, %c0_54] : memref<64x512xf32, #tpu.memory_space<vmem>>, vector<8x512xf32>
    %c0_55 = arith.constant 0 : index
    %c0_56 = arith.constant 0 : index
    %183 = vector.load %arg2[%c0_55, %c0_56] : memref<128x512xf32, #tpu.memory_space<vmem>>, vector<128x512xf32>
    %cst_57 = arith.constant dense<0.000000e+00> : vector<8x512xf32>
    %184 = tpu.matmul %176, %183, %cst_57 {dimension_numbers = #tpu.dot_dimension_numbers<[1], [0], [0], [1], [0, 0, 1, 1], [], []>} : vector<8x128xf32>, vector<128x512xf32>, vector<8x512xf32> -> vector<8x512xf32>
    %185 = arith.addf %182, %184 : vector<8x512xf32>
    %186 = vector.extract_strided_slice %185 {offsets = [0, 0], sizes = [8, 128], strides = [1, 1]} : vector<8x512xf32> to vector<8x128xf32>
    %187 = arith.negf %186 : vector<8x128xf32>
    %188 = math.exp %187 : vector<8x128xf32>
    %cst_58 = arith.constant 1.000000e+00 : f32
    %189 = vector.broadcast %cst_58 : f32 to vector<8x128xf32>
    %190 = arith.addf %189, %188 : vector<8x128xf32>
    %191 = arith.divf %189, %190 : vector<8x128xf32>
    %192 = vector.extract_strided_slice %185 {offsets = [0, 128], sizes = [8, 128], strides = [1, 1]} : vector<8x512xf32> to vector<8x128xf32>
    %193 = arith.negf %192 : vector<8x128xf32>
    %194 = math.exp %193 : vector<8x128xf32>
    %cst_59 = arith.constant 1.000000e+00 : f32
    %195 = vector.broadcast %cst_59 : f32 to vector<8x128xf32>
    %196 = arith.addf %195, %194 : vector<8x128xf32>
    %197 = arith.divf %195, %196 : vector<8x128xf32>
    %198 = vector.extract_strided_slice %185 {offsets = [0, 256], sizes = [8, 128], strides = [1, 1]} : vector<8x512xf32> to vector<8x128xf32>
    %199 = math.tanh %198 : vector<8x128xf32>
    %200 = vector.extract_strided_slice %185 {offsets = [0, 384], sizes = [8, 128], strides = [1, 1]} : vector<8x512xf32> to vector<8x128xf32>
    %201 = arith.negf %200 : vector<8x128xf32>
    %202 = math.exp %201 : vector<8x128xf32>
    %cst_60 = arith.constant 1.000000e+00 : f32
    %203 = vector.broadcast %cst_60 : f32 to vector<8x128xf32>
    %204 = arith.addf %203, %202 : vector<8x128xf32>
    %205 = arith.divf %203, %204 : vector<8x128xf32>
    %206 = arith.mulf %197, %174 : vector<8x128xf32>
    %207 = arith.mulf %191, %199 : vector<8x128xf32>
    %208 = arith.addf %206, %207 : vector<8x128xf32>
    %209 = math.tanh %208 : vector<8x128xf32>
    %210 = arith.mulf %205, %209 : vector<8x128xf32>
    %211 = arith.index_cast %180 : i32 to index
    %c0_61 = arith.constant 0 : index
    %212 = vector.load %arg10[%211, %c0_61] : memref<64x128xf32, #tpu.memory_space<vmem>>, vector<8x128xf32>
    tpu.vector_store %arg10[%211, %c0_61], %210 {strides = array<i32>} : memref<64x128xf32, #tpu.memory_space<vmem>>, vector<8x128xf32>,
    %c6_i32 = arith.constant 6 : i32
    %c8_i32_62 = arith.constant 8 : i32
    %213 = arith.muli %c6_i32, %c8_i32_62 : i32
    %214 = tpu.assume_multiple %213, 8 : i32
    %215 = arith.index_cast %214 : i32 to index
    %c0_63 = arith.constant 0 : index
    %216 = vector.load %arg11[%215, %c0_63] : memref<64x512xf32, #tpu.memory_space<vmem>>, vector<8x512xf32>
    %c0_64 = arith.constant 0 : index
    %c0_65 = arith.constant 0 : index
    %217 = vector.load %arg2[%c0_64, %c0_65] : memref<128x512xf32, #tpu.memory_space<vmem>>, vector<128x512xf32>
    %cst_66 = arith.constant dense<0.000000e+00> : vector<8x512xf32>
    %218 = tpu.matmul %210, %217, %cst_66 {dimension_numbers = #tpu.dot_dimension_numbers<[1], [0], [0], [1], [0, 0, 1, 1], [], []>} : vector<8x128xf32>, vector<128x512xf32>, vector<8x512xf32> -> vector<8x512xf32>
    %219 = arith.addf %216, %218 : vector<8x512xf32>
    %220 = vector.extract_strided_slice %219 {offsets = [0, 0], sizes = [8, 128], strides = [1, 1]} : vector<8x512xf32> to vector<8x128xf32>
    %221 = arith.negf %220 : vector<8x128xf32>
    %222 = math.exp %221 : vector<8x128xf32>
    %cst_67 = arith.constant 1.000000e+00 : f32
    %223 = vector.broadcast %cst_67 : f32 to vector<8x128xf32>
    %224 = arith.addf %223, %222 : vector<8x128xf32>
    %225 = arith.divf %223, %224 : vector<8x128xf32>
    %226 = vector.extract_strided_slice %219 {offsets = [0, 128], sizes = [8, 128], strides = [1, 1]} : vector<8x512xf32> to vector<8x128xf32>
    %227 = arith.negf %226 : vector<8x128xf32>
    %228 = math.exp %227 : vector<8x128xf32>
    %cst_68 = arith.constant 1.000000e+00 : f32
    %229 = vector.broadcast %cst_68 : f32 to vector<8x128xf32>
    %230 = arith.addf %229, %228 : vector<8x128xf32>
    %231 = arith.divf %229, %230 : vector<8x128xf32>
    %232 = vector.extract_strided_slice %219 {offsets = [0, 256], sizes = [8, 128], strides = [1, 1]} : vector<8x512xf32> to vector<8x128xf32>
    %233 = math.tanh %232 : vector<8x128xf32>
    %234 = vector.extract_strided_slice %219 {offsets = [0, 384], sizes = [8, 128], strides = [1, 1]} : vector<8x512xf32> to vector<8x128xf32>
    %235 = arith.negf %234 : vector<8x128xf32>
    %236 = math.exp %235 : vector<8x128xf32>
    %cst_69 = arith.constant 1.000000e+00 : f32
    %237 = vector.broadcast %cst_69 : f32 to vector<8x128xf32>
    %238 = arith.addf %237, %236 : vector<8x128xf32>
    %239 = arith.divf %237, %238 : vector<8x128xf32>
    %240 = arith.mulf %231, %208 : vector<8x128xf32>
    %241 = arith.mulf %225, %233 : vector<8x128xf32>
    %242 = arith.addf %240, %241 : vector<8x128xf32>
    %243 = math.tanh %242 : vector<8x128xf32>
    %244 = arith.mulf %239, %243 : vector<8x128xf32>
    %245 = arith.index_cast %214 : i32 to index
    %c0_70 = arith.constant 0 : index
    %246 = vector.load %arg10[%245, %c0_70] : memref<64x128xf32, #tpu.memory_space<vmem>>, vector<8x128xf32>
    tpu.vector_store %arg10[%245, %c0_70], %244 {strides = array<i32>} : memref<64x128xf32, #tpu.memory_space<vmem>>, vector<8x128xf32>,
    %c7_i32 = arith.constant 7 : i32
    %c8_i32_71 = arith.constant 8 : i32
    %247 = arith.muli %c7_i32, %c8_i32_71 : i32
    %248 = tpu.assume_multiple %247, 8 : i32
    %249 = arith.index_cast %248 : i32 to index
    %c0_72 = arith.constant 0 : index
    %250 = vector.load %arg11[%249, %c0_72] : memref<64x512xf32, #tpu.memory_space<vmem>>, vector<8x512xf32>
    %c0_73 = arith.constant 0 : index
    %c0_74 = arith.constant 0 : index
    %251 = vector.load %arg2[%c0_73, %c0_74] : memref<128x512xf32, #tpu.memory_space<vmem>>, vector<128x512xf32>
    %cst_75 = arith.constant dense<0.000000e+00> : vector<8x512xf32>
    %252 = tpu.matmul %244, %251, %cst_75 {dimension_numbers = #tpu.dot_dimension_numbers<[1], [0], [0], [1], [0, 0, 1, 1], [], []>} : vector<8x128xf32>, vector<128x512xf32>, vector<8x512xf32> -> vector<8x512xf32>
    %253 = arith.addf %250, %252 : vector<8x512xf32>
    %254 = vector.extract_strided_slice %253 {offsets = [0, 0], sizes = [8, 128], strides = [1, 1]} : vector<8x512xf32> to vector<8x128xf32>
    %255 = arith.negf %254 : vector<8x128xf32>
    %256 = math.exp %255 : vector<8x128xf32>
    %cst_76 = arith.constant 1.000000e+00 : f32
    %257 = vector.broadcast %cst_76 : f32 to vector<8x128xf32>
    %258 = arith.addf %257, %256 : vector<8x128xf32>
    %259 = arith.divf %257, %258 : vector<8x128xf32>
    %260 = vector.extract_strided_slice %253 {offsets = [0, 128], sizes = [8, 128], strides = [1, 1]} : vector<8x512xf32> to vector<8x128xf32>
    %261 = arith.negf %260 : vector<8x128xf32>
    %262 = math.exp %261 : vector<8x128xf32>
    %cst_77 = arith.constant 1.000000e+00 : f32
    %263 = vector.broadcast %cst_77 : f32 to vector<8x128xf32>
    %264 = arith.addf %263, %262 : vector<8x128xf32>
    %265 = arith.divf %263, %264 : vector<8x128xf32>
    %266 = vector.extract_strided_slice %253 {offsets = [0, 256], sizes = [8, 128], strides = [1, 1]} : vector<8x512xf32> to vector<8x128xf32>
    %267 = math.tanh %266 : vector<8x128xf32>
    %268 = vector.extract_strided_slice %253 {offsets = [0, 384], sizes = [8, 128], strides = [1, 1]} : vector<8x512xf32> to vector<8x128xf32>
    %269 = arith.negf %268 : vector<8x128xf32>
    %270 = math.exp %269 : vector<8x128xf32>
    %cst_78 = arith.constant 1.000000e+00 : f32
    %271 = vector.broadcast %cst_78 : f32 to vector<8x128xf32>
    %272 = arith.addf %271, %270 : vector<8x128xf32>
    %273 = arith.divf %271, %272 : vector<8x128xf32>
    %274 = arith.mulf %265, %242 : vector<8x128xf32>
    %275 = arith.mulf %259, %267 : vector<8x128xf32>
    %276 = arith.addf %274, %275 : vector<8x128xf32>
    %277 = math.tanh %276 : vector<8x128xf32>
    %278 = arith.mulf %273, %277 : vector<8x128xf32>
    %279 = arith.index_cast %248 : i32 to index
    %c0_79 = arith.constant 0 : index
    %280 = vector.load %arg10[%279, %c0_79] : memref<64x128xf32, #tpu.memory_space<vmem>>, vector<8x128xf32>
    tpu.vector_store %arg10[%279, %c0_79], %278 {strides = array<i32>} : memref<64x128xf32, #tpu.memory_space<vmem>>, vector<8x128xf32>,
    %c8_i32_80 = arith.constant 8 : i32
    %c0_81 = arith.constant 0 : index
    %c0_82 = arith.constant 0 : index
    %281 = vector.load %arg10[%c0_81, %c0_82] : memref<64x128xf32, #tpu.memory_space<vmem>>, vector<64x128xf32>
    %c0_83 = arith.constant 0 : index
    %c0_84 = arith.constant 0 : index
    %282 = vector.load %arg4[%c0_83, %c0_84] : memref<128x512xf32, #tpu.memory_space<vmem>>, vector<128x512xf32>
    %cst_85 = arith.constant dense<0.000000e+00> : vector<64x512xf32>
    %283 = tpu.matmul %281, %282, %cst_85 {dimension_numbers = #tpu.dot_dimension_numbers<[1], [0], [0], [1], [0, 0, 1, 1], [], []>} : vector<64x128xf32>, vector<128x512xf32>, vector<64x512xf32> -> vector<64x512xf32>
    %c0_86 = arith.constant 0 : index
    %c0_87 = arith.constant 0 : index
    %284 = vector.load %arg6[%c0_86, %c0_87] : memref<1x512xf32, #tpu.memory_space<vmem>>, vector<1x512xf32>
    %285 = vector.broadcast %284 : vector<1x512xf32> to vector<64x512xf32>
    %286 = arith.addf %283, %285 : vector<64x512xf32>
    %c0_88 = arith.constant 0 : index
    %c0_89 = arith.constant 0 : index
    %287 = vector.load %arg11[%c0_88, %c0_89] : memref<64x512xf32, #tpu.memory_space<vmem>>, vector<64x512xf32>
    tpu.vector_store %arg11[%c0_88, %c0_89], %286 {strides = array<i32>} : memref<64x512xf32, #tpu.memory_space<vmem>>, vector<64x512xf32>,
    %cst_90 = arith.constant 0.000000e+00 : f32
    %288 = vector.broadcast %cst_90 : f32 to vector<8x128xf32>
    %cst_91 = arith.constant 0.000000e+00 : f32
    %289 = vector.broadcast %cst_91 : f32 to vector<8x128xf32>
    %c0_i32_92 = arith.constant 0 : i32
    %c8_i32_93 = arith.constant 8 : i32
    %290 = arith.muli %c0_i32_92, %c8_i32_93 : i32
    %291 = tpu.assume_multiple %290, 8 : i32
    %292 = arith.index_cast %291 : i32 to index
    %c0_94 = arith.constant 0 : index
    %293 = vector.load %arg11[%292, %c0_94] : memref<64x512xf32, #tpu.memory_space<vmem>>, vector<8x512xf32>
    %c0_95 = arith.constant 0 : index
    %c0_96 = arith.constant 0 : index
    %294 = vector.load %arg5[%c0_95, %c0_96] : memref<128x512xf32, #tpu.memory_space<vmem>>, vector<128x512xf32>
    %cst_97 = arith.constant dense<0.000000e+00> : vector<8x512xf32>
    %295 = tpu.matmul %288, %294, %cst_97 {dimension_numbers = #tpu.dot_dimension_numbers<[1], [0], [0], [1], [0, 0, 1, 1], [], []>} : vector<8x128xf32>, vector<128x512xf32>, vector<8x512xf32> -> vector<8x512xf32>
    %296 = arith.addf %293, %295 : vector<8x512xf32>
    %297 = vector.extract_strided_slice %296 {offsets = [0, 0], sizes = [8, 128], strides = [1, 1]} : vector<8x512xf32> to vector<8x128xf32>
    %298 = arith.negf %297 : vector<8x128xf32>
    %299 = math.exp %298 : vector<8x128xf32>
    %cst_98 = arith.constant 1.000000e+00 : f32
    %300 = vector.broadcast %cst_98 : f32 to vector<8x128xf32>
    %301 = arith.addf %300, %299 : vector<8x128xf32>
    %302 = arith.divf %300, %301 : vector<8x128xf32>
    %303 = vector.extract_strided_slice %296 {offsets = [0, 128], sizes = [8, 128], strides = [1, 1]} : vector<8x512xf32> to vector<8x128xf32>
    %304 = arith.negf %303 : vector<8x128xf32>
    %305 = math.exp %304 : vector<8x128xf32>
    %cst_99 = arith.constant 1.000000e+00 : f32
    %306 = vector.broadcast %cst_99 : f32 to vector<8x128xf32>
    %307 = arith.addf %306, %305 : vector<8x128xf32>
    %308 = arith.divf %306, %307 : vector<8x128xf32>
    %309 = vector.extract_strided_slice %296 {offsets = [0, 256], sizes = [8, 128], strides = [1, 1]} : vector<8x512xf32> to vector<8x128xf32>
    %310 = math.tanh %309 : vector<8x128xf32>
    %311 = vector.extract_strided_slice %296 {offsets = [0, 384], sizes = [8, 128], strides = [1, 1]} : vector<8x512xf32> to vector<8x128xf32>
    %312 = arith.negf %311 : vector<8x128xf32>
    %313 = math.exp %312 : vector<8x128xf32>
    %cst_100 = arith.constant 1.000000e+00 : f32
    %314 = vector.broadcast %cst_100 : f32 to vector<8x128xf32>
    %315 = arith.addf %314, %313 : vector<8x128xf32>
    %316 = arith.divf %314, %315 : vector<8x128xf32>
    %317 = arith.mulf %308, %289 : vector<8x128xf32>
    %318 = arith.mulf %302, %310 : vector<8x128xf32>
    %319 = arith.addf %317, %318 : vector<8x128xf32>
    %320 = math.tanh %319 : vector<8x128xf32>
    %321 = arith.mulf %316, %320 : vector<8x128xf32>
    %c1_i32_101 = arith.constant 1 : i32
    %c8_i32_102 = arith.constant 8 : i32
    %322 = arith.muli %c1_i32_101, %c8_i32_102 : i32
    %323 = tpu.assume_multiple %322, 8 : i32
    %324 = arith.index_cast %323 : i32 to index
    %c0_103 = arith.constant 0 : index
    %325 = vector.load %arg11[%324, %c0_103] : memref<64x512xf32, #tpu.memory_space<vmem>>, vector<8x512xf32>
    %c0_104 = arith.constant 0 : index
    %c0_105 = arith.constant 0 : index
    %326 = vector.load %arg5[%c0_104, %c0_105] : memref<128x512xf32, #tpu.memory_space<vmem>>, vector<128x512xf32>
    %cst_106 = arith.constant dense<0.000000e+00> : vector<8x512xf32>
    %327 = tpu.matmul %321, %326, %cst_106 {dimension_numbers = #tpu.dot_dimension_numbers<[1], [0], [0], [1], [0, 0, 1, 1], [], []>} : vector<8x128xf32>, vector<128x512xf32>, vector<8x512xf32> -> vector<8x512xf32>
    %328 = arith.addf %325, %327 : vector<8x512xf32>
    %329 = vector.extract_strided_slice %328 {offsets = [0, 0], sizes = [8, 128], strides = [1, 1]} : vector<8x512xf32> to vector<8x128xf32>
    %330 = arith.negf %329 : vector<8x128xf32>
    %331 = math.exp %330 : vector<8x128xf32>
    %cst_107 = arith.constant 1.000000e+00 : f32
    %332 = vector.broadcast %cst_107 : f32 to vector<8x128xf32>
    %333 = arith.addf %332, %331 : vector<8x128xf32>
    %334 = arith.divf %332, %333 : vector<8x128xf32>
    %335 = vector.extract_strided_slice %328 {offsets = [0, 128], sizes = [8, 128], strides = [1, 1]} : vector<8x512xf32> to vector<8x128xf32>
    %336 = arith.negf %335 : vector<8x128xf32>
    %337 = math.exp %336 : vector<8x128xf32>
    %cst_108 = arith.constant 1.000000e+00 : f32
    %338 = vector.broadcast %cst_108 : f32 to vector<8x128xf32>
    %339 = arith.addf %338, %337 : vector<8x128xf32>
    %340 = arith.divf %338, %339 : vector<8x128xf32>
    %341 = vector.extract_strided_slice %328 {offsets = [0, 256], sizes = [8, 128], strides = [1, 1]} : vector<8x512xf32> to vector<8x128xf32>
    %342 = math.tanh %341 : vector<8x128xf32>
    %343 = vector.extract_strided_slice %328 {offsets = [0, 384], sizes = [8, 128], strides = [1, 1]} : vector<8x512xf32> to vector<8x128xf32>
    %344 = arith.negf %343 : vector<8x128xf32>
    %345 = math.exp %344 : vector<8x128xf32>
    %cst_109 = arith.constant 1.000000e+00 : f32
    %346 = vector.broadcast %cst_109 : f32 to vector<8x128xf32>
    %347 = arith.addf %346, %345 : vector<8x128xf32>
    %348 = arith.divf %346, %347 : vector<8x128xf32>
    %349 = arith.mulf %340, %319 : vector<8x128xf32>
    %350 = arith.mulf %334, %342 : vector<8x128xf32>
    %351 = arith.addf %349, %350 : vector<8x128xf32>
    %352 = math.tanh %351 : vector<8x128xf32>
    %353 = arith.mulf %348, %352 : vector<8x128xf32>
    %c2_i32_110 = arith.constant 2 : i32
    %c8_i32_111 = arith.constant 8 : i32
    %354 = arith.muli %c2_i32_110, %c8_i32_111 : i32
    %355 = tpu.assume_multiple %354, 8 : i32
    %356 = arith.index_cast %355 : i32 to index
    %c0_112 = arith.constant 0 : index
    %357 = vector.load %arg11[%356, %c0_112] : memref<64x512xf32, #tpu.memory_space<vmem>>, vector<8x512xf32>
    %c0_113 = arith.constant 0 : index
    %c0_114 = arith.constant 0 : index
    %358 = vector.load %arg5[%c0_113, %c0_114] : memref<128x512xf32, #tpu.memory_space<vmem>>, vector<128x512xf32>
    %cst_115 = arith.constant dense<0.000000e+00> : vector<8x512xf32>
    %359 = tpu.matmul %353, %358, %cst_115 {dimension_numbers = #tpu.dot_dimension_numbers<[1], [0], [0], [1], [0, 0, 1, 1], [], []>} : vector<8x128xf32>, vector<128x512xf32>, vector<8x512xf32> -> vector<8x512xf32>
    %360 = arith.addf %357, %359 : vector<8x512xf32>
    %361 = vector.extract_strided_slice %360 {offsets = [0, 0], sizes = [8, 128], strides = [1, 1]} : vector<8x512xf32> to vector<8x128xf32>
    %362 = arith.negf %361 : vector<8x128xf32>
    %363 = math.exp %362 : vector<8x128xf32>
    %cst_116 = arith.constant 1.000000e+00 : f32
    %364 = vector.broadcast %cst_116 : f32 to vector<8x128xf32>
    %365 = arith.addf %364, %363 : vector<8x128xf32>
    %366 = arith.divf %364, %365 : vector<8x128xf32>
    %367 = vector.extract_strided_slice %360 {offsets = [0, 128], sizes = [8, 128], strides = [1, 1]} : vector<8x512xf32> to vector<8x128xf32>
    %368 = arith.negf %367 : vector<8x128xf32>
    %369 = math.exp %368 : vector<8x128xf32>
    %cst_117 = arith.constant 1.000000e+00 : f32
    %370 = vector.broadcast %cst_117 : f32 to vector<8x128xf32>
    %371 = arith.addf %370, %369 : vector<8x128xf32>
    %372 = arith.divf %370, %371 : vector<8x128xf32>
    %373 = vector.extract_strided_slice %360 {offsets = [0, 256], sizes = [8, 128], strides = [1, 1]} : vector<8x512xf32> to vector<8x128xf32>
    %374 = math.tanh %373 : vector<8x128xf32>
    %375 = vector.extract_strided_slice %360 {offsets = [0, 384], sizes = [8, 128], strides = [1, 1]} : vector<8x512xf32> to vector<8x128xf32>
    %376 = arith.negf %375 : vector<8x128xf32>
    %377 = math.exp %376 : vector<8x128xf32>
    %cst_118 = arith.constant 1.000000e+00 : f32
    %378 = vector.broadcast %cst_118 : f32 to vector<8x128xf32>
    %379 = arith.addf %378, %377 : vector<8x128xf32>
    %380 = arith.divf %378, %379 : vector<8x128xf32>
    %381 = arith.mulf %372, %351 : vector<8x128xf32>
    %382 = arith.mulf %366, %374 : vector<8x128xf32>
    %383 = arith.addf %381, %382 : vector<8x128xf32>
    %384 = math.tanh %383 : vector<8x128xf32>
    %385 = arith.mulf %380, %384 : vector<8x128xf32>
    %c3_i32_119 = arith.constant 3 : i32
    %c8_i32_120 = arith.constant 8 : i32
    %386 = arith.muli %c3_i32_119, %c8_i32_120 : i32
    %387 = tpu.assume_multiple %386, 8 : i32
    %388 = arith.index_cast %387 : i32 to index
    %c0_121 = arith.constant 0 : index
    %389 = vector.load %arg11[%388, %c0_121] : memref<64x512xf32, #tpu.memory_space<vmem>>, vector<8x512xf32>
    %c0_122 = arith.constant 0 : index
    %c0_123 = arith.constant 0 : index
    %390 = vector.load %arg5[%c0_122, %c0_123] : memref<128x512xf32, #tpu.memory_space<vmem>>, vector<128x512xf32>
    %cst_124 = arith.constant dense<0.000000e+00> : vector<8x512xf32>
    %391 = tpu.matmul %385, %390, %cst_124 {dimension_numbers = #tpu.dot_dimension_numbers<[1], [0], [0], [1], [0, 0, 1, 1], [], []>} : vector<8x128xf32>, vector<128x512xf32>, vector<8x512xf32> -> vector<8x512xf32>
    %392 = arith.addf %389, %391 : vector<8x512xf32>
    %393 = vector.extract_strided_slice %392 {offsets = [0, 0], sizes = [8, 128], strides = [1, 1]} : vector<8x512xf32> to vector<8x128xf32>
    %394 = arith.negf %393 : vector<8x128xf32>
    %395 = math.exp %394 : vector<8x128xf32>
    %cst_125 = arith.constant 1.000000e+00 : f32
    %396 = vector.broadcast %cst_125 : f32 to vector<8x128xf32>
    %397 = arith.addf %396, %395 : vector<8x128xf32>
    %398 = arith.divf %396, %397 : vector<8x128xf32>
    %399 = vector.extract_strided_slice %392 {offsets = [0, 128], sizes = [8, 128], strides = [1, 1]} : vector<8x512xf32> to vector<8x128xf32>
    %400 = arith.negf %399 : vector<8x128xf32>
    %401 = math.exp %400 : vector<8x128xf32>
    %cst_126 = arith.constant 1.000000e+00 : f32
    %402 = vector.broadcast %cst_126 : f32 to vector<8x128xf32>
    %403 = arith.addf %402, %401 : vector<8x128xf32>
    %404 = arith.divf %402, %403 : vector<8x128xf32>
    %405 = vector.extract_strided_slice %392 {offsets = [0, 256], sizes = [8, 128], strides = [1, 1]} : vector<8x512xf32> to vector<8x128xf32>
    %406 = math.tanh %405 : vector<8x128xf32>
    %407 = vector.extract_strided_slice %392 {offsets = [0, 384], sizes = [8, 128], strides = [1, 1]} : vector<8x512xf32> to vector<8x128xf32>
    %408 = arith.negf %407 : vector<8x128xf32>
    %409 = math.exp %408 : vector<8x128xf32>
    %cst_127 = arith.constant 1.000000e+00 : f32
    %410 = vector.broadcast %cst_127 : f32 to vector<8x128xf32>
    %411 = arith.addf %410, %409 : vector<8x128xf32>
    %412 = arith.divf %410, %411 : vector<8x128xf32>
    %413 = arith.mulf %404, %383 : vector<8x128xf32>
    %414 = arith.mulf %398, %406 : vector<8x128xf32>
    %415 = arith.addf %413, %414 : vector<8x128xf32>
    %416 = math.tanh %415 : vector<8x128xf32>
    %417 = arith.mulf %412, %416 : vector<8x128xf32>
    %c4_i32_128 = arith.constant 4 : i32
    %c8_i32_129 = arith.constant 8 : i32
    %418 = arith.muli %c4_i32_128, %c8_i32_129 : i32
    %419 = tpu.assume_multiple %418, 8 : i32
    %420 = arith.index_cast %419 : i32 to index
    %c0_130 = arith.constant 0 : index
    %421 = vector.load %arg11[%420, %c0_130] : memref<64x512xf32, #tpu.memory_space<vmem>>, vector<8x512xf32>
    %c0_131 = arith.constant 0 : index
    %c0_132 = arith.constant 0 : index
    %422 = vector.load %arg5[%c0_131, %c0_132] : memref<128x512xf32, #tpu.memory_space<vmem>>, vector<128x512xf32>
    %cst_133 = arith.constant dense<0.000000e+00> : vector<8x512xf32>
    %423 = tpu.matmul %417, %422, %cst_133 {dimension_numbers = #tpu.dot_dimension_numbers<[1], [0], [0], [1], [0, 0, 1, 1], [], []>} : vector<8x128xf32>, vector<128x512xf32>, vector<8x512xf32> -> vector<8x512xf32>
    %424 = arith.addf %421, %423 : vector<8x512xf32>
    %425 = vector.extract_strided_slice %424 {offsets = [0, 0], sizes = [8, 128], strides = [1, 1]} : vector<8x512xf32> to vector<8x128xf32>
    %426 = arith.negf %425 : vector<8x128xf32>
    %427 = math.exp %426 : vector<8x128xf32>
    %cst_134 = arith.constant 1.000000e+00 : f32
    %428 = vector.broadcast %cst_134 : f32 to vector<8x128xf32>
    %429 = arith.addf %428, %427 : vector<8x128xf32>
    %430 = arith.divf %428, %429 : vector<8x128xf32>
    %431 = vector.extract_strided_slice %424 {offsets = [0, 128], sizes = [8, 128], strides = [1, 1]} : vector<8x512xf32> to vector<8x128xf32>
    %432 = arith.negf %431 : vector<8x128xf32>
    %433 = math.exp %432 : vector<8x128xf32>
    %cst_135 = arith.constant 1.000000e+00 : f32
    %434 = vector.broadcast %cst_135 : f32 to vector<8x128xf32>
    %435 = arith.addf %434, %433 : vector<8x128xf32>
    %436 = arith.divf %434, %435 : vector<8x128xf32>
    %437 = vector.extract_strided_slice %424 {offsets = [0, 256], sizes = [8, 128], strides = [1, 1]} : vector<8x512xf32> to vector<8x128xf32>
    %438 = math.tanh %437 : vector<8x128xf32>
    %439 = vector.extract_strided_slice %424 {offsets = [0, 384], sizes = [8, 128], strides = [1, 1]} : vector<8x512xf32> to vector<8x128xf32>
    %440 = arith.negf %439 : vector<8x128xf32>
    %441 = math.exp %440 : vector<8x128xf32>
    %cst_136 = arith.constant 1.000000e+00 : f32
    %442 = vector.broadcast %cst_136 : f32 to vector<8x128xf32>
    %443 = arith.addf %442, %441 : vector<8x128xf32>
    %444 = arith.divf %442, %443 : vector<8x128xf32>
    %445 = arith.mulf %436, %415 : vector<8x128xf32>
    %446 = arith.mulf %430, %438 : vector<8x128xf32>
    %447 = arith.addf %445, %446 : vector<8x128xf32>
    %448 = math.tanh %447 : vector<8x128xf32>
    %449 = arith.mulf %444, %448 : vector<8x128xf32>
    %c5_i32_137 = arith.constant 5 : i32
    %c8_i32_138 = arith.constant 8 : i32
    %450 = arith.muli %c5_i32_137, %c8_i32_138 : i32
    %451 = tpu.assume_multiple %450, 8 : i32
    %452 = arith.index_cast %451 : i32 to index
    %c0_139 = arith.constant 0 : index
    %453 = vector.load %arg11[%452, %c0_139] : memref<64x512xf32, #tpu.memory_space<vmem>>, vector<8x512xf32>
    %c0_140 = arith.constant 0 : index
    %c0_141 = arith.constant 0 : index
    %454 = vector.load %arg5[%c0_140, %c0_141] : memref<128x512xf32, #tpu.memory_space<vmem>>, vector<128x512xf32>
    %cst_142 = arith.constant dense<0.000000e+00> : vector<8x512xf32>
    %455 = tpu.matmul %449, %454, %cst_142 {dimension_numbers = #tpu.dot_dimension_numbers<[1], [0], [0], [1], [0, 0, 1, 1], [], []>} : vector<8x128xf32>, vector<128x512xf32>, vector<8x512xf32> -> vector<8x512xf32>
    %456 = arith.addf %453, %455 : vector<8x512xf32>
    %457 = vector.extract_strided_slice %456 {offsets = [0, 0], sizes = [8, 128], strides = [1, 1]} : vector<8x512xf32> to vector<8x128xf32>
    %458 = arith.negf %457 : vector<8x128xf32>
    %459 = math.exp %458 : vector<8x128xf32>
    %cst_143 = arith.constant 1.000000e+00 : f32
    %460 = vector.broadcast %cst_143 : f32 to vector<8x128xf32>
    %461 = arith.addf %460, %459 : vector<8x128xf32>
    %462 = arith.divf %460, %461 : vector<8x128xf32>
    %463 = vector.extract_strided_slice %456 {offsets = [0, 128], sizes = [8, 128], strides = [1, 1]} : vector<8x512xf32> to vector<8x128xf32>
    %464 = arith.negf %463 : vector<8x128xf32>
    %465 = math.exp %464 : vector<8x128xf32>
    %cst_144 = arith.constant 1.000000e+00 : f32
    %466 = vector.broadcast %cst_144 : f32 to vector<8x128xf32>
    %467 = arith.addf %466, %465 : vector<8x128xf32>
    %468 = arith.divf %466, %467 : vector<8x128xf32>
    %469 = vector.extract_strided_slice %456 {offsets = [0, 256], sizes = [8, 128], strides = [1, 1]} : vector<8x512xf32> to vector<8x128xf32>
    %470 = math.tanh %469 : vector<8x128xf32>
    %471 = vector.extract_strided_slice %456 {offsets = [0, 384], sizes = [8, 128], strides = [1, 1]} : vector<8x512xf32> to vector<8x128xf32>
    %472 = arith.negf %471 : vector<8x128xf32>
    %473 = math.exp %472 : vector<8x128xf32>
    %cst_145 = arith.constant 1.000000e+00 : f32
    %474 = vector.broadcast %cst_145 : f32 to vector<8x128xf32>
    %475 = arith.addf %474, %473 : vector<8x128xf32>
    %476 = arith.divf %474, %475 : vector<8x128xf32>
    %477 = arith.mulf %468, %447 : vector<8x128xf32>
    %478 = arith.mulf %462, %470 : vector<8x128xf32>
    %479 = arith.addf %477, %478 : vector<8x128xf32>
    %480 = math.tanh %479 : vector<8x128xf32>
    %481 = arith.mulf %476, %480 : vector<8x128xf32>
    %c6_i32_146 = arith.constant 6 : i32
    %c8_i32_147 = arith.constant 8 : i32
    %482 = arith.muli %c6_i32_146, %c8_i32_147 : i32
    %483 = tpu.assume_multiple %482, 8 : i32
    %484 = arith.index_cast %483 : i32 to index
    %c0_148 = arith.constant 0 : index
    %485 = vector.load %arg11[%484, %c0_148] : memref<64x512xf32, #tpu.memory_space<vmem>>, vector<8x512xf32>
    %c0_149 = arith.constant 0 : index
    %c0_150 = arith.constant 0 : index
    %486 = vector.load %arg5[%c0_149, %c0_150] : memref<128x512xf32, #tpu.memory_space<vmem>>, vector<128x512xf32>
    %cst_151 = arith.constant dense<0.000000e+00> : vector<8x512xf32>
    %487 = tpu.matmul %481, %486, %cst_151 {dimension_numbers = #tpu.dot_dimension_numbers<[1], [0], [0], [1], [0, 0, 1, 1], [], []>} : vector<8x128xf32>, vector<128x512xf32>, vector<8x512xf32> -> vector<8x512xf32>
    %488 = arith.addf %485, %487 : vector<8x512xf32>
    %489 = vector.extract_strided_slice %488 {offsets = [0, 0], sizes = [8, 128], strides = [1, 1]} : vector<8x512xf32> to vector<8x128xf32>
    %490 = arith.negf %489 : vector<8x128xf32>
    %491 = math.exp %490 : vector<8x128xf32>
    %cst_152 = arith.constant 1.000000e+00 : f32
    %492 = vector.broadcast %cst_152 : f32 to vector<8x128xf32>
    %493 = arith.addf %492, %491 : vector<8x128xf32>
    %494 = arith.divf %492, %493 : vector<8x128xf32>
    %495 = vector.extract_strided_slice %488 {offsets = [0, 128], sizes = [8, 128], strides = [1, 1]} : vector<8x512xf32> to vector<8x128xf32>
    %496 = arith.negf %495 : vector<8x128xf32>
    %497 = math.exp %496 : vector<8x128xf32>
    %cst_153 = arith.constant 1.000000e+00 : f32
    %498 = vector.broadcast %cst_153 : f32 to vector<8x128xf32>
    %499 = arith.addf %498, %497 : vector<8x128xf32>
    %500 = arith.divf %498, %499 : vector<8x128xf32>
    %501 = vector.extract_strided_slice %488 {offsets = [0, 256], sizes = [8, 128], strides = [1, 1]} : vector<8x512xf32> to vector<8x128xf32>
    %502 = math.tanh %501 : vector<8x128xf32>
    %503 = vector.extract_strided_slice %488 {offsets = [0, 384], sizes = [8, 128], strides = [1, 1]} : vector<8x512xf32> to vector<8x128xf32>
    %504 = arith.negf %503 : vector<8x128xf32>
    %505 = math.exp %504 : vector<8x128xf32>
    %cst_154 = arith.constant 1.000000e+00 : f32
    %506 = vector.broadcast %cst_154 : f32 to vector<8x128xf32>
    %507 = arith.addf %506, %505 : vector<8x128xf32>
    %508 = arith.divf %506, %507 : vector<8x128xf32>
    %509 = arith.mulf %500, %479 : vector<8x128xf32>
    %510 = arith.mulf %494, %502 : vector<8x128xf32>
    %511 = arith.addf %509, %510 : vector<8x128xf32>
    %512 = math.tanh %511 : vector<8x128xf32>
    %513 = arith.mulf %508, %512 : vector<8x128xf32>
    %c7_i32_155 = arith.constant 7 : i32
    %c8_i32_156 = arith.constant 8 : i32
    %514 = arith.muli %c7_i32_155, %c8_i32_156 : i32
    %515 = tpu.assume_multiple %514, 8 : i32
    %516 = arith.index_cast %515 : i32 to index
    %c0_157 = arith.constant 0 : index
    %517 = vector.load %arg11[%516, %c0_157] : memref<64x512xf32, #tpu.memory_space<vmem>>, vector<8x512xf32>
    %c0_158 = arith.constant 0 : index
    %c0_159 = arith.constant 0 : index
    %518 = vector.load %arg5[%c0_158, %c0_159] : memref<128x512xf32, #tpu.memory_space<vmem>>, vector<128x512xf32>
    %cst_160 = arith.constant dense<0.000000e+00> : vector<8x512xf32>
    %519 = tpu.matmul %513, %518, %cst_160 {dimension_numbers = #tpu.dot_dimension_numbers<[1], [0], [0], [1], [0, 0, 1, 1], [], []>} : vector<8x128xf32>, vector<128x512xf32>, vector<8x512xf32> -> vector<8x512xf32>
    %520 = arith.addf %517, %519 : vector<8x512xf32>
    %521 = vector.extract_strided_slice %520 {offsets = [0, 0], sizes = [8, 128], strides = [1, 1]} : vector<8x512xf32> to vector<8x128xf32>
    %522 = arith.negf %521 : vector<8x128xf32>
    %523 = math.exp %522 : vector<8x128xf32>
    %cst_161 = arith.constant 1.000000e+00 : f32
    %524 = vector.broadcast %cst_161 : f32 to vector<8x128xf32>
    %525 = arith.addf %524, %523 : vector<8x128xf32>
    %526 = arith.divf %524, %525 : vector<8x128xf32>
    %527 = vector.extract_strided_slice %520 {offsets = [0, 128], sizes = [8, 128], strides = [1, 1]} : vector<8x512xf32> to vector<8x128xf32>
    %528 = arith.negf %527 : vector<8x128xf32>
    %529 = math.exp %528 : vector<8x128xf32>
    %cst_162 = arith.constant 1.000000e+00 : f32
    %530 = vector.broadcast %cst_162 : f32 to vector<8x128xf32>
    %531 = arith.addf %530, %529 : vector<8x128xf32>
    %532 = arith.divf %530, %531 : vector<8x128xf32>
    %533 = vector.extract_strided_slice %520 {offsets = [0, 256], sizes = [8, 128], strides = [1, 1]} : vector<8x512xf32> to vector<8x128xf32>
    %534 = math.tanh %533 : vector<8x128xf32>
    %535 = vector.extract_strided_slice %520 {offsets = [0, 384], sizes = [8, 128], strides = [1, 1]} : vector<8x512xf32> to vector<8x128xf32>
    %536 = arith.negf %535 : vector<8x128xf32>
    %537 = math.exp %536 : vector<8x128xf32>
    %cst_163 = arith.constant 1.000000e+00 : f32
    %538 = vector.broadcast %cst_163 : f32 to vector<8x128xf32>
    %539 = arith.addf %538, %537 : vector<8x128xf32>
    %540 = arith.divf %538, %539 : vector<8x128xf32>
    %541 = arith.mulf %532, %511 : vector<8x128xf32>
    %542 = arith.mulf %526, %534 : vector<8x128xf32>
    %543 = arith.addf %541, %542 : vector<8x128xf32>
    %544 = math.tanh %543 : vector<8x128xf32>
    %545 = arith.mulf %540, %544 : vector<8x128xf32>
    %c8_i32_164 = arith.constant 8 : i32
    %c0_165 = arith.constant 0 : index
    %c0_166 = arith.constant 0 : index
    %546 = vector.load %arg7[%c0_165, %c0_166] : memref<128x128xf32, #tpu.memory_space<vmem>>, vector<128x128xf32>
    %cst_167 = arith.constant dense<0.000000e+00> : vector<8x128xf32>
    %547 = tpu.matmul %545, %546, %cst_167 {dimension_numbers = #tpu.dot_dimension_numbers<[1], [0], [0], [1], [0, 0, 1, 1], [], []>} : vector<8x128xf32>, vector<128x128xf32>, vector<8x128xf32> -> vector<8x128xf32>
    %c0_168 = arith.constant 0 : index
    %c0_169 = arith.constant 0 : index
    %548 = vector.load %arg8[%c0_168, %c0_169] : memref<1x128xf32, #tpu.memory_space<vmem>>, vector<1x128xf32>
    %549 = vector.broadcast %548 : vector<1x128xf32> to vector<8x128xf32>
    %550 = arith.addf %547, %549 : vector<8x128xf32>
    %c0_170 = arith.constant 0 : index
    %c0_171 = arith.constant 0 : index
    %551 = vector.load %arg9[%c0_170, %c0_171] : memref<8x128xf32, #tpu.memory_space<vmem>>, vector<8x128xf32>
    tpu.vector_store %arg9[%c0_170, %c0_171], %550 {strides = array<i32>} : memref<8x128xf32, #tpu.memory_space<vmem>>, vector<8x128xf32>,
    return
  }
}

</mosaic_0001>

<llo_original>
// kernel: my_lstm_forward.1
$region0: #{my_lstm_forward.1}
  #allocation0 [shape = 'u32[]', space=smem, size = 0x4, offset = 0x4, fixed_abs, tag = 'smem constant byte address 0x4 - core index']
  #allocation1 [shape = 'u32[144,128]{1,0:T(1,128)}', space=vmem, size = 0x12000, scoped, tag = 'internal scratch']
  #allocation2 [shape = 'f32[64,128]{1,0:T(8,128)}', space=vmem, size = 0x8000, scoped, tag = 'scratch operand']
  #allocation3 [shape = 'f32[64,512]{1,0:T(8,128)}', space=vmem, size = 0x20000, scoped, tag = 'scratch operand']
  %s0 = inlined_call_operand.vmem [shape: f32[64,128], index: 0, kind: input, shape index: {}]
  %s1 = inlined_call_operand.vmem [shape: f32[128,512], index: 1, kind: input, shape index: {}]
  %s2 = inlined_call_operand.vmem [shape: f32[128,512], index: 2, kind: input, shape index: {}]
  %s3 = inlined_call_operand.vmem [shape: f32[1,512], index: 3, kind: input, shape index: {}]
  %s4 = inlined_call_operand.vmem [shape: f32[128,512], index: 4, kind: input, shape index: {}]
  %s5 = inlined_call_operand.vmem [shape: f32[128,512], index: 5, kind: input, shape index: {}]
  %s6 = inlined_call_operand.vmem [shape: f32[1,512], index: 6, kind: input, shape index: {}]
  %s7 = inlined_call_operand.vmem [shape: f32[128,128], index: 7, kind: input, shape index: {}]
  %s8 = inlined_call_operand.vmem [shape: f32[1,128], index: 8, kind: input, shape index: {}]
  %s9 = inlined_call_operand.vmem [shape: f32[8,128], index: 9, kind: output, shape index: {}]
  %s10 = sld [smem:[#allocation0]]
  $region46: #{my_lstm_forward.1} parent=0
    _
  %s12 = ssub.s32 1, %s10
  %s13 = scalar_select 0, %s12, %s10
  // Predicated region
  $region2: #{my_lstm_forward.1} parent=0 // pred_check
    _
  $region3: #{my_lstm_forward.1} parent=0 // pred_check_branch
    %15 = sbr.rel (0) target = $region5
  $region4: #{my_lstm_forward.1} parent=0 // pred_region
    _
  $region5: #{my_lstm_forward.1} parent=0 // pred_fallthru
    _
  // Predicated region
  $region6: #{my_lstm_forward.1} parent=0 // pred_check
    _
  $region7: #{my_lstm_forward.1} parent=0 // pred_check_branch
    %17 = sbr.rel (0) target = $region9
  $region8: #{my_lstm_forward.1} parent=0 // pred_region
    _
  $region9: #{my_lstm_forward.1} parent=0 // pred_fallthru
    _
  // Predicated region
  $region10: #{my_lstm_forward.1} parent=0 // pred_check
    _
  $region11: #{my_lstm_forward.1} parent=0 // pred_check_branch
    %19 = sbr.rel (0) target = $region13
  $region12: #{my_lstm_forward.1} parent=0 // pred_region
    _
  $region13: #{my_lstm_forward.1} parent=0 // pred_fallthru
    _
  // Predicated region
  $region14: #{my_lstm_forward.1} parent=0 // pred_check
    _
  $region15: #{my_lstm_forward.1} parent=0 // pred_check_branch
    %21 = sbr.rel (0) target = $region17
  $region16: #{my_lstm_forward.1} parent=0 // pred_region
    _
  $region17: #{my_lstm_forward.1} parent=0 // pred_fallthru
    _
  // Predicated region
  $region18: #{my_lstm_forward.1} parent=0 // pred_check
    _
  $region19: #{my_lstm_forward.1} parent=0 // pred_check_branch
    %23 = sbr.rel (0) target = $region21
  $region20: #{my_lstm_forward.1} parent=0 // pred_region
    _
  $region21: #{my_lstm_forward.1} parent=0 // pred_fallthru
    _
  // Predicated region
  $region22: #{my_lstm_forward.1} parent=0 // pred_check
    _
  $region23: #{my_lstm_forward.1} parent=0 // pred_check_branch
    %25 = sbr.rel (0) target = $region25
  $region24: #{my_lstm_forward.1} parent=0 // pred_region
    _
  $region25: #{my_lstm_forward.1} parent=0 // pred_fallthru
    _
  // Predicated region
  $region26: #{my_lstm_forward.1} parent=0 // pred_check
    _
  $region27: #{my_lstm_forward.1} parent=0 // pred_check_branch
    %27 = sbr.rel (0) target = $region29
  $region28: #{my_lstm_forward.1} parent=0 // pred_region
    _
  $region29: #{my_lstm_forward.1} parent=0 // pred_fallthru
    _
  // Predicated region
  $region30: #{my_lstm_forward.1} parent=0 // pred_check
    _
  $region31: #{my_lstm_forward.1} parent=0 // pred_check_branch
    %29 = sbr.rel (0) target = $region33
  $region32: #{my_lstm_forward.1} parent=0 // pred_region
    _
  $region33: #{my_lstm_forward.1} parent=0 // pred_fallthru
    _
  // Predicated region
  $region34: #{my_lstm_forward.1} parent=0 // pred_check
    _
  $region35: #{my_lstm_forward.1} parent=0 // pred_check_branch
    %31 = sbr.rel (0) target = $region37
  $region36: #{my_lstm_forward.1} parent=0 // pred_region
    _
  $region37: #{my_lstm_forward.1} parent=0 // pred_fallthru
    _
  %v32 = vld [vmem:[%s0] sm:$0xff]
  %v33 = vld [vmem:[%s0 + $0x8] sm:$0xff]
  %v34 = vld [vmem:[%s0 + $0x10] sm:$0xff]
  %v35 = vld [vmem:[%s0 + $0x18] sm:$0xff]
  %v36 = vld [vmem:[%s0 + $0x20] sm:$0xff]
  %v37 = vld [vmem:[%s0 + $0x28] sm:$0xff]
  %v38 = vld [vmem:[%s0 + $0x30] sm:$0xff]
  %v39 = vld [vmem:[%s0 + $0x38] sm:$0xff]
  %v40 = vld [vmem:[%s1] sm:$0xff]
  %v41 = vld [vmem:[%s1 + $0x8] sm:$0xff]
  %v42 = vld [vmem:[%s1 + $0x10] sm:$0xff]
  %v43 = vld [vmem:[%s1 + $0x18] sm:$0xff]
  %v44 = vld [vmem:[%s1 + $0x20] sm:$0xff]
  %v45 = vld [vmem:[%s1 + $0x28] sm:$0xff]
  %v46 = vld [vmem:[%s1 + $0x30] sm:$0xff]
  %v47 = vld [vmem:[%s1 + $0x38] sm:$0xff]
  %v48 = vld [vmem:[%s1 + $0x40] sm:$0xff]
  %v49 = vld [vmem:[%s1 + $0x48] sm:$0xff]
  %v50 = vld [vmem:[%s1 + $0x50] sm:$0xff]
  %v51 = vld [vmem:[%s1 + $0x58] sm:$0xff]
  %v52 = vld [vmem:[%s1 + $0x60] sm:$0xff]
  %v53 = vld [vmem:[%s1 + $0x68] sm:$0xff]
  %v54 = vld [vmem:[%s1 + $0x70] sm:$0xff]
  %v55 = vld [vmem:[%s1 + $0x78] sm:$0xff]
  %v56 = vld [vmem:[%s1 + $0x80] sm:$0xff]
  %v57 = vld [vmem:[%s1 + $0x88] sm:$0xff]
  %v58 = vld [vmem:[%s1 + $0x90] sm:$0xff]
  %v59 = vld [vmem:[%s1 + $0x98] sm:$0xff]
  %v60 = vld [vmem:[%s1 + $0xa0] sm:$0xff]
  %v61 = vld [vmem:[%s1 + $0xa8] sm:$0xff]
  %v62 = vld [vmem:[%s1 + $0xb0] sm:$0xff]
  %v63 = vld [vmem:[%s1 + $0xb8] sm:$0xff]
  %v64 = vld [vmem:[%s1 + $0xc0] sm:$0xff]
  %v65 = vld [vmem:[%s1 + $0xc8] sm:$0xff]
  %v66 = vld [vmem:[%s1 + $0xd0] sm:$0xff]
  %v67 = vld [vmem:[%s1 + $0xd8] sm:$0xff]
  %v68 = vld [vmem:[%s1 + $0xe0] sm:$0xff]
  %v69 = vld [vmem:[%s1 + $0xe8] sm:$0xff]
  %v70 = vld [vmem:[%s1 + $0xf0] sm:$0xff]
  %v71 = vld [vmem:[%s1 + $0xf8] sm:$0xff]
  %v72 = vld [vmem:[%s1 + $0x100] sm:$0xff]
  %v73 = vld [vmem:[%s1 + $0x108] sm:$0xff]
  %v74 = vld [vmem:[%s1 + $0x110] sm:$0xff]
  %v75 = vld [vmem:[%s1 + $0x118] sm:$0xff]
  %v76 = vld [vmem:[%s1 + $0x120] sm:$0xff]
  %v77 = vld [vmem:[%s1 + $0x128] sm:$0xff]
  %v78 = vld [vmem:[%s1 + $0x130] sm:$0xff]
  %v79 = vld [vmem:[%s1 + $0x138] sm:$0xff]
  %v80 = vld [vmem:[%s1 + $0x140] sm:$0xff]
  %v81 = vld [vmem:[%s1 + $0x148] sm:$0xff]
  %v82 = vld [vmem:[%s1 + $0x150] sm:$0xff]
  %v83 = vld [vmem:[%s1 + $0x158] sm:$0xff]
  %v84 = vld [vmem:[%s1 + $0x160] sm:$0xff]
  %v85 = vld [vmem:[%s1 + $0x168] sm:$0xff]
  %v86 = vld [vmem:[%s1 + $0x170] sm:$0xff]
  %v87 = vld [vmem:[%s1 + $0x178] sm:$0xff]
  %v88 = vld [vmem:[%s1 + $0x180] sm:$0xff]
  %v89 = vld [vmem:[%s1 + $0x188] sm:$0xff]
  %v90 = vld [vmem:[%s1 + $0x190] sm:$0xff]
  %v91 = vld [vmem:[%s1 + $0x198] sm:$0xff]
  %v92 = vld [vmem:[%s1 + $0x1a0] sm:$0xff]
  %v93 = vld [vmem:[%s1 + $0x1a8] sm:$0xff]
  %v94 = vld [vmem:[%s1 + $0x1b0] sm:$0xff]
  %v95 = vld [vmem:[%s1 + $0x1b8] sm:$0xff]
  %v96 = vld [vmem:[%s1 + $0x1c0] sm:$0xff]
  %v97 = vld [vmem:[%s1 + $0x1c8] sm:$0xff]
  %v98 = vld [vmem:[%s1 + $0x1d0] sm:$0xff]
  %v99 = vld [vmem:[%s1 + $0x1d8] sm:$0xff]
  %v100 = vld [vmem:[%s1 + $0x1e0] sm:$0xff]
  %v101 = vld [vmem:[%s1 + $0x1e8] sm:$0xff]
  %v102 = vld [vmem:[%s1 + $0x1f0] sm:$0xff]
  %v103 = vld [vmem:[%s1 + $0x1f8] sm:$0xff]
  %v104 = vld [vmem:[%s3] sm:$0xf]
  %v106 = vlaneseq
  %v107 = vshrl.u32 %v106, 7
  %v108 = vsub.s32 0, %v107
  %v109 = vrot.slane %v104, %v108
  %v110 = vlaneseq
  %v111 = vshrl.u32 %v110, 7
  %v112 = vsub.s32 1, %v111
  %v113 = vrot.slane %v104, %v112
  %v114 = vlaneseq
  %v115 = vshrl.u32 %v114, 7
  %v116 = vsub.s32 2, %v115
  %v117 = vrot.slane %v104, %v116
  %v118 = vlaneseq
  %v119 = vshrl.u32 %v118, 7
  %v120 = vsub.s32 3, %v119
  %v121 = vrot.slane %v104, %v120
  %126 = vmatprep.subr.mxu0 %v41
  %127 = vmatpush1.msra.mxu0 %v40
  %128 = vmatprep.subr.mxu0 %v45
  %129 = vmatpush1.msra.mxu0 %v44
  %130 = vmatprep.subr.mxu0 %v49
  %131 = vmatpush1.msra.mxu0 %v48
  %132 = vmatprep.subr.mxu0 %v53
  %133 = vmatpush1.msra.mxu0 %v52
  %134 = vmatprep.subr.mxu0 %v57
  %135 = vmatpush1.msra.mxu0 %v56
  %136 = vmatprep.subr.mxu0 %v61
  %137 = vmatpush1.msra.mxu0 %v60
  %138 = vmatprep.subr.mxu0 %v65
  %139 = vmatpush1.msra.mxu0 %v64
  %140 = vmatprep.subr.mxu0 %v69
  %141 = vmatpush1.msra.mxu0 %v68
  %142 = vmatprep.subr.mxu0 %v73
  %143 = vmatpush1.msra.mxu0 %v72
  %144 = vmatprep.subr.mxu0 %v77
  %145 = vmatpush1.msra.mxu0 %v76
  %146 = vmatprep.subr.mxu0 %v81
  %147 = vmatpush1.msra.mxu0 %v80
  %148 = vmatprep.subr.mxu0 %v85
  %149 = vmatpush1.msra.mxu0 %v84
  %150 = vmatprep.subr.mxu0 %v89
  %151 = vmatpush1.msra.mxu0 %v88
  %152 = vmatprep.subr.mxu0 %v93
  %153 = vmatpush1.msra.mxu0 %v92
  %154 = vmatprep.subr.mxu0 %v97
  %155 = vmatpush1.msra.mxu0 %v96
  %156 = vmatprep.subr.mxu0 %v101
  %157 = vmatpush1.msra.mxu0 %v100
  %158 = vmatprep.subr.mxu0 0.0
  %159 = vmatpush1.msra.mxu0 0.0
  %160 = vmatprep.subr.mxu0 0.0
  %161 = vmatpush1.msra.mxu0 0.0
  %162 = vmatprep.subr.mxu0 0.0
  %163 = vmatpush1.msra.mxu0 0.0
  %164 = vmatprep.subr.mxu0 0.0
  %165 = vmatpush1.msra.mxu0 0.0
  %166 = vmatprep.subr.mxu0 0.0
  %167 = vmatpush1.msra.mxu0 0.0
  %168 = vmatprep.subr.mxu0 0.0
  %169 = vmatpush1.msra.mxu0 0.0
  %170 = vmatprep.subr.mxu0 0.0
  %171 = vmatpush1.msra.mxu0 0.0
  %172 = vmatprep.subr.mxu0 0.0
  %173 = vmatpush1.msra.mxu0 0.0
  %174 = vmatprep.subr.mxu0 0.0
  %175 = vmatpush1.msra.mxu0 0.0
  %176 = vmatprep.subr.mxu0 0.0
  %177 = vmatpush1.msra.mxu0 0.0
  %178 = vmatprep.subr.mxu0 0.0
  %179 = vmatpush1.msra.mxu0 0.0
  %180 = vmatprep.subr.mxu0 0.0
  %181 = vmatpush1.msra.mxu0 0.0
  %182 = vmatprep.subr.mxu0 0.0
  %183 = vmatpush1.msra.mxu0 0.0
  %184 = vmatprep.subr.mxu0 0.0
  %185 = vmatpush1.msra.mxu0 0.0
  %186 = vmatprep.subr.mxu0 0.0
  %187 = vmatpush1.msra.mxu0 0.0
  %188 = vmatprep.subr.mxu0 0.0
  %189 = vmatpush1.msra.mxu0 0.0
  %190 = vmatprep.mubr.f32.mxu0 0.0
  %191 = vmatmul.mubr.f32.gmra.mrb[0].mxu0 %v32
  %v192 = vpop.f32.mrb[0].mxu0
  %v193 = vadd.f32 %v109, %v192
  %v194 = vpop.f32.mrb[0].mxu0
  %v195 = vadd.f32 %v113, %v194
  %196 = vmatprep.mubr.f32.mxu0 0.0
  %197 = vmatmul.mubr.f32.gmra.mrb[0].mxu0 %v33
  %v198 = vpop.f32.mrb[0].mxu0
  %v199 = vadd.f32 %v109, %v198
  %v200 = vpop.f32.mrb[0].mxu0
  %v201 = vadd.f32 %v113, %v200
  %202 = vmatprep.mubr.f32.mxu0 0.0
  %203 = vmatmul.mubr.f32.gmra.mrb[0].mxu0 %v34
  %v204 = vpop.f32.mrb[0].mxu0
  %v205 = vadd.f32 %v109, %v204
  %v206 = vpop.f32.mrb[0].mxu0
  %v207 = vadd.f32 %v113, %v206
  %208 = vmatprep.mubr.f32.mxu0 0.0
  %209 = vmatmul.mubr.f32.gmra.mrb[0].mxu0 %v35
  %v210 = vpop.f32.mrb[0].mxu0
  %v211 = vadd.f32 %v109, %v210
  %v212 = vpop.f32.mrb[0].mxu0
  %v213 = vadd.f32 %v113, %v212
  %214 = vmatprep.mubr.f32.mxu0 0.0
  %215 = vmatmul.mubr.f32.gmra.mrb[0].mxu0 %v36
  %v216 = vpop.f32.mrb[0].mxu0
  %v217 = vadd.f32 %v109, %v216
  %v218 = vpop.f32.mrb[0].mxu0
  %v219 = vadd.f32 %v113, %v218
  %220 = vmatprep.mubr.f32.mxu0 0.0
  %221 = vmatmul.mubr.f32.gmra.mrb[0].mxu0 %v37
  %v222 = vpop.f32.mrb[0].mxu0
  %v223 = vadd.f32 %v109, %v222
  %v224 = vpop.f32.mrb[0].mxu0
  %v225 = vadd.f32 %v113, %v224
  %226 = vmatprep.mubr.f32.mxu0 0.0
  %227 = vmatmul.mubr.f32.gmra.mrb[0].mxu0 %v38
  %v228 = vpop.f32.mrb[0].mxu0
  %v229 = vadd.f32 %v109, %v228
  %v230 = vpop.f32.mrb[0].mxu0
  %v231 = vadd.f32 %v113, %v230
  %232 = vmatprep.mubr.f32.mxu0 0.0
  %233 = vmatmul.mubr.f32.gmra.mrb[0].mxu0 %v39
  %v234 = vpop.f32.mrb[0].mxu0
  %v235 = vadd.f32 %v109, %v234
  %v236 = vpop.f32.mrb[0].mxu0
  %v237 = vadd.f32 %v113, %v236
  %238 = vdwg.mxu0
  %239 = vmatprep.subr.mxu0 %v43
  %240 = vmatpush1.msra.mxu0 %v42
  %241 = vmatprep.subr.mxu0 %v47
  %242 = vmatpush1.msra.mxu0 %v46
  %243 = vmatprep.subr.mxu0 %v51
  %244 = vmatpush1.msra.mxu0 %v50
  %245 = vmatprep.subr.mxu0 %v55
  %246 = vmatpush1.msra.mxu0 %v54
  %247 = vmatprep.subr.mxu0 %v59
  %248 = vmatpush1.msra.mxu0 %v58
  %249 = vmatprep.subr.mxu0 %v63
  %250 = vmatpush1.msra.mxu0 %v62
  %251 = vmatprep.subr.mxu0 %v67
  %252 = vmatpush1.msra.mxu0 %v66
  %253 = vmatprep.subr.mxu0 %v71
  %254 = vmatpush1.msra.mxu0 %v70
  %255 = vmatprep.subr.mxu0 %v75
  %256 = vmatpush1.msra.mxu0 %v74
  %257 = vmatprep.subr.mxu0 %v79
  %258 = vmatpush1.msra.mxu0 %v78
  %259 = vmatprep.subr.mxu0 %v83
  %260 = vmatpush1.msra.mxu0 %v82
  %261 = vmatprep.subr.mxu0 %v87
  %262 = vmatpush1.msra.mxu0 %v86
  %263 = vmatprep.subr.mxu0 %v91
  %264 = vmatpush1.msra.mxu0 %v90
  %265 = vmatprep.subr.mxu0 %v95
  %266 = vmatpush1.msra.mxu0 %v94
  %267 = vmatprep.subr.mxu0 %v99
  %268 = vmatpush1.msra.mxu0 %v98
  %269 = vmatprep.subr.mxu0 %v103
  %270 = vmatpush1.msra.mxu0 %v102
  %271 = vmatprep.subr.mxu0 0.0
  %272 = vmatpush1.msra.mxu0 0.0
  %273 = vmatprep.subr.mxu0 0.0
  %274 = vmatpush1.msra.mxu0 0.0
  %275 = vmatprep.subr.mxu0 0.0
  %276 = vmatpush1.msra.mxu0 0.0
  %277 = vmatprep.subr.mxu0 0.0
  %278 = vmatpush1.msra.mxu0 0.0
  %279 = vmatprep.subr.mxu0 0.0
  %280 = vmatpush1.msra.mxu0 0.0
  %281 = vmatprep.subr.mxu0 0.0
  %282 = vmatpush1.msra.mxu0 0.0
  %283 = vmatprep.subr.mxu0 0.0
  %284 = vmatpush1.msra.mxu0 0.0
  %285 = vmatprep.subr.mxu0 0.0
  %286 = vmatpush1.msra.mxu0 0.0
  %287 = vmatprep.subr.mxu0 0.0
  %288 = vmatpush1.msra.mxu0 0.0
  %289 = vmatprep.subr.mxu0 0.0
  %290 = vmatpush1.msra.mxu0 0.0
  %291 = vmatprep.subr.mxu0 0.0
  %292 = vmatpush1.msra.mxu0 0.0
  %293 = vmatprep.subr.mxu0 0.0
  %294 = vmatpush1.msra.mxu0 0.0
  %295 = vmatprep.subr.mxu0 0.0
  %296 = vmatpush1.msra.mxu0 0.0
  %297 = vmatprep.subr.mxu0 0.0
  %298 = vmatpush1.msra.mxu0 0.0
  %299 = vmatprep.subr.mxu0 0.0
  %300 = vmatpush1.msra.mxu0 0.0
  %301 = vmatprep.subr.mxu0 0.0
  %302 = vmatpush1.msra.mxu0 0.0
  %303 = vmatprep.mubr.f32.mxu0 0.0
  %304 = vmatmul.mubr.f32.gmra.mrb[0].mxu0 %v32
  %v305 = vpop.f32.mrb[0].mxu0
  %v306 = vadd.f32 %v117, %v305
  %v307 = vpop.f32.mrb[0].mxu0
  %v308 = vadd.f32 %v121, %v307
  %309 = vmatprep.mubr.f32.mxu0 0.0
  %310 = vmatmul.mubr.f32.gmra.mrb[0].mxu0 %v33
  %v311 = vpop.f32.mrb[0].mxu0
  %v312 = vadd.f32 %v117, %v311
  %v313 = vpop.f32.mrb[0].mxu0
  %v314 = vadd.f32 %v121, %v313
  %315 = vmatprep.mubr.f32.mxu0 0.0
  %316 = vmatmul.mubr.f32.gmra.mrb[0].mxu0 %v34
  %v317 = vpop.f32.mrb[0].mxu0
  %v318 = vadd.f32 %v117, %v317
  %v319 = vpop.f32.mrb[0].mxu0
  %v320 = vadd.f32 %v121, %v319
  %321 = vmatprep.mubr.f32.mxu0 0.0
  %322 = vmatmul.mubr.f32.gmra.mrb[0].mxu0 %v35
  %v323 = vpop.f32.mrb[0].mxu0
  %v324 = vadd.f32 %v117, %v323
  %v325 = vpop.f32.mrb[0].mxu0
  %v326 = vadd.f32 %v121, %v325
  %327 = vmatprep.mubr.f32.mxu0 0.0
  %328 = vmatmul.mubr.f32.gmra.mrb[0].mxu0 %v36
  %v329 = vpop.f32.mrb[0].mxu0
  %v330 = vadd.f32 %v117, %v329
  %v331 = vpop.f32.mrb[0].mxu0
  %v332 = vadd.f32 %v121, %v331
  %333 = vmatprep.mubr.f32.mxu0 0.0
  %334 = vmatmul.mubr.f32.gmra.mrb[0].mxu0 %v37
  %v335 = vpop.f32.mrb[0].mxu0
  %v336 = vadd.f32 %v117, %v335
  %v337 = vpop.f32.mrb[0].mxu0
  %v338 = vadd.f32 %v121, %v337
  %339 = vmatprep.mubr.f32.mxu0 0.0
  %340 = vmatmul.mubr.f32.gmra.mrb[0].mxu0 %v38
  %v341 = vpop.f32.mrb[0].mxu0
  %v342 = vadd.f32 %v117, %v341
  %v343 = vpop.f32.mrb[0].mxu0
  %v344 = vadd.f32 %v121, %v343
  %345 = vmatprep.mubr.f32.mxu0 0.0
  %346 = vmatmul.mubr.f32.gmra.mrb[0].mxu0 %v39
  %v347 = vpop.f32.mrb[0].mxu0
  %v348 = vadd.f32 %v117, %v347
  %v349 = vpop.f32.mrb[0].mxu0
  %v350 = vadd.f32 %v121, %v349
  %351 = vdwg.mxu0
  %352 = vst [vmem:[#allocation3] sm:$0xff] %v193
  %353 = vst [vmem:[#allocation3 + $0x8] sm:$0xff] %v195
  %354 = vst [vmem:[#allocation3 + $0x10] sm:$0xff] %v306
  %355 = vst [vmem:[#allocation3 + $0x18] sm:$0xff] %v308
  %356 = vst [vmem:[#allocation3 + $0x20] sm:$0xff] %v199
  %357 = vst [vmem:[#allocation3 + $0x28] sm:$0xff] %v201
  %358 = vst [vmem:[#allocation3 + $0x30] sm:$0xff] %v312
  %359 = vst [vmem:[#allocation3 + $0x38] sm:$0xff] %v314
  %360 = vst [vmem:[#allocation3 + $0x40] sm:$0xff] %v205
  %361 = vst [vmem:[#allocation3 + $0x48] sm:$0xff] %v207
  %362 = vst [vmem:[#allocation3 + $0x50] sm:$0xff] %v318
  %363 = vst [vmem:[#allocation3 + $0x58] sm:$0xff] %v320
  %364 = vst [vmem:[#allocation3 + $0x60] sm:$0xff] %v211
  %365 = vst [vmem:[#allocation3 + $0x68] sm:$0xff] %v213
  %366 = vst [vmem:[#allocation3 + $0x70] sm:$0xff] %v324
  %367 = vst [vmem:[#allocation3 + $0x78] sm:$0xff] %v326
  %368 = vst [vmem:[#allocation3 + $0x80] sm:$0xff] %v217
  %369 = vst [vmem:[#allocation3 + $0x88] sm:$0xff] %v219
  %370 = vst [vmem:[#allocation3 + $0x90] sm:$0xff] %v330
  %371 = vst [vmem:[#allocation3 + $0x98] sm:$0xff] %v332
  %372 = vst [vmem:[#allocation3 + $0xa0] sm:$0xff] %v223
  %373 = vst [vmem:[#allocation3 + $0xa8] sm:$0xff] %v225
  %374 = vst [vmem:[#allocation3 + $0xb0] sm:$0xff] %v336
  %375 = vst [vmem:[#allocation3 + $0xb8] sm:$0xff] %v338
  %376 = vst [vmem:[#allocation3 + $0xc0] sm:$0xff] %v229
  %377 = vst [vmem:[#allocation3 + $0xc8] sm:$0xff] %v231
  %378 = vst [vmem:[#allocation3 + $0xd0] sm:$0xff] %v342
  %379 = vst [vmem:[#allocation3 + $0xd8] sm:$0xff] %v344
  %380 = vst [vmem:[#allocation3 + $0xe0] sm:$0xff] %v235
  %381 = vst [vmem:[#allocation3 + $0xe8] sm:$0xff] %v237
  %382 = vst [vmem:[#allocation3 + $0xf0] sm:$0xff] %v348
  %383 = vst [vmem:[#allocation3 + $0xf8] sm:$0xff] %v350
  %s384 = smul.u32 0, 4
  %s385 = smul.addr %s384, 8
  %s386 = scalar_lea.vmem [#allocation3], %s385
  %v387 = vld [vmem:[%s386] sm:$0xff]
  %v388 = vld [vmem:[%s386 + $0x8] sm:$0xff]
  %v389 = vld [vmem:[%s386 + $0x10] sm:$0xff]
  %v390 = vld [vmem:[%s386 + $0x18] sm:$0xff]
  %v391 = vld [vmem:[%s2] sm:$0xff]
  %v392 = vld [vmem:[%s2 + $0x8] sm:$0xff]
  %v393 = vld [vmem:[%s2 + $0x10] sm:$0xff]
  %v394 = vld [vmem:[%s2 + $0x18] sm:$0xff]
  %v395 = vld [vmem:[%s2 + $0x20] sm:$0xff]
  %v396 = vld [vmem:[%s2 + $0x28] sm:$0xff]
  %v397 = vld [vmem:[%s2 + $0x30] sm:$0xff]
  %v398 = vld [vmem:[%s2 + $0x38] sm:$0xff]
  %v399 = vld [vmem:[%s2 + $0x40] sm:$0xff]
  %v400 = vld [vmem:[%s2 + $0x48] sm:$0xff]
  %v401 = vld [vmem:[%s2 + $0x50] sm:$0xff]
  %v402 = vld [vmem:[%s2 + $0x58] sm:$0xff]
  %v403 = vld [vmem:[%s2 + $0x60] sm:$0xff]
  %v404 = vld [vmem:[%s2 + $0x68] sm:$0xff]
  %v405 = vld [vmem:[%s2 + $0x70] sm:$0xff]
  %v406 = vld [vmem:[%s2 + $0x78] sm:$0xff]
  %v407 = vld [vmem:[%s2 + $0x80] sm:$0xff]
  %v408 = vld [vmem:[%s2 + $0x88] sm:$0xff]
  %v409 = vld [vmem:[%s2 + $0x90] sm:$0xff]
  %v410 = vld [vmem:[%s2 + $0x98] sm:$0xff]
  %v411 = vld [vmem:[%s2 + $0xa0] sm:$0xff]
  %v412 = vld [vmem:[%s2 + $0xa8] sm:$0xff]
  %v413 = vld [vmem:[%s2 + $0xb0] sm:$0xff]
  %v414 = vld [vmem:[%s2 + $0xb8] sm:$0xff]
  %v415 = vld [vmem:[%s2 + $0xc0] sm:$0xff]
  %v416 = vld [vmem:[%s2 + $0xc8] sm:$0xff]
  %v417 = vld [vmem:[%s2 + $0xd0] sm:$0xff]
  %v418 = vld [vmem:[%s2 + $0xd8] sm:$0xff]
  %v419 = vld [vmem:[%s2 + $0xe0] sm:$0xff]
  %v420 = vld [vmem:[%s2 + $0xe8] sm:$0xff]
  %v421 = vld [vmem:[%s2 + $0xf0] sm:$0xff]
  %v422 = vld [vmem:[%s2 + $0xf8] sm:$0xff]
  %v423 = vld [vmem:[%s2 + $0x100] sm:$0xff]
  %v424 = vld [vmem:[%s2 + $0x108] sm:$0xff]
  %v425 = vld [vmem:[%s2 + $0x110] sm:$0xff]
  %v426 = vld [vmem:[%s2 + $0x118] sm:$0xff]
  %v427 = vld [vmem:[%s2 + $0x120] sm:$0xff]
  %v428 = vld [vmem:[%s2 + $0x128] sm:$0xff]
  %v429 = vld [vmem:[%s2 + $0x130] sm:$0xff]
  %v430 = vld [vmem:[%s2 + $0x138] sm:$0xff]
  %v431 = vld [vmem:[%s2 + $0x140] sm:$0xff]
  %v432 = vld [vmem:[%s2 + $0x148] sm:$0xff]
  %v433 = vld [vmem:[%s2 + $0x150] sm:$0xff]
  %v434 = vld [vmem:[%s2 + $0x158] sm:$0xff]
  %v435 = vld [vmem:[%s2 + $0x160] sm:$0xff]
  %v436 = vld [vmem:[%s2 + $0x168] sm:$0xff]
  %v437 = vld [vmem:[%s2 + $0x170] sm:$0xff]
  %v438 = vld [vmem:[%s2 + $0x178] sm:$0xff]
  %v439 = vld [vmem:[%s2 + $0x180] sm:$0xff]
  %v440 = vld [vmem:[%s2 + $0x188] sm:$0xff]
  %v441 = vld [vmem:[%s2 + $0x190] sm:$0xff]
  %v442 = vld [vmem:[%s2 + $0x198] sm:$0xff]
  %v443 = vld [vmem:[%s2 + $0x1a0] sm:$0xff]
  %v444 = vld [vmem:[%s2 + $0x1a8] sm:$0xff]
  %v445 = vld [vmem:[%s2 + $0x1b0] sm:$0xff]
  %v446 = vld [vmem:[%s2 + $0x1b8] sm:$0xff]
  %v447 = vld [vmem:[%s2 + $0x1c0] sm:$0xff]
  %v448 = vld [vmem:[%s2 + $0x1c8] sm:$0xff]
  %v449 = vld [vmem:[%s2 + $0x1d0] sm:$0xff]
  %v450 = vld [vmem:[%s2 + $0x1d8] sm:$0xff]
  %v451 = vld [vmem:[%s2 + $0x1e0] sm:$0xff]
  %v452 = vld [vmem:[%s2 + $0x1e8] sm:$0xff]
  %v453 = vld [vmem:[%s2 + $0x1f0] sm:$0xff]
  %v454 = vld [vmem:[%s2 + $0x1f8] sm:$0xff]
  %455 = vmatprep.subr.mxu0 %v392
  %456 = vmatpush1.msra.mxu0 %v391
  %457 = vmatprep.subr.mxu0 %v396
  %458 = vmatpush1.msra.mxu0 %v395
  %459 = vmatprep.subr.mxu0 %v400
  %460 = vmatpush1.msra.mxu0 %v399
  %461 = vmatprep.subr.mxu0 %v404
  %462 = vmatpush1.msra.mxu0 %v403
  %463 = vmatprep.subr.mxu0 %v408
  %464 = vmatpush1.msra.mxu0 %v407
  %465 = vmatprep.subr.mxu0 %v412
  %466 = vmatpush1.msra.mxu0 %v411
  %467 = vmatprep.subr.mxu0 %v416
  %468 = vmatpush1.msra.mxu0 %v415
  %469 = vmatprep.subr.mxu0 %v420
  %470 = vmatpush1.msra.mxu0 %v419
  %471 = vmatprep.subr.mxu0 %v424
  %472 = vmatpush1.msra.mxu0 %v423
  %473 = vmatprep.subr.mxu0 %v428
  %474 = vmatpush1.msra.mxu0 %v427
  %475 = vmatprep.subr.mxu0 %v432
  %476 = vmatpush1.msra.mxu0 %v431
  %477 = vmatprep.subr.mxu0 %v436
  %478 = vmatpush1.msra.mxu0 %v435
  %479 = vmatprep.subr.mxu0 %v440
  %480 = vmatpush1.msra.mxu0 %v439
  %481 = vmatprep.subr.mxu0 %v444
  %482 = vmatpush1.msra.mxu0 %v443
  %483 = vmatprep.subr.mxu0 %v448
  %484 = vmatpush1.msra.mxu0 %v447
  %485 = vmatprep.subr.mxu0 %v452
  %486 = vmatpush1.msra.mxu0 %v451
  %487 = vmatprep.subr.mxu0 0.0
  %488 = vmatpush1.msra.mxu0 0.0
  %489 = vmatprep.subr.mxu0 0.0
  %490 = vmatpush1.msra.mxu0 0.0
  %491 = vmatprep.subr.mxu0 0.0
  %492 = vmatpush1.msra.mxu0 0.0
  %493 = vmatprep.subr.mxu0 0.0
  %494 = vmatpush1.msra.mxu0 0.0
  %495 = vmatprep.subr.mxu0 0.0
  %496 = vmatpush1.msra.mxu0 0.0
  %497 = vmatprep.subr.mxu0 0.0
  %498 = vmatpush1.msra.mxu0 0.0
  %499 = vmatprep.subr.mxu0 0.0
  %500 = vmatpush1.msra.mxu0 0.0
  %501 = vmatprep.subr.mxu0 0.0
  %502 = vmatpush1.msra.mxu0 0.0
  %503 = vmatprep.subr.mxu0 0.0
  %504 = vmatpush1.msra.mxu0 0.0
  %505 = vmatprep.subr.mxu0 0.0
  %506 = vmatpush1.msra.mxu0 0.0
  %507 = vmatprep.subr.mxu0 0.0
  %508 = vmatpush1.msra.mxu0 0.0
  %509 = vmatprep.subr.mxu0 0.0
  %510 = vmatpush1.msra.mxu0 0.0
  %511 = vmatprep.subr.mxu0 0.0
  %512 = vmatpush1.msra.mxu0 0.0
  %513 = vmatprep.subr.mxu0 0.0
  %514 = vmatpush1.msra.mxu0 0.0
  %515 = vmatprep.subr.mxu0 0.0
  %516 = vmatpush1.msra.mxu0 0.0
  %517 = vmatprep.subr.mxu0 0.0
  %518 = vmatpush1.msra.mxu0 0.0
  %519 = vmatprep.mubr.f32.mxu0 0.0
  %520 = vmatmul.mubr.f32.gmra.mrb[0].mxu0 0.0
  %v521 = vpop.f32.mrb[0].mxu0
  %v522 = vadd.f32 0.0, %v521
  %v523 = vpop.f32.mrb[0].mxu0
  %v524 = vadd.f32 0.0, %v523
  %525 = vdwg.mxu0
  %526 = vmatprep.subr.mxu0 %v394
  %527 = vmatpush1.msra.mxu0 %v393
  %528 = vmatprep.subr.mxu0 %v398
  %529 = vmatpush1.msra.mxu0 %v397
  %530 = vmatprep.subr.mxu0 %v402
  %531 = vmatpush1.msra.mxu0 %v401
  %532 = vmatprep.subr.mxu0 %v406
  %533 = vmatpush1.msra.mxu0 %v405
  %534 = vmatprep.subr.mxu0 %v410
  %535 = vmatpush1.msra.mxu0 %v409
  %536 = vmatprep.subr.mxu0 %v414
  %537 = vmatpush1.msra.mxu0 %v413
  %538 = vmatprep.subr.mxu0 %v418
  %539 = vmatpush1.msra.mxu0 %v417
  %540 = vmatprep.subr.mxu0 %v422
  %541 = vmatpush1.msra.mxu0 %v421
  %542 = vmatprep.subr.mxu0 %v426
  %543 = vmatpush1.msra.mxu0 %v425
  %544 = vmatprep.subr.mxu0 %v430
  %545 = vmatpush1.msra.mxu0 %v429
  %546 = vmatprep.subr.mxu0 %v434
  %547 = vmatpush1.msra.mxu0 %v433
  %548 = vmatprep.subr.mxu0 %v438
  %549 = vmatpush1.msra.mxu0 %v437
  %550 = vmatprep.subr.mxu0 %v442
  %551 = vmatpush1.msra.mxu0 %v441
  %552 = vmatprep.subr.mxu0 %v446
  %553 = vmatpush1.msra.mxu0 %v445
  %554 = vmatprep.subr.mxu0 %v450
  %555 = vmatpush1.msra.mxu0 %v449
  %556 = vmatprep.subr.mxu0 %v454
  %557 = vmatpush1.msra.mxu0 %v453
  %558 = vmatprep.subr.mxu0 0.0
  %559 = vmatpush1.msra.mxu0 0.0
  %560 = vmatprep.subr.mxu0 0.0
  %561 = vmatpush1.msra.mxu0 0.0
  %562 = vmatprep.subr.mxu0 0.0
  %563 = vmatpush1.msra.mxu0 0.0
  %564 = vmatprep.subr.mxu0 0.0
  %565 = vmatpush1.msra.mxu0 0.0
  %566 = vmatprep.subr.mxu0 0.0
  %567 = vmatpush1.msra.mxu0 0.0
  %568 = vmatprep.subr.mxu0 0.0
  %569 = vmatpush1.msra.mxu0 0.0
  %570 = vmatprep.subr.mxu0 0.0
  %571 = vmatpush1.msra.mxu0 0.0
  %572 = vmatprep.subr.mxu0 0.0
  %573 = vmatpush1.msra.mxu0 0.0
  %574 = vmatprep.subr.mxu0 0.0
  %575 = vmatpush1.msra.mxu0 0.0
  %576 = vmatprep.subr.mxu0 0.0
  %577 = vmatpush1.msra.mxu0 0.0
  %578 = vmatprep.subr.mxu0 0.0
  %579 = vmatpush1.msra.mxu0 0.0
  %580 = vmatprep.subr.mxu0 0.0
  %581 = vmatpush1.msra.mxu0 0.0
  %582 = vmatprep.subr.mxu0 0.0
  %583 = vmatpush1.msra.mxu0 0.0
  %584 = vmatprep.subr.mxu0 0.0
  %585 = vmatpush1.msra.mxu0 0.0
  %586 = vmatprep.subr.mxu0 0.0
  %587 = vmatpush1.msra.mxu0 0.0
  %588 = vmatprep.subr.mxu0 0.0
  %589 = vmatpush1.msra.mxu0 0.0
  %590 = vmatprep.mubr.f32.mxu0 0.0
  %591 = vmatmul.mubr.f32.gmra.mrb[0].mxu0 0.0
  %v592 = vpop.f32.mrb[0].mxu0
  %v593 = vadd.f32 0.0, %v592
  %v594 = vpop.f32.mrb[0].mxu0
  %v595 = vadd.f32 0.0, %v594
  %596 = vdwg.mxu0
  %v597 = vadd.f32 %v387, %v522
  %v598 = vadd.f32 %v388, %v524
  %v599 = vadd.f32 %v389, %v593
  %v600 = vadd.f32 %v390, %v595
  %v601 = vxor.u32 %v597, 2147483648
  %v602 = vmul.f32 %v601, 1.442695
  %v603 = vpow.pop %v602
  %v604 = vadd.f32 %v603, 1.0
  %v605 = vrcp.pop %v604
  %v606 = vmul.f32 1.0, %v605
  %v607 = vxor.u32 %v598, 2147483648
  %v608 = vmul.f32 %v607, 1.442695
  %v609 = vpow.pop %v608
  %v610 = vadd.f32 %v609, 1.0
  %v611 = vrcp.pop %v610
  %v612 = vmul.f32 1.0, %v611
  %v613 = vtanh.pop %v599
  %v614 = vxor.u32 %v600, 2147483648
  %v615 = vmul.f32 %v614, 1.442695
  %v616 = vpow.pop %v615
  %v617 = vadd.f32 %v616, 1.0
  %v618 = vrcp.pop %v617
  %v619 = vmul.f32 1.0, %v618
  %v620 = vmul.f32 %v612, 0.0
  %v621 = vmul.f32 %v606, %v613
  %v622 = vadd.f32 %v620, %v621
  %v623 = vtanh.pop %v622
  %v624 = vmul.f32 %v619, %v623
  %625 = vst [vmem:[#allocation2] sm:$0xff] %v624
  %s626 = smul.u32 1, 4
  %s627 = smul.addr %s626, 8
  %s628 = scalar_lea.vmem [#allocation3], %s627
  %v629 = vld [vmem:[%s628] sm:$0xff]
  %v630 = vld [vmem:[%s628 + $0x8] sm:$0xff]
  %v631 = vld [vmem:[%s628 + $0x10] sm:$0xff]
  %v632 = vld [vmem:[%s628 + $0x18] sm:$0xff]
  %v633 = vld [vmem:[%s2] sm:$0xff]
  %v634 = vld [vmem:[%s2 + $0x8] sm:$0xff]
  %v635 = vld [vmem:[%s2 + $0x10] sm:$0xff]
  %v636 = vld [vmem:[%s2 + $0x18] sm:$0xff]
  %v637 = vld [vmem:[%s2 + $0x20] sm:$0xff]
  %v638 = vld [vmem:[%s2 + $0x28] sm:$0xff]
  %v639 = vld [vmem:[%s2 + $0x30] sm:$0xff]
  %v640 = vld [vmem:[%s2 + $0x38] sm:$0xff]
  %v641 = vld [vmem:[%s2 + $0x40] sm:$0xff]
  %v642 = vld [vmem:[%s2 + $0x48] sm:$0xff]
  %v643 = vld [vmem:[%s2 + $0x50] sm:$0xff]
  %v644 = vld [vmem:[%s2 + $0x58] sm:$0xff]
  %v645 = vld [vmem:[%s2 + $0x60] sm:$0xff]
  %v646 = vld [vmem:[%s2 + $0x68] sm:$0xff]
  %v647 = vld [vmem:[%s2 + $0x70] sm:$0xff]
  %v648 = vld [vmem:[%s2 + $0x78] sm:$0xff]
  %v649 = vld [vmem:[%s2 + $0x80] sm:$0xff]
  %v650 = vld [vmem:[%s2 + $0x88] sm:$0xff]
  %v651 = vld [vmem:[%s2 + $0x90] sm:$0xff]
  %v652 = vld [vmem:[%s2 + $0x98] sm:$0xff]
  %v653 = vld [vmem:[%s2 + $0xa0] sm:$0xff]
  %v654 = vld [vmem:[%s2 + $0xa8] sm:$0xff]
  %v655 = vld [vmem:[%s2 + $0xb0] sm:$0xff]
  %v656 = vld [vmem:[%s2 + $0xb8] sm:$0xff]
  %v657 = vld [vmem:[%s2 + $0xc0] sm:$0xff]
  %v658 = vld [vmem:[%s2 + $0xc8] sm:$0xff]
  %v659 = vld [vmem:[%s2 + $0xd0] sm:$0xff]
  %v660 = vld [vmem:[%s2 + $0xd8] sm:$0xff]
  %v661 = vld [vmem:[%s2 + $0xe0] sm:$0xff]
  %v662 = vld [vmem:[%s2 + $0xe8] sm:$0xff]
  %v663 = vld [vmem:[%s2 + $0xf0] sm:$0xff]
  %v664 = vld [vmem:[%s2 + $0xf8] sm:$0xff]
  %v665 = vld [vmem:[%s2 + $0x100] sm:$0xff]
  %v666 = vld [vmem:[%s2 + $0x108] sm:$0xff]
  %v667 = vld [vmem:[%s2 + $0x110] sm:$0xff]
  %v668 = vld [vmem:[%s2 + $0x118] sm:$0xff]
  %v669 = vld [vmem:[%s2 + $0x120] sm:$0xff]
  %v670 = vld [vmem:[%s2 + $0x128] sm:$0xff]
  %v671 = vld [vmem:[%s2 + $0x130] sm:$0xff]
  %v672 = vld [vmem:[%s2 + $0x138] sm:$0xff]
  %v673 = vld [vmem:[%s2 + $0x140] sm:$0xff]
  %v674 = vld [vmem:[%s2 + $0x148] sm:$0xff]
  %v675 = vld [vmem:[%s2 + $0x150] sm:$0xff]
  %v676 = vld [vmem:[%s2 + $0x158] sm:$0xff]
  %v677 = vld [vmem:[%s2 + $0x160] sm:$0xff]
  %v678 = vld [vmem:[%s2 + $0x168] sm:$0xff]
  %v679 = vld [vmem:[%s2 + $0x170] sm:$0xff]
  %v680 = vld [vmem:[%s2 + $0x178] sm:$0xff]
  %v681 = vld [vmem:[%s2 + $0x180] sm:$0xff]
  %v682 = vld [vmem:[%s2 + $0x188] sm:$0xff]
  %v683 = vld [vmem:[%s2 + $0x190] sm:$0xff]
  %v684 = vld [vmem:[%s2 + $0x198] sm:$0xff]
  %v685 = vld [vmem:[%s2 + $0x1a0] sm:$0xff]
  %v686 = vld [vmem:[%s2 + $0x1a8] sm:$0xff]
  %v687 = vld [vmem:[%s2 + $0x1b0] sm:$0xff]
  %v688 = vld [vmem:[%s2 + $0x1b8] sm:$0xff]
  %v689 = vld [vmem:[%s2 + $0x1c0] sm:$0xff]
  %v690 = vld [vmem:[%s2 + $0x1c8] sm:$0xff]
  %v691 = vld [vmem:[%s2 + $0x1d0] sm:$0xff]
  %v692 = vld [vmem:[%s2 + $0x1d8] sm:$0xff]
  %v693 = vld [vmem:[%s2 + $0x1e0] sm:$0xff]
  %v694 = vld [vmem:[%s2 + $0x1e8] sm:$0xff]
  %v695 = vld [vmem:[%s2 + $0x1f0] sm:$0xff]
  %v696 = vld [vmem:[%s2 + $0x1f8] sm:$0xff]
  %697 = vmatprep.subr.mxu0 %v634
  %698 = vmatpush1.msra.mxu0 %v633
  %699 = vmatprep.subr.mxu0 %v638
  %700 = vmatpush1.msra.mxu0 %v637
  %701 = vmatprep.subr.mxu0 %v642
  %702 = vmatpush1.msra.mxu0 %v641
  %703 = vmatprep.subr.mxu0 %v646
  %704 = vmatpush1.msra.mxu0 %v645
  %705 = vmatprep.subr.mxu0 %v650
  %706 = vmatpush1.msra.mxu0 %v649
  %707 = vmatprep.subr.mxu0 %v654
  %708 = vmatpush1.msra.mxu0 %v653
  %709 = vmatprep.subr.mxu0 %v658
  %710 = vmatpush1.msra.mxu0 %v657
  %711 = vmatprep.subr.mxu0 %v662
  %712 = vmatpush1.msra.mxu0 %v661
  %713 = vmatprep.subr.mxu0 %v666
  %714 = vmatpush1.msra.mxu0 %v665
  %715 = vmatprep.subr.mxu0 %v670
  %716 = vmatpush1.msra.mxu0 %v669
  %717 = vmatprep.subr.mxu0 %v674
  %718 = vmatpush1.msra.mxu0 %v673
  %719 = vmatprep.subr.mxu0 %v678
  %720 = vmatpush1.msra.mxu0 %v677
  %721 = vmatprep.subr.mxu0 %v682
  %722 = vmatpush1.msra.mxu0 %v681
  %723 = vmatprep.subr.mxu0 %v686
  %724 = vmatpush1.msra.mxu0 %v685
  %725 = vmatprep.subr.mxu0 %v690
  %726 = vmatpush1.msra.mxu0 %v689
  %727 = vmatprep.subr.mxu0 %v694
  %728 = vmatpush1.msra.mxu0 %v693
  %729 = vmatprep.subr.mxu0 0.0
  %730 = vmatpush1.msra.mxu0 0.0
  %731 = vmatprep.subr.mxu0 0.0
  %732 = vmatpush1.msra.mxu0 0.0
  %733 = vmatprep.subr.mxu0 0.0
  %734 = vmatpush1.msra.mxu0 0.0
  %735 = vmatprep.subr.mxu0 0.0
  %736 = vmatpush1.msra.mxu0 0.0
  %737 = vmatprep.subr.mxu0 0.0
  %738 = vmatpush1.msra.mxu0 0.0
  %739 = vmatprep.subr.mxu0 0.0
  %740 = vmatpush1.msra.mxu0 0.0
  %741 = vmatprep.subr.mxu0 0.0
  %742 = vmatpush1.msra.mxu0 0.0
  %743 = vmatprep.subr.mxu0 0.0
  %744 = vmatpush1.msra.mxu0 0.0
  %745 = vmatprep.subr.mxu0 0.0
  %746 = vmatpush1.msra.mxu0 0.0
  %747 = vmatprep.subr.mxu0 0.0
  %748 = vmatpush1.msra.mxu0 0.0
  %749 = vmatprep.subr.mxu0 0.0
  %750 = vmatpush1.msra.mxu0 0.0
  %751 = vmatprep.subr.mxu0 0.0
  %752 = vmatpush1.msra.mxu0 0.0
  %753 = vmatprep.subr.mxu0 0.0
  %754 = vmatpush1.msra.mxu0 0.0
  %755 = vmatprep.subr.mxu0 0.0
  %756 = vmatpush1.msra.mxu0 0.0
  %757 = vmatprep.subr.mxu0 0.0
  %758 = vmatpush1.msra.mxu0 0.0
  %759 = vmatprep.subr.mxu0 0.0
  %760 = vmatpush1.msra.mxu0 0.0
  %761 = vmatprep.mubr.f32.mxu0 0.0
  %762 = vmatmul.mubr.f32.gmra.mrb[0].mxu0 %v624
  %v763 = vpop.f32.mrb[0].mxu0
  %v764 = vadd.f32 0.0, %v763
  %v765 = vpop.f32.mrb[0].mxu0
  %v766 = vadd.f32 0.0, %v765
  %767 = vdwg.mxu0
  %768 = vmatprep.subr.mxu0 %v636
  %769 = vmatpush1.msra.mxu0 %v635
  %770 = vmatprep.subr.mxu0 %v640
  %771 = vmatpush1.msra.mxu0 %v639
  %772 = vmatprep.subr.mxu0 %v644
  %773 = vmatpush1.msra.mxu0 %v643
  %774 = vmatprep.subr.mxu0 %v648
  %775 = vmatpush1.msra.mxu0 %v647
  %776 = vmatprep.subr.mxu0 %v652
  %777 = vmatpush1.msra.mxu0 %v651
  %778 = vmatprep.subr.mxu0 %v656
  %779 = vmatpush1.msra.mxu0 %v655
  %780 = vmatprep.subr.mxu0 %v660
  %781 = vmatpush1.msra.mxu0 %v659
  %782 = vmatprep.subr.mxu0 %v664
  %783 = vmatpush1.msra.mxu0 %v663
  %784 = vmatprep.subr.mxu0 %v668
  %785 = vmatpush1.msra.mxu0 %v667
  %786 = vmatprep.subr.mxu0 %v672
  %787 = vmatpush1.msra.mxu0 %v671
  %788 = vmatprep.subr.mxu0 %v676
  %789 = vmatpush1.msra.mxu0 %v675
  %790 = vmatprep.subr.mxu0 %v680
  %791 = vmatpush1.msra.mxu0 %v679
  %792 = vmatprep.subr.mxu0 %v684
  %793 = vmatpush1.msra.mxu0 %v683
  %794 = vmatprep.subr.mxu0 %v688
  %795 = vmatpush1.msra.mxu0 %v687
  %796 = vmatprep.subr.mxu0 %v692
  %797 = vmatpush1.msra.mxu0 %v691
  %798 = vmatprep.subr.mxu0 %v696
  %799 = vmatpush1.msra.mxu0 %v695
  %800 = vmatprep.subr.mxu0 0.0
  %801 = vmatpush1.msra.mxu0 0.0
  %802 = vmatprep.subr.mxu0 0.0
  %803 = vmatpush1.msra.mxu0 0.0
  %804 = vmatprep.subr.mxu0 0.0
  %805 = vmatpush1.msra.mxu0 0.0
  %806 = vmatprep.subr.mxu0 0.0
  %807 = vmatpush1.msra.mxu0 0.0
  %808 = vmatprep.subr.mxu0 0.0
  %809 = vmatpush1.msra.mxu0 0.0
  %810 = vmatprep.subr.mxu0 0.0
  %811 = vmatpush1.msra.mxu0 0.0
  %812 = vmatprep.subr.mxu0 0.0
  %813 = vmatpush1.msra.mxu0 0.0
  %814 = vmatprep.subr.mxu0 0.0
  %815 = vmatpush1.msra.mxu0 0.0
  %816 = vmatprep.subr.mxu0 0.0
  %817 = vmatpush1.msra.mxu0 0.0
  %818 = vmatprep.subr.mxu0 0.0
  %819 = vmatpush1.msra.mxu0 0.0
  %820 = vmatprep.subr.mxu0 0.0
  %821 = vmatpush1.msra.mxu0 0.0
  %822 = vmatprep.subr.mxu0 0.0
  %823 = vmatpush1.msra.mxu0 0.0
  %824 = vmatprep.subr.mxu0 0.0
  %825 = vmatpush1.msra.mxu0 0.0
  %826 = vmatprep.subr.mxu0 0.0
  %827 = vmatpush1.msra.mxu0 0.0
  %828 = vmatprep.subr.mxu0 0.0
  %829 = vmatpush1.msra.mxu0 0.0
  %830 = vmatprep.subr.mxu0 0.0
  %831 = vmatpush1.msra.mxu0 0.0
  %832 = vmatprep.mubr.f32.mxu0 0.0
  %833 = vmatmul.mubr.f32.gmra.mrb[0].mxu0 %v624
  %v834 = vpop.f32.mrb[0].mxu0
  %v835 = vadd.f32 0.0, %v834
  %v836 = vpop.f32.mrb[0].mxu0
  %v837 = vadd.f32 0.0, %v836
  %838 = vdwg.mxu0
  %v839 = vadd.f32 %v629, %v764
  %v840 = vadd.f32 %v630, %v766
  %v841 = vadd.f32 %v631, %v835
  %v842 = vadd.f32 %v632, %v837
  %v843 = vxor.u32 %v839, 2147483648
  %v844 = vmul.f32 %v843, 1.442695
  %v845 = vpow.pop %v844
  %v846 = vadd.f32 %v845, 1.0
  %v847 = vrcp.pop %v846
  %v848 = vmul.f32 1.0, %v847
  %v849 = vxor.u32 %v840, 2147483648
  %v850 = vmul.f32 %v849, 1.442695
  %v851 = vpow.pop %v850
  %v852 = vadd.f32 %v851, 1.0
  %v853 = vrcp.pop %v852
  %v854 = vmul.f32 1.0, %v853
  %v855 = vtanh.pop %v841
  %v856 = vxor.u32 %v842, 2147483648
  %v857 = vmul.f32 %v856, 1.442695
  %v858 = vpow.pop %v857
  %v859 = vadd.f32 %v858, 1.0
  %v860 = vrcp.pop %v859
  %v861 = vmul.f32 1.0, %v860
  %v862 = vmul.f32 %v854, %v622
  %v863 = vmul.f32 %v848, %v855
  %v864 = vadd.f32 %v862, %v863
  %v865 = vtanh.pop %v864
  %v866 = vmul.f32 %v861, %v865
  %s867 = scalar_lea.vmem [#allocation2], 8
  %868 = vst [vmem:[%s867] sm:$0xff] %v866
  %s869 = smul.u32 2, 4
  %s870 = smul.addr %s869, 8
  %s871 = scalar_lea.vmem [#allocation3], %s870
  %v872 = vld [vmem:[%s871] sm:$0xff]
  %v873 = vld [vmem:[%s871 + $0x8] sm:$0xff]
  %v874 = vld [vmem:[%s871 + $0x10] sm:$0xff]
  %v875 = vld [vmem:[%s871 + $0x18] sm:$0xff]
  %v876 = vld [vmem:[%s2] sm:$0xff]
  %v877 = vld [vmem:[%s2 + $0x8] sm:$0xff]
  %v878 = vld [vmem:[%s2 + $0x10] sm:$0xff]
  %v879 = vld [vmem:[%s2 + $0x18] sm:$0xff]
  %v880 = vld [vmem:[%s2 + $0x20] sm:$0xff]
  %v881 = vld [vmem:[%s2 + $0x28] sm:$0xff]
  %v882 = vld [vmem:[%s2 + $0x30] sm:$0xff]
  %v883 = vld [vmem:[%s2 + $0x38] sm:$0xff]
  %v884 = vld [vmem:[%s2 + $0x40] sm:$0xff]
  %v885 = vld [vmem:[%s2 + $0x48] sm:$0xff]
  %v886 = vld [vmem:[%s2 + $0x50] sm:$0xff]
  %v887 = vld [vmem:[%s2 + $0x58] sm:$0xff]
  %v888 = vld [vmem:[%s2 + $0x60] sm:$0xff]
  %v889 = vld [vmem:[%s2 + $0x68] sm:$0xff]
  %v890 = vld [vmem:[%s2 + $0x70] sm:$0xff]
  %v891 = vld [vmem:[%s2 + $0x78] sm:$0xff]
  %v892 = vld [vmem:[%s2 + $0x80] sm:$0xff]
  %v893 = vld [vmem:[%s2 + $0x88] sm:$0xff]
  %v894 = vld [vmem:[%s2 + $0x90] sm:$0xff]
  %v895 = vld [vmem:[%s2 + $0x98] sm:$0xff]
  %v896 = vld [vmem:[%s2 + $0xa0] sm:$0xff]
  %v897 = vld [vmem:[%s2 + $0xa8] sm:$0xff]
  %v898 = vld [vmem:[%s2 + $0xb0] sm:$0xff]
  %v899 = vld [vmem:[%s2 + $0xb8] sm:$0xff]
  %v900 = vld [vmem:[%s2 + $0xc0] sm:$0xff]
  %v901 = vld [vmem:[%s2 + $0xc8] sm:$0xff]
  %v902 = vld [vmem:[%s2 + $0xd0] sm:$0xff]
  %v903 = vld [vmem:[%s2 + $0xd8] sm:$0xff]
  %v904 = vld [vmem:[%s2 + $0xe0] sm:$0xff]
  %v905 = vld [vmem:[%s2 + $0xe8] sm:$0xff]
  %v906 = vld [vmem:[%s2 + $0xf0] sm:$0xff]
  %v907 = vld [vmem:[%s2 + $0xf8] sm:$0xff]
  %v908 = vld [vmem:[%s2 + $0x100] sm:$0xff]
  %v909 = vld [vmem:[%s2 + $0x108] sm:$0xff]
  %v910 = vld [vmem:[%s2 + $0x110] sm:$0xff]
  %v911 = vld [vmem:[%s2 + $0x118] sm:$0xff]
  %v912 = vld [vmem:[%s2 + $0x120] sm:$0xff]
  %v913 = vld [vmem:[%s2 + $0x128] sm:$0xff]
  %v914 = vld [vmem:[%s2 + $0x130] sm:$0xff]
  %v915 = vld [vmem:[%s2 + $0x138] sm:$0xff]
  %v916 = vld [vmem:[%s2 + $0x140] sm:$0xff]
  %v917 = vld [vmem:[%s2 + $0x148] sm:$0xff]
  %v918 = vld [vmem:[%s2 + $0x150] sm:$0xff]
  %v919 = vld [vmem:[%s2 + $0x158] sm:$0xff]
  %v920 = vld [vmem:[%s2 + $0x160] sm:$0xff]
  %v921 = vld [vmem:[%s2 + $0x168] sm:$0xff]
  %v922 = vld [vmem:[%s2 + $0x170] sm:$0xff]
  %v923 = vld [vmem:[%s2 + $0x178] sm:$0xff]
  %v924 = vld [vmem:[%s2 + $0x180] sm:$0xff]
  %v925 = vld [vmem:[%s2 + $0x188] sm:$0xff]
  %v926 = vld [vmem:[%s2 + $0x190] sm:$0xff]
  %v927 = vld [vmem:[%s2 + $0x198] sm:$0xff]
  %v928 = vld [vmem:[%s2 + $0x1a0] sm:$0xff]
  %v929 = vld [vmem:[%s2 + $0x1a8] sm:$0xff]
  %v930 = vld [vmem:[%s2 + $0x1b0] sm:$0xff]
  %v931 = vld [vmem:[%s2 + $0x1b8] sm:$0xff]
  %v932 = vld [vmem:[%s2 + $0x1c0] sm:$0xff]
  %v933 = vld [vmem:[%s2 + $0x1c8] sm:$0xff]
  %v934 = vld [vmem:[%s2 + $0x1d0] sm:$0xff]
  %v935 = vld [vmem:[%s2 + $0x1d8] sm:$0xff]
  %v936 = vld [vmem:[%s2 + $0x1e0] sm:$0xff]
  %v937 = vld [vmem:[%s2 + $0x1e8] sm:$0xff]
  %v938 = vld [vmem:[%s2 + $0x1f0] sm:$0xff]
  %v939 = vld [vmem:[%s2 + $0x1f8] sm:$0xff]
  %940 = vmatprep.subr.mxu0 %v877
  %941 = vmatpush1.msra.mxu0 %v876
  %942 = vmatprep.subr.mxu0 %v881
  %943 = vmatpush1.msra.mxu0 %v880
  %944 = vmatprep.subr.mxu0 %v885
  %945 = vmatpush1.msra.mxu0 %v884
  %946 = vmatprep.subr.mxu0 %v889
  %947 = vmatpush1.msra.mxu0 %v888
  %948 = vmatprep.subr.mxu0 %v893
  %949 = vmatpush1.msra.mxu0 %v892
  %950 = vmatprep.subr.mxu0 %v897
  %951 = vmatpush1.msra.mxu0 %v896
  %952 = vmatprep.subr.mxu0 %v901
  %953 = vmatpush1.msra.mxu0 %v900
  %954 = vmatprep.subr.mxu0 %v905
  %955 = vmatpush1.msra.mxu0 %v904
  %956 = vmatprep.subr.mxu0 %v909
  %957 = vmatpush1.msra.mxu0 %v908
  %958 = vmatprep.subr.mxu0 %v913
  %959 = vmatpush1.msra.mxu0 %v912
  %960 = vmatprep.subr.mxu0 %v917
  %961 = vmatpush1.msra.mxu0 %v916
  %962 = vmatprep.subr.mxu0 %v921
  %963 = vmatpush1.msra.mxu0 %v920
  %964 = vmatprep.subr.mxu0 %v925
  %965 = vmatpush1.msra.mxu0 %v924
  %966 = vmatprep.subr.mxu0 %v929
  %967 = vmatpush1.msra.mxu0 %v928
  %968 = vmatprep.subr.mxu0 %v933
  %969 = vmatpush1.msra.mxu0 %v932
  %970 = vmatprep.subr.mxu0 %v937
  %971 = vmatpush1.msra.mxu0 %v936
  %972 = vmatprep.subr.mxu0 0.0
  %973 = vmatpush1.msra.mxu0 0.0
  %974 = vmatprep.subr.mxu0 0.0
  %975 = vmatpush1.msra.mxu0 0.0
  %976 = vmatprep.subr.mxu0 0.0
  %977 = vmatpush1.msra.mxu0 0.0
  %978 = vmatprep.subr.mxu0 0.0
  %979 = vmatpush1.msra.mxu0 0.0
  %980 = vmatprep.subr.mxu0 0.0
  %981 = vmatpush1.msra.mxu0 0.0
  %982 = vmatprep.subr.mxu0 0.0
  %983 = vmatpush1.msra.mxu0 0.0
  %984 = vmatprep.subr.mxu0 0.0
  %985 = vmatpush1.msra.mxu0 0.0
  %986 = vmatprep.subr.mxu0 0.0
  %987 = vmatpush1.msra.mxu0 0.0
  %988 = vmatprep.subr.mxu0 0.0
  %989 = vmatpush1.msra.mxu0 0.0
  %990 = vmatprep.subr.mxu0 0.0
  %991 = vmatpush1.msra.mxu0 0.0
  %992 = vmatprep.subr.mxu0 0.0
  %993 = vmatpush1.msra.mxu0 0.0
  %994 = vmatprep.subr.mxu0 0.0
  %995 = vmatpush1.msra.mxu0 0.0
  %996 = vmatprep.subr.mxu0 0.0
  %997 = vmatpush1.msra.mxu0 0.0
  %998 = vmatprep.subr.mxu0 0.0
  %999 = vmatpush1.msra.mxu0 0.0
  %1000 = vmatprep.subr.mxu0 0.0
  %1001 = vmatpush1.msra.mxu0 0.0
  %1002 = vmatprep.subr.mxu0 0.0
  %1003 = vmatpush1.msra.mxu0 0.0
  %1004 = vmatprep.mubr.f32.mxu0 0.0
  %1005 = vmatmul.mubr.f32.gmra.mrb[0].mxu0 %v866
  %v1006 = vpop.f32.mrb[0].mxu0
  %v1007 = vadd.f32 0.0, %v1006
  %v1008 = vpop.f32.mrb[0].mxu0
  %v1009 = vadd.f32 0.0, %v1008
  %1010 = vdwg.mxu0
  %1011 = vmatprep.subr.mxu0 %v879
  %1012 = vmatpush1.msra.mxu0 %v878
  %1013 = vmatprep.subr.mxu0 %v883
  %1014 = vmatpush1.msra.mxu0 %v882
  %1015 = vmatprep.subr.mxu0 %v887
  %1016 = vmatpush1.msra.mxu0 %v886
  %1017 = vmatprep.subr.mxu0 %v891
  %1018 = vmatpush1.msra.mxu0 %v890
  %1019 = vmatprep.subr.mxu0 %v895
  %1020 = vmatpush1.msra.mxu0 %v894
  %1021 = vmatprep.subr.mxu0 %v899
  %1022 = vmatpush1.msra.mxu0 %v898
  %1023 = vmatprep.subr.mxu0 %v903
  %1024 = vmatpush1.msra.mxu0 %v902
  %1025 = vmatprep.subr.mxu0 %v907
  %1026 = vmatpush1.msra.mxu0 %v906
  %1027 = vmatprep.subr.mxu0 %v911
  %1028 = vmatpush1.msra.mxu0 %v910
  %1029 = vmatprep.subr.mxu0 %v915
  %1030 = vmatpush1.msra.mxu0 %v914
  %1031 = vmatprep.subr.mxu0 %v919
  %1032 = vmatpush1.msra.mxu0 %v918
  %1033 = vmatprep.subr.mxu0 %v923
  %1034 = vmatpush1.msra.mxu0 %v922
  %1035 = vmatprep.subr.mxu0 %v927
  %1036 = vmatpush1.msra.mxu0 %v926
  %1037 = vmatprep.subr.mxu0 %v931
  %1038 = vmatpush1.msra.mxu0 %v930
  %1039 = vmatprep.subr.mxu0 %v935
  %1040 = vmatpush1.msra.mxu0 %v934
  %1041 = vmatprep.subr.mxu0 %v939
  %1042 = vmatpush1.msra.mxu0 %v938
  %1043 = vmatprep.subr.mxu0 0.0
  %1044 = vmatpush1.msra.mxu0 0.0
  %1045 = vmatprep.subr.mxu0 0.0
  %1046 = vmatpush1.msra.mxu0 0.0
  %1047 = vmatprep.subr.mxu0 0.0
  %1048 = vmatpush1.msra.mxu0 0.0
  %1049 = vmatprep.subr.mxu0 0.0
  %1050 = vmatpush1.msra.mxu0 0.0
  %1051 = vmatprep.subr.mxu0 0.0
  %1052 = vmatpush1.msra.mxu0 0.0
  %1053 = vmatprep.subr.mxu0 0.0
  %1054 = vmatpush1.msra.mxu0 0.0
  %1055 = vmatprep.subr.mxu0 0.0
  %1056 = vmatpush1.msra.mxu0 0.0
  %1057 = vmatprep.subr.mxu0 0.0
  %1058 = vmatpush1.msra.mxu0 0.0
  %1059 = vmatprep.subr.mxu0 0.0
  %1060 = vmatpush1.msra.mxu0 0.0
  %1061 = vmatprep.subr.mxu0 0.0
  %1062 = vmatpush1.msra.mxu0 0.0
  %1063 = vmatprep.subr.mxu0 0.0
  %1064 = vmatpush1.msra.mxu0 0.0
  %1065 = vmatprep.subr.mxu0 0.0
  %1066 = vmatpush1.msra.mxu0 0.0
  %1067 = vmatprep.subr.mxu0 0.0
  %1068 = vmatpush1.msra.mxu0 0.0
  %1069 = vmatprep.subr.mxu0 0.0
  %1070 = vmatpush1.msra.mxu0 0.0
  %1071 = vmatprep.subr.mxu0 0.0
  %1072 = vmatpush1.msra.mxu0 0.0
  %1073 = vmatprep.subr.mxu0 0.0
  %1074 = vmatpush1.msra.mxu0 0.0
  %1075 = vmatprep.mubr.f32.mxu0 0.0
  %1076 = vmatmul.mubr.f32.gmra.mrb[0].mxu0 %v866
  %v1077 = vpop.f32.mrb[0].mxu0
  %v1078 = vadd.f32 0.0, %v1077
  %v1079 = vpop.f32.mrb[0].mxu0
  %v1080 = vadd.f32 0.0, %v1079
  %1081 = vdwg.mxu0
  %v1082 = vadd.f32 %v872, %v1007
  %v1083 = vadd.f32 %v873, %v1009
  %v1084 = vadd.f32 %v874, %v1078
  %v1085 = vadd.f32 %v875, %v1080
  %v1086 = vxor.u32 %v1082, 2147483648
  %v1087 = vmul.f32 %v1086, 1.442695
  %v1088 = vpow.pop %v1087
  %v1089 = vadd.f32 %v1088, 1.0
  %v1090 = vrcp.pop %v1089
  %v1091 = vmul.f32 1.0, %v1090
  %v1092 = vxor.u32 %v1083, 2147483648
  %v1093 = vmul.f32 %v1092, 1.442695
  %v1094 = vpow.pop %v1093
  %v1095 = vadd.f32 %v1094, 1.0
  %v1096 = vrcp.pop %v1095
  %v1097 = vmul.f32 1.0, %v1096
  %v1098 = vtanh.pop %v1084
  %v1099 = vxor.u32 %v1085, 2147483648
  %v1100 = vmul.f32 %v1099, 1.442695
  %v1101 = vpow.pop %v1100
  %v1102 = vadd.f32 %v1101, 1.0
  %v1103 = vrcp.pop %v1102
  %v1104 = vmul.f32 1.0, %v1103
  %v1105 = vmul.f32 %v1097, %v864
  %v1106 = vmul.f32 %v1091, %v1098
  %v1107 = vadd.f32 %v1105, %v1106
  %v1108 = vtanh.pop %v1107
  %v1109 = vmul.f32 %v1104, %v1108
  %s1110 = scalar_lea.vmem [#allocation2], 16
  %1111 = vst [vmem:[%s1110] sm:$0xff] %v1109
  %s1112 = smul.u32 3, 4
  %s1113 = smul.addr %s1112, 8
  %s1114 = scalar_lea.vmem [#allocation3], %s1113
  %v1115 = vld [vmem:[%s1114] sm:$0xff]
  %v1116 = vld [vmem:[%s1114 + $0x8] sm:$0xff]
  %v1117 = vld [vmem:[%s1114 + $0x10] sm:$0xff]
  %v1118 = vld [vmem:[%s1114 + $0x18] sm:$0xff]
  %v1119 = vld [vmem:[%s2] sm:$0xff]
  %v1120 = vld [vmem:[%s2 + $0x8] sm:$0xff]
  %v1121 = vld [vmem:[%s2 + $0x10] sm:$0xff]
  %v1122 = vld [vmem:[%s2 + $0x18] sm:$0xff]
  %v1123 = vld [vmem:[%s2 + $0x20] sm:$0xff]
  %v1124 = vld [vmem:[%s2 + $0x28] sm:$0xff]
  %v1125 = vld [vmem:[%s2 + $0x30] sm:$0xff]
  %v1126 = vld [vmem:[%s2 + $0x38] sm:$0xff]
  %v1127 = vld [vmem:[%s2 + $0x40] sm:$0xff]
  %v1128 = vld [vmem:[%s2 + $0x48] sm:$0xff]
  %v1129 = vld [vmem:[%s2 + $0x50] sm:$0xff]
  %v1130 = vld [vmem:[%s2 + $0x58] sm:$0xff]
  %v1131 = vld [vmem:[%s2 + $0x60] sm:$0xff]
  %v1132 = vld [vmem:[%s2 + $0x68] sm:$0xff]
  %v1133 = vld [vmem:[%s2 + $0x70] sm:$0xff]
  %v1134 = vld [vmem:[%s2 + $0x78] sm:$0xff]
  %v1135 = vld [vmem:[%s2 + $0x80] sm:$0xff]
  %v1136 = vld [vmem:[%s2 + $0x88] sm:$0xff]
  %v1137 = vld [vmem:[%s2 + $0x90] sm:$0xff]
  %v1138 = vld [vmem:[%s2 + $0x98] sm:$0xff]
  %v1139 = vld [vmem:[%s2 + $0xa0] sm:$0xff]
  %v1140 = vld [vmem:[%s2 + $0xa8] sm:$0xff]
  %v1141 = vld [vmem:[%s2 + $0xb0] sm:$0xff]
  %v1142 = vld [vmem:[%s2 + $0xb8] sm:$0xff]
  %v1143 = vld [vmem:[%s2 + $0xc0] sm:$0xff]
  %v1144 = vld [vmem:[%s2 + $0xc8] sm:$0xff]
  %v1145 = vld [vmem:[%s2 + $0xd0] sm:$0xff]
  %v1146 = vld [vmem:[%s2 + $0xd8] sm:$0xff]
  %v1147 = vld [vmem:[%s2 + $0xe0] sm:$0xff]
  %v1148 = vld [vmem:[%s2 + $0xe8] sm:$0xff]
  %v1149 = vld [vmem:[%s2 + $0xf0] sm:$0xff]
  %v1150 = vld [vmem:[%s2 + $0xf8] sm:$0xff]
  %v1151 = vld [vmem:[%s2 + $0x100] sm:$0xff]
  %v1152 = vld [vmem:[%s2 + $0x108] sm:$0xff]
  %v1153 = vld [vmem:[%s2 + $0x110] sm:$0xff]
  %v1154 = vld [vmem:[%s2 + $0x118] sm:$0xff]
  %v1155 = vld [vmem:[%s2 + $0x120] sm:$0xff]
  %v1156 = vld [vmem:[%s2 + $0x128] sm:$0xff]
  %v1157 = vld [vmem:[%s2 + $0x130] sm:$0xff]
  %v1158 = vld [vmem:[%s2 + $0x138] sm:$0xff]
  %v1159 = vld [vmem:[%s2 + $0x140] sm:$0xff]
  %v1160 = vld [vmem:[%s2 + $0x148] sm:$0xff]
  %v1161 = vld [vmem:[%s2 + $0x150] sm:$0xff]
  %v1162 = vld [vmem:[%s2 + $0x158] sm:$0xff]
  %v1163 = vld [vmem:[%s2 + $0x160] sm:$0xff]
  %v1164 = vld [vmem:[%s2 + $0x168] sm:$0xff]
  %v1165 = vld [vmem:[%s2 + $0x170] sm:$0xff]
  %v1166 = vld [vmem:[%s2 + $0x178] sm:$0xff]
  %v1167 = vld [vmem:[%s2 + $0x180] sm:$0xff]
  %v1168 = vld [vmem:[%s2 + $0x188] sm:$0xff]
  %v1169 = vld [vmem:[%s2 + $0x190] sm:$0xff]
  %v1170 = vld [vmem:[%s2 + $0x198] sm:$0xff]
  %v1171 = vld [vmem:[%s2 + $0x1a0] sm:$0xff]
  %v1172 = vld [vmem:[%s2 + $0x1a8] sm:$0xff]
  %v1173 = vld [vmem:[%s2 + $0x1b0] sm:$0xff]
  %v1174 = vld [vmem:[%s2 + $0x1b8] sm:$0xff]
  %v1175 = vld [vmem:[%s2 + $0x1c0] sm:$0xff]
  %v1176 = vld [vmem:[%s2 + $0x1c8] sm:$0xff]
  %v1177 = vld [vmem:[%s2 + $0x1d0] sm:$0xff]
  %v1178 = vld [vmem:[%s2 + $0x1d8] sm:$0xff]
  %v1179 = vld [vmem:[%s2 + $0x1e0] sm:$0xff]
  %v1180 = vld [vmem:[%s2 + $0x1e8] sm:$0xff]
  %v1181 = vld [vmem:[%s2 + $0x1f0] sm:$0xff]
  %v1182 = vld [vmem:[%s2 + $0x1f8] sm:$0xff]
  %1183 = vmatprep.subr.mxu0 %v1120
  %1184 = vmatpush1.msra.mxu0 %v1119
  %1185 = vmatprep.subr.mxu0 %v1124
  %1186 = vmatpush1.msra.mxu0 %v1123
  %1187 = vmatprep.subr.mxu0 %v1128
  %1188 = vmatpush1.msra.mxu0 %v1127
  %1189 = vmatprep.subr.mxu0 %v1132
  %1190 = vmatpush1.msra.mxu0 %v1131
  %1191 = vmatprep.subr.mxu0 %v1136
  %1192 = vmatpush1.msra.mxu0 %v1135
  %1193 = vmatprep.subr.mxu0 %v1140
  %1194 = vmatpush1.msra.mxu0 %v1139
  %1195 = vmatprep.subr.mxu0 %v1144
  %1196 = vmatpush1.msra.mxu0 %v1143
  %1197 = vmatprep.subr.mxu0 %v1148
  %1198 = vmatpush1.msra.mxu0 %v1147
  %1199 = vmatprep.subr.mxu0 %v1152
  %1200 = vmatpush1.msra.mxu0 %v1151
  %1201 = vmatprep.subr.mxu0 %v1156
  %1202 = vmatpush1.msra.mxu0 %v1155
  %1203 = vmatprep.subr.mxu0 %v1160
  %1204 = vmatpush1.msra.mxu0 %v1159
  %1205 = vmatprep.subr.mxu0 %v1164
  %1206 = vmatpush1.msra.mxu0 %v1163
  %1207 = vmatprep.subr.mxu0 %v1168
  %1208 = vmatpush1.msra.mxu0 %v1167
  %1209 = vmatprep.subr.mxu0 %v1172
  %1210 = vmatpush1.msra.mxu0 %v1171
  %1211 = vmatprep.subr.mxu0 %v1176
  %1212 = vmatpush1.msra.mxu0 %v1175
  %1213 = vmatprep.subr.mxu0 %v1180
  %1214 = vmatpush1.msra.mxu0 %v1179
  %1215 = vmatprep.subr.mxu0 0.0
  %1216 = vmatpush1.msra.mxu0 0.0
  %1217 = vmatprep.subr.mxu0 0.0
  %1218 = vmatpush1.msra.mxu0 0.0
  %1219 = vmatprep.subr.mxu0 0.0
  %1220 = vmatpush1.msra.mxu0 0.0
  %1221 = vmatprep.subr.mxu0 0.0
  %1222 = vmatpush1.msra.mxu0 0.0
  %1223 = vmatprep.subr.mxu0 0.0
  %1224 = vmatpush1.msra.mxu0 0.0
  %1225 = vmatprep.subr.mxu0 0.0
  %1226 = vmatpush1.msra.mxu0 0.0
  %1227 = vmatprep.subr.mxu0 0.0
  %1228 = vmatpush1.msra.mxu0 0.0
  %1229 = vmatprep.subr.mxu0 0.0
  %1230 = vmatpush1.msra.mxu0 0.0
  %1231 = vmatprep.subr.mxu0 0.0
  %1232 = vmatpush1.msra.mxu0 0.0
  %1233 = vmatprep.subr.mxu0 0.0
  %1234 = vmatpush1.msra.mxu0 0.0
  %1235 = vmatprep.subr.mxu0 0.0
  %1236 = vmatpush1.msra.mxu0 0.0
  %1237 = vmatprep.subr.mxu0 0.0
  %1238 = vmatpush1.msra.mxu0 0.0
  %1239 = vmatprep.subr.mxu0 0.0
  %1240 = vmatpush1.msra.mxu0 0.0
  %1241 = vmatprep.subr.mxu0 0.0
  %1242 = vmatpush1.msra.mxu0 0.0
  %1243 = vmatprep.subr.mxu0 0.0
  %1244 = vmatpush1.msra.mxu0 0.0
  %1245 = vmatprep.subr.mxu0 0.0
  %1246 = vmatpush1.msra.mxu0 0.0
  %1247 = vmatprep.mubr.f32.mxu0 0.0
  %1248 = vmatmul.mubr.f32.gmra.mrb[0].mxu0 %v1109
  %v1249 = vpop.f32.mrb[0].mxu0
  %v1250 = vadd.f32 0.0, %v1249
  %v1251 = vpop.f32.mrb[0].mxu0
  %v1252 = vadd.f32 0.0, %v1251
  %1253 = vdwg.mxu0
  %1254 = vmatprep.subr.mxu0 %v1122
  %1255 = vmatpush1.msra.mxu0 %v1121
  %1256 = vmatprep.subr.mxu0 %v1126
  %1257 = vmatpush1.msra.mxu0 %v1125
  %1258 = vmatprep.subr.mxu0 %v1130
  %1259 = vmatpush1.msra.mxu0 %v1129
  %1260 = vmatprep.subr.mxu0 %v1134
  %1261 = vmatpush1.msra.mxu0 %v1133
  %1262 = vmatprep.subr.mxu0 %v1138
  %1263 = vmatpush1.msra.mxu0 %v1137
  %1264 = vmatprep.subr.mxu0 %v1142
  %1265 = vmatpush1.msra.mxu0 %v1141
  %1266 = vmatprep.subr.mxu0 %v1146
  %1267 = vmatpush1.msra.mxu0 %v1145
  %1268 = vmatprep.subr.mxu0 %v1150
  %1269 = vmatpush1.msra.mxu0 %v1149
  %1270 = vmatprep.subr.mxu0 %v1154
  %1271 = vmatpush1.msra.mxu0 %v1153
  %1272 = vmatprep.subr.mxu0 %v1158
  %1273 = vmatpush1.msra.mxu0 %v1157
  %1274 = vmatprep.subr.mxu0 %v1162
  %1275 = vmatpush1.msra.mxu0 %v1161
  %1276 = vmatprep.subr.mxu0 %v1166
  %1277 = vmatpush1.msra.mxu0 %v1165
  %1278 = vmatprep.subr.mxu0 %v1170
  %1279 = vmatpush1.msra.mxu0 %v1169
  %1280 = vmatprep.subr.mxu0 %v1174
  %1281 = vmatpush1.msra.mxu0 %v1173
  %1282 = vmatprep.subr.mxu0 %v1178
  %1283 = vmatpush1.msra.mxu0 %v1177
  %1284 = vmatprep.subr.mxu0 %v1182
  %1285 = vmatpush1.msra.mxu0 %v1181
  %1286 = vmatprep.subr.mxu0 0.0
  %1287 = vmatpush1.msra.mxu0 0.0
  %1288 = vmatprep.subr.mxu0 0.0
  %1289 = vmatpush1.msra.mxu0 0.0
  %1290 = vmatprep.subr.mxu0 0.0
  %1291 = vmatpush1.msra.mxu0 0.0
  %1292 = vmatprep.subr.mxu0 0.0
  %1293 = vmatpush1.msra.mxu0 0.0
  %1294 = vmatprep.subr.mxu0 0.0
  %1295 = vmatpush1.msra.mxu0 0.0
  %1296 = vmatprep.subr.mxu0 0.0
  %1297 = vmatpush1.msra.mxu0 0.0
  %1298 = vmatprep.subr.mxu0 0.0
  %1299 = vmatpush1.msra.mxu0 0.0
  %1300 = vmatprep.subr.mxu0 0.0
  %1301 = vmatpush1.msra.mxu0 0.0
  %1302 = vmatprep.subr.mxu0 0.0
  %1303 = vmatpush1.msra.mxu0 0.0
  %1304 = vmatprep.subr.mxu0 0.0
  %1305 = vmatpush1.msra.mxu0 0.0
  %1306 = vmatprep.subr.mxu0 0.0
  %1307 = vmatpush1.msra.mxu0 0.0
  %1308 = vmatprep.subr.mxu0 0.0
  %1309 = vmatpush1.msra.mxu0 0.0
  %1310 = vmatprep.subr.mxu0 0.0
  %1311 = vmatpush1.msra.mxu0 0.0
  %1312 = vmatprep.subr.mxu0 0.0
  %1313 = vmatpush1.msra.mxu0 0.0
  %1314 = vmatprep.subr.mxu0 0.0
  %1315 = vmatpush1.msra.mxu0 0.0
  %1316 = vmatprep.subr.mxu0 0.0
  %1317 = vmatpush1.msra.mxu0 0.0
  %1318 = vmatprep.mubr.f32.mxu0 0.0
  %1319 = vmatmul.mubr.f32.gmra.mrb[0].mxu0 %v1109
  %v1320 = vpop.f32.mrb[0].mxu0
  %v1321 = vadd.f32 0.0, %v1320
  %v1322 = vpop.f32.mrb[0].mxu0
  %v1323 = vadd.f32 0.0, %v1322
  %1324 = vdwg.mxu0
  %v1325 = vadd.f32 %v1115, %v1250
  %v1326 = vadd.f32 %v1116, %v1252
  %v1327 = vadd.f32 %v1117, %v1321
  %v1328 = vadd.f32 %v1118, %v1323
  %v1329 = vxor.u32 %v1325, 2147483648
  %v1330 = vmul.f32 %v1329, 1.442695
  %v1331 = vpow.pop %v1330
  %v1332 = vadd.f32 %v1331, 1.0
  %v1333 = vrcp.pop %v1332
  %v1334 = vmul.f32 1.0, %v1333
  %v1335 = vxor.u32 %v1326, 2147483648
  %v1336 = vmul.f32 %v1335, 1.442695
  %v1337 = vpow.pop %v1336
  %v1338 = vadd.f32 %v1337, 1.0
  %v1339 = vrcp.pop %v1338
  %v1340 = vmul.f32 1.0, %v1339
  %v1341 = vtanh.pop %v1327
  %v1342 = vxor.u32 %v1328, 2147483648
  %v1343 = vmul.f32 %v1342, 1.442695
  %v1344 = vpow.pop %v1343
  %v1345 = vadd.f32 %v1344, 1.0
  %v1346 = vrcp.pop %v1345
  %v1347 = vmul.f32 1.0, %v1346
  %v1348 = vmul.f32 %v1340, %v1107
  %v1349 = vmul.f32 %v1334, %v1341
  %v1350 = vadd.f32 %v1348, %v1349
  %v1351 = vtanh.pop %v1350
  %v1352 = vmul.f32 %v1347, %v1351
  %s1353 = scalar_lea.vmem [#allocation2], 24
  %1354 = vst [vmem:[%s1353] sm:$0xff] %v1352
  %s1355 = smul.u32 4, 4
  %s1356 = smul.addr %s1355, 8
  %s1357 = scalar_lea.vmem [#allocation3], %s1356
  %v1358 = vld [vmem:[%s1357] sm:$0xff]
  %v1359 = vld [vmem:[%s1357 + $0x8] sm:$0xff]
  %v1360 = vld [vmem:[%s1357 + $0x10] sm:$0xff]
  %v1361 = vld [vmem:[%s1357 + $0x18] sm:$0xff]
  %v1362 = vld [vmem:[%s2] sm:$0xff]
  %v1363 = vld [vmem:[%s2 + $0x8] sm:$0xff]
  %v1364 = vld [vmem:[%s2 + $0x10] sm:$0xff]
  %v1365 = vld [vmem:[%s2 + $0x18] sm:$0xff]
  %v1366 = vld [vmem:[%s2 + $0x20] sm:$0xff]
  %v1367 = vld [vmem:[%s2 + $0x28] sm:$0xff]
  %v1368 = vld [vmem:[%s2 + $0x30] sm:$0xff]
  %v1369 = vld [vmem:[%s2 + $0x38] sm:$0xff]
  %v1370 = vld [vmem:[%s2 + $0x40] sm:$0xff]
  %v1371 = vld [vmem:[%s2 + $0x48] sm:$0xff]
  %v1372 = vld [vmem:[%s2 + $0x50] sm:$0xff]
  %v1373 = vld [vmem:[%s2 + $0x58] sm:$0xff]
  %v1374 = vld [vmem:[%s2 + $0x60] sm:$0xff]
  %v1375 = vld [vmem:[%s2 + $0x68] sm:$0xff]
  %v1376 = vld [vmem:[%s2 + $0x70] sm:$0xff]
  %v1377 = vld [vmem:[%s2 + $0x78] sm:$0xff]
  %v1378 = vld [vmem:[%s2 + $0x80] sm:$0xff]
  %v1379 = vld [vmem:[%s2 + $0x88] sm:$0xff]
  %v1380 = vld [vmem:[%s2 + $0x90] sm:$0xff]
  %v1381 = vld [vmem:[%s2 + $0x98] sm:$0xff]
  %v1382 = vld [vmem:[%s2 + $0xa0] sm:$0xff]
  %v1383 = vld [vmem:[%s2 + $0xa8] sm:$0xff]
  %v1384 = vld [vmem:[%s2 + $0xb0] sm:$0xff]
  %v1385 = vld [vmem:[%s2 + $0xb8] sm:$0xff]
  %v1386 = vld [vmem:[%s2 + $0xc0] sm:$0xff]
  %v1387 = vld [vmem:[%s2 + $0xc8] sm:$0xff]
  %v1388 = vld [vmem:[%s2 + $0xd0] sm:$0xff]
  %v1389 = vld [vmem:[%s2 + $0xd8] sm:$0xff]
  %v1390 = vld [vmem:[%s2 + $0xe0] sm:$0xff]
  %v1391 = vld [vmem:[%s2 + $0xe8] sm:$0xff]
  %v1392 = vld [vmem:[%s2 + $0xf0] sm:$0xff]
  %v1393 = vld [vmem:[%s2 + $0xf8] sm:$0xff]
  %v1394 = vld [vmem:[%s2 + $0x100] sm:$0xff]
  %v1395 = vld [vmem:[%s2 + $0x108] sm:$0xff]
  %v1396 = vld [vmem:[%s2 + $0x110] sm:$0xff]
  %v1397 = vld [vmem:[%s2 + $0x118] sm:$0xff]
  %v1398 = vld [vmem:[%s2 + $0x120] sm:$0xff]
  %v1399 = vld [vmem:[%s2 + $0x128] sm:$0xff]
  %v1400 = vld [vmem:[%s2 + $0x130] sm:$0xff]
  %v1401 = vld [vmem:[%s2 + $0x138] sm:$0xff]
  %v1402 = vld [vmem:[%s2 + $0x140] sm:$0xff]
  %v1403 = vld [vmem:[%s2 + $0x148] sm:$0xff]
  %v1404 = vld [vmem:[%s2 + $0x150] sm:$0xff]
  %v1405 = vld [vmem:[%s2 + $0x158] sm:$0xff]
  %v1406 = vld [vmem:[%s2 + $0x160] sm:$0xff]
  %v1407 = vld [vmem:[%s2 + $0x168] sm:$0xff]
  %v1408 = vld [vmem:[%s2 + $0x170] sm:$0xff]
  %v1409 = vld [vmem:[%s2 + $0x178] sm:$0xff]
  %v1410 = vld [vmem:[%s2 + $0x180] sm:$0xff]
  %v1411 = vld [vmem:[%s2 + $0x188] sm:$0xff]
  %v1412 = vld [vmem:[%s2 + $0x190] sm:$0xff]
  %v1413 = vld [vmem:[%s2 + $0x198] sm:$0xff]
  %v1414 = vld [vmem:[%s2 + $0x1a0] sm:$0xff]
  %v1415 = vld [vmem:[%s2 + $0x1a8] sm:$0xff]
  %v1416 = vld [vmem:[%s2 + $0x1b0] sm:$0xff]
  %v1417 = vld [vmem:[%s2 + $0x1b8] sm:$0xff]
  %v1418 = vld [vmem:[%s2 + $0x1c0] sm:$0xff]
  %v1419 = vld [vmem:[%s2 + $0x1c8] sm:$0xff]
  %v1420 = vld [vmem:[%s2 + $0x1d0] sm:$0xff]
  %v1421 = vld [vmem:[%s2 + $0x1d8] sm:$0xff]
  %v1422 = vld [vmem:[%s2 + $0x1e0] sm:$0xff]
  %v1423 = vld [vmem:[%s2 + $0x1e8] sm:$0xff]
  %v1424 = vld [vmem:[%s2 + $0x1f0] sm:$0xff]
  %v1425 = vld [vmem:[%s2 + $0x1f8] sm:$0xff]
  %1426 = vmatprep.subr.mxu0 %v1363
  %1427 = vmatpush1.msra.mxu0 %v1362
  %1428 = vmatprep.subr.mxu0 %v1367
  %1429 = vmatpush1.msra.mxu0 %v1366
  %1430 = vmatprep.subr.mxu0 %v1371
  %1431 = vmatpush1.msra.mxu0 %v1370
  %1432 = vmatprep.subr.mxu0 %v1375
  %1433 = vmatpush1.msra.mxu0 %v1374
  %1434 = vmatprep.subr.mxu0 %v1379
  %1435 = vmatpush1.msra.mxu0 %v1378
  %1436 = vmatprep.subr.mxu0 %v1383
  %1437 = vmatpush1.msra.mxu0 %v1382
  %1438 = vmatprep.subr.mxu0 %v1387
  %1439 = vmatpush1.msra.mxu0 %v1386
  %1440 = vmatprep.subr.mxu0 %v1391
  %1441 = vmatpush1.msra.mxu0 %v1390
  %1442 = vmatprep.subr.mxu0 %v1395
  %1443 = vmatpush1.msra.mxu0 %v1394
  %1444 = vmatprep.subr.mxu0 %v1399
  %1445 = vmatpush1.msra.mxu0 %v1398
  %1446 = vmatprep.subr.mxu0 %v1403
  %1447 = vmatpush1.msra.mxu0 %v1402
  %1448 = vmatprep.subr.mxu0 %v1407
  %1449 = vmatpush1.msra.mxu0 %v1406
  %1450 = vmatprep.subr.mxu0 %v1411
  %1451 = vmatpush1.msra.mxu0 %v1410
  %1452 = vmatprep.subr.mxu0 %v1415
  %1453 = vmatpush1.msra.mxu0 %v1414
  %1454 = vmatprep.subr.mxu0 %v1419
  %1455 = vmatpush1.msra.mxu0 %v1418
  %1456 = vmatprep.subr.mxu0 %v1423
  %1457 = vmatpush1.msra.mxu0 %v1422
  %1458 = vmatprep.subr.mxu0 0.0
  %1459 = vmatpush1.msra.mxu0 0.0
  %1460 = vmatprep.subr.mxu0 0.0
  %1461 = vmatpush1.msra.mxu0 0.0
  %1462 = vmatprep.subr.mxu0 0.0
  %1463 = vmatpush1.msra.mxu0 0.0
  %1464 = vmatprep.subr.mxu0 0.0
  %1465 = vmatpush1.msra.mxu0 0.0
  %1466 = vmatprep.subr.mxu0 0.0
  %1467 = vmatpush1.msra.mxu0 0.0
  %1468 = vmatprep.subr.mxu0 0.0
  %1469 = vmatpush1.msra.mxu0 0.0
  %1470 = vmatprep.subr.mxu0 0.0
  %1471 = vmatpush1.msra.mxu0 0.0
  %1472 = vmatprep.subr.mxu0 0.0
  %1473 = vmatpush1.msra.mxu0 0.0
  %1474 = vmatprep.subr.mxu0 0.0
  %1475 = vmatpush1.msra.mxu0 0.0
  %1476 = vmatprep.subr.mxu0 0.0
  %1477 = vmatpush1.msra.mxu0 0.0
  %1478 = vmatprep.subr.mxu0 0.0
  %1479 = vmatpush1.msra.mxu0 0.0
  %1480 = vmatprep.subr.mxu0 0.0
  %1481 = vmatpush1.msra.mxu0 0.0
  %1482 = vmatprep.subr.mxu0 0.0
  %1483 = vmatpush1.msra.mxu0 0.0
  %1484 = vmatprep.subr.mxu0 0.0
  %1485 = vmatpush1.msra.mxu0 0.0
  %1486 = vmatprep.subr.mxu0 0.0
  %1487 = vmatpush1.msra.mxu0 0.0
  %1488 = vmatprep.subr.mxu0 0.0
  %1489 = vmatpush1.msra.mxu0 0.0
  %1490 = vmatprep.mubr.f32.mxu0 0.0
  %1491 = vmatmul.mubr.f32.gmra.mrb[0].mxu0 %v1352
  %v1492 = vpop.f32.mrb[0].mxu0
  %v1493 = vadd.f32 0.0, %v1492
  %v1494 = vpop.f32.mrb[0].mxu0
  %v1495 = vadd.f32 0.0, %v1494
  %1496 = vdwg.mxu0
  %1497 = vmatprep.subr.mxu0 %v1365
  %1498 = vmatpush1.msra.mxu0 %v1364
  %1499 = vmatprep.subr.mxu0 %v1369
  %1500 = vmatpush1.msra.mxu0 %v1368
  %1501 = vmatprep.subr.mxu0 %v1373
  %1502 = vmatpush1.msra.mxu0 %v1372
  %1503 = vmatprep.subr.mxu0 %v1377
  %1504 = vmatpush1.msra.mxu0 %v1376
  %1505 = vmatprep.subr.mxu0 %v1381
  %1506 = vmatpush1.msra.mxu0 %v1380
  %1507 = vmatprep.subr.mxu0 %v1385
  %1508 = vmatpush1.msra.mxu0 %v1384
  %1509 = vmatprep.subr.mxu0 %v1389
  %1510 = vmatpush1.msra.mxu0 %v1388
  %1511 = vmatprep.subr.mxu0 %v1393
  %1512 = vmatpush1.msra.mxu0 %v1392
  %1513 = vmatprep.subr.mxu0 %v1397
  %1514 = vmatpush1.msra.mxu0 %v1396
  %1515 = vmatprep.subr.mxu0 %v1401
  %1516 = vmatpush1.msra.mxu0 %v1400
  %1517 = vmatprep.subr.mxu0 %v1405
  %1518 = vmatpush1.msra.mxu0 %v1404
  %1519 = vmatprep.subr.mxu0 %v1409
  %1520 = vmatpush1.msra.mxu0 %v1408
  %1521 = vmatprep.subr.mxu0 %v1413
  %1522 = vmatpush1.msra.mxu0 %v1412
  %1523 = vmatprep.subr.mxu0 %v1417
  %1524 = vmatpush1.msra.mxu0 %v1416
  %1525 = vmatprep.subr.mxu0 %v1421
  %1526 = vmatpush1.msra.mxu0 %v1420
  %1527 = vmatprep.subr.mxu0 %v1425
  %1528 = vmatpush1.msra.mxu0 %v1424
  %1529 = vmatprep.subr.mxu0 0.0
  %1530 = vmatpush1.msra.mxu0 0.0
  %1531 = vmatprep.subr.mxu0 0.0
  %1532 = vmatpush1.msra.mxu0 0.0
  %1533 = vmatprep.subr.mxu0 0.0
  %1534 = vmatpush1.msra.mxu0 0.0
  %1535 = vmatprep.subr.mxu0 0.0
  %1536 = vmatpush1.msra.mxu0 0.0
  %1537 = vmatprep.subr.mxu0 0.0
  %1538 = vmatpush1.msra.mxu0 0.0
  %1539 = vmatprep.subr.mxu0 0.0
  %1540 = vmatpush1.msra.mxu0 0.0
  %1541 = vmatprep.subr.mxu0 0.0
  %1542 = vmatpush1.msra.mxu0 0.0
  %1543 = vmatprep.subr.mxu0 0.0
  %1544 = vmatpush1.msra.mxu0 0.0
  %1545 = vmatprep.subr.mxu0 0.0
  %1546 = vmatpush1.msra.mxu0 0.0
  %1547 = vmatprep.subr.mxu0 0.0
  %1548 = vmatpush1.msra.mxu0 0.0
  %1549 = vmatprep.subr.mxu0 0.0
  %1550 = vmatpush1.msra.mxu0 0.0
  %1551 = vmatprep.subr.mxu0 0.0
  %1552 = vmatpush1.msra.mxu0 0.0
  %1553 = vmatprep.subr.mxu0 0.0
  %1554 = vmatpush1.msra.mxu0 0.0
  %1555 = vmatprep.subr.mxu0 0.0
  %1556 = vmatpush1.msra.mxu0 0.0
  %1557 = vmatprep.subr.mxu0 0.0
  %1558 = vmatpush1.msra.mxu0 0.0
  %1559 = vmatprep.subr.mxu0 0.0
  %1560 = vmatpush1.msra.mxu0 0.0
  %1561 = vmatprep.mubr.f32.mxu0 0.0
  %1562 = vmatmul.mubr.f32.gmra.mrb[0].mxu0 %v1352
  %v1563 = vpop.f32.mrb[0].mxu0
  %v1564 = vadd.f32 0.0, %v1563
  %v1565 = vpop.f32.mrb[0].mxu0
  %v1566 = vadd.f32 0.0, %v1565
  %1567 = vdwg.mxu0
  %v1568 = vadd.f32 %v1358, %v1493
  %v1569 = vadd.f32 %v1359, %v1495
  %v1570 = vadd.f32 %v1360, %v1564
  %v1571 = vadd.f32 %v1361, %v1566
  %v1572 = vxor.u32 %v1568, 2147483648
  %v1573 = vmul.f32 %v1572, 1.442695
  %v1574 = vpow.pop %v1573
  %v1575 = vadd.f32 %v1574, 1.0
  %v1576 = vrcp.pop %v1575
  %v1577 = vmul.f32 1.0, %v1576
  %v1578 = vxor.u32 %v1569, 2147483648
  %v1579 = vmul.f32 %v1578, 1.442695
  %v1580 = vpow.pop %v1579
  %v1581 = vadd.f32 %v1580, 1.0
  %v1582 = vrcp.pop %v1581
  %v1583 = vmul.f32 1.0, %v1582
  %v1584 = vtanh.pop %v1570
  %v1585 = vxor.u32 %v1571, 2147483648
  %v1586 = vmul.f32 %v1585, 1.442695
  %v1587 = vpow.pop %v1586
  %v1588 = vadd.f32 %v1587, 1.0
  %v1589 = vrcp.pop %v1588
  %v1590 = vmul.f32 1.0, %v1589
  %v1591 = vmul.f32 %v1583, %v1350
  %v1592 = vmul.f32 %v1577, %v1584
  %v1593 = vadd.f32 %v1591, %v1592
  %v1594 = vtanh.pop %v1593
  %v1595 = vmul.f32 %v1590, %v1594
  %s1596 = scalar_lea.vmem [#allocation2], 32
  %1597 = vst [vmem:[%s1596] sm:$0xff] %v1595
  %s1598 = smul.u32 5, 4
  %s1599 = smul.addr %s1598, 8
  %s1600 = scalar_lea.vmem [#allocation3], %s1599
  %v1601 = vld [vmem:[%s1600] sm:$0xff]
  %v1602 = vld [vmem:[%s1600 + $0x8] sm:$0xff]
  %v1603 = vld [vmem:[%s1600 + $0x10] sm:$0xff]
  %v1604 = vld [vmem:[%s1600 + $0x18] sm:$0xff]
  %v1605 = vld [vmem:[%s2] sm:$0xff]
  %v1606 = vld [vmem:[%s2 + $0x8] sm:$0xff]
  %v1607 = vld [vmem:[%s2 + $0x10] sm:$0xff]
  %v1608 = vld [vmem:[%s2 + $0x18] sm:$0xff]
  %v1609 = vld [vmem:[%s2 + $0x20] sm:$0xff]
  %v1610 = vld [vmem:[%s2 + $0x28] sm:$0xff]
  %v1611 = vld [vmem:[%s2 + $0x30] sm:$0xff]
  %v1612 = vld [vmem:[%s2 + $0x38] sm:$0xff]
  %v1613 = vld [vmem:[%s2 + $0x40] sm:$0xff]
  %v1614 = vld [vmem:[%s2 + $0x48] sm:$0xff]
  %v1615 = vld [vmem:[%s2 + $0x50] sm:$0xff]
  %v1616 = vld [vmem:[%s2 + $0x58] sm:$0xff]
  %v1617 = vld [vmem:[%s2 + $0x60] sm:$0xff]
  %v1618 = vld [vmem:[%s2 + $0x68] sm:$0xff]
  %v1619 = vld [vmem:[%s2 + $0x70] sm:$0xff]
  %v1620 = vld [vmem:[%s2 + $0x78] sm:$0xff]
  %v1621 = vld [vmem:[%s2 + $0x80] sm:$0xff]
  %v1622 = vld [vmem:[%s2 + $0x88] sm:$0xff]
  %v1623 = vld [vmem:[%s2 + $0x90] sm:$0xff]
  %v1624 = vld [vmem:[%s2 + $0x98] sm:$0xff]
  %v1625 = vld [vmem:[%s2 + $0xa0] sm:$0xff]
  %v1626 = vld [vmem:[%s2 + $0xa8] sm:$0xff]
  %v1627 = vld [vmem:[%s2 + $0xb0] sm:$0xff]
  %v1628 = vld [vmem:[%s2 + $0xb8] sm:$0xff]
  %v1629 = vld [vmem:[%s2 + $0xc0] sm:$0xff]
  %v1630 = vld [vmem:[%s2 + $0xc8] sm:$0xff]
  %v1631 = vld [vmem:[%s2 + $0xd0] sm:$0xff]
  %v1632 = vld [vmem:[%s2 + $0xd8] sm:$0xff]
  %v1633 = vld [vmem:[%s2 + $0xe0] sm:$0xff]
  %v1634 = vld [vmem:[%s2 + $0xe8] sm:$0xff]
  %v1635 = vld [vmem:[%s2 + $0xf0] sm:$0xff]
  %v1636 = vld [vmem:[%s2 + $0xf8] sm:$0xff]
  %v1637 = vld [vmem:[%s2 + $0x100] sm:$0xff]
  %v1638 = vld [vmem:[%s2 + $0x108] sm:$0xff]
  %v1639 = vld [vmem:[%s2 + $0x110] sm:$0xff]
  %v1640 = vld [vmem:[%s2 + $0x118] sm:$0xff]
  %v1641 = vld [vmem:[%s2 + $0x120] sm:$0xff]
  %v1642 = vld [vmem:[%s2 + $0x128] sm:$0xff]
  %v1643 = vld [vmem:[%s2 + $0x130] sm:$0xff]
  %v1644 = vld [vmem:[%s2 + $0x138] sm:$0xff]
  %v1645 = vld [vmem:[%s2 + $0x140] sm:$0xff]
  %v1646 = vld [vmem:[%s2 + $0x148] sm:$0xff]
  %v1647 = vld [vmem:[%s2 + $0x150] sm:$0xff]
  %v1648 = vld [vmem:[%s2 + $0x158] sm:$0xff]
  %v1649 = vld [vmem:[%s2 + $0x160] sm:$0xff]
  %v1650 = vld [vmem:[%s2 + $0x168] sm:$0xff]
  %v1651 = vld [vmem:[%s2 + $0x170] sm:$0xff]
  %v1652 = vld [vmem:[%s2 + $0x178] sm:$0xff]
  %v1653 = vld [vmem:[%s2 + $0x180] sm:$0xff]
  %v1654 = vld [vmem:[%s2 + $0x188] sm:$0xff]
  %v1655 = vld [vmem:[%s2 + $0x190] sm:$0xff]
  %v1656 = vld [vmem:[%s2 + $0x198] sm:$0xff]
  %v1657 = vld [vmem:[%s2 + $0x1a0] sm:$0xff]
  %v1658 = vld [vmem:[%s2 + $0x1a8] sm:$0xff]
  %v1659 = vld [vmem:[%s2 + $0x1b0] sm:$0xff]
  %v1660 = vld [vmem:[%s2 + $0x1b8] sm:$0xff]
  %v1661 = vld [vmem:[%s2 + $0x1c0] sm:$0xff]
  %v1662 = vld [vmem:[%s2 + $0x1c8] sm:$0xff]
  %v1663 = vld [vmem:[%s2 + $0x1d0] sm:$0xff]
  %v1664 = vld [vmem:[%s2 + $0x1d8] sm:$0xff]
  %v1665 = vld [vmem:[%s2 + $0x1e0] sm:$0xff]
  %v1666 = vld [vmem:[%s2 + $0x1e8] sm:$0xff]
  %v1667 = vld [vmem:[%s2 + $0x1f0] sm:$0xff]
  %v1668 = vld [vmem:[%s2 + $0x1f8] sm:$0xff]
  %1669 = vmatprep.subr.mxu0 %v1606
  %1670 = vmatpush1.msra.mxu0 %v1605
  %1671 = vmatprep.subr.mxu0 %v1610
  %1672 = vmatpush1.msra.mxu0 %v1609
  %1673 = vmatprep.subr.mxu0 %v1614
  %1674 = vmatpush1.msra.mxu0 %v1613
  %1675 = vmatprep.subr.mxu0 %v1618
  %1676 = vmatpush1.msra.mxu0 %v1617
  %1677 = vmatprep.subr.mxu0 %v1622
  %1678 = vmatpush1.msra.mxu0 %v1621
  %1679 = vmatprep.subr.mxu0 %v1626
  %1680 = vmatpush1.msra.mxu0 %v1625
  %1681 = vmatprep.subr.mxu0 %v1630
  %1682 = vmatpush1.msra.mxu0 %v1629
  %1683 = vmatprep.subr.mxu0 %v1634
  %1684 = vmatpush1.msra.mxu0 %v1633
  %1685 = vmatprep.subr.mxu0 %v1638
  %1686 = vmatpush1.msra.mxu0 %v1637
  %1687 = vmatprep.subr.mxu0 %v1642
  %1688 = vmatpush1.msra.mxu0 %v1641
  %1689 = vmatprep.subr.mxu0 %v1646
  %1690 = vmatpush1.msra.mxu0 %v1645
  %1691 = vmatprep.subr.mxu0 %v1650
  %1692 = vmatpush1.msra.mxu0 %v1649
  %1693 = vmatprep.subr.mxu0 %v1654
  %1694 = vmatpush1.msra.mxu0 %v1653
  %1695 = vmatprep.subr.mxu0 %v1658
  %1696 = vmatpush1.msra.mxu0 %v1657
  %1697 = vmatprep.subr.mxu0 %v1662
  %1698 = vmatpush1.msra.mxu0 %v1661
  %1699 = vmatprep.subr.mxu0 %v1666
  %1700 = vmatpush1.msra.mxu0 %v1665
  %1701 = vmatprep.subr.mxu0 0.0
  %1702 = vmatpush1.msra.mxu0 0.0
  %1703 = vmatprep.subr.mxu0 0.0
  %1704 = vmatpush1.msra.mxu0 0.0
  %1705 = vmatprep.subr.mxu0 0.0
  %1706 = vmatpush1.msra.mxu0 0.0
  %1707 = vmatprep.subr.mxu0 0.0
  %1708 = vmatpush1.msra.mxu0 0.0
  %1709 = vmatprep.subr.mxu0 0.0
  %1710 = vmatpush1.msra.mxu0 0.0
  %1711 = vmatprep.subr.mxu0 0.0
  %1712 = vmatpush1.msra.mxu0 0.0
  %1713 = vmatprep.subr.mxu0 0.0
  %1714 = vmatpush1.msra.mxu0 0.0
  %1715 = vmatprep.subr.mxu0 0.0
  %1716 = vmatpush1.msra.mxu0 0.0
  %1717 = vmatprep.subr.mxu0 0.0
  %1718 = vmatpush1.msra.mxu0 0.0
  %1719 = vmatprep.subr.mxu0 0.0
  %1720 = vmatpush1.msra.mxu0 0.0
  %1721 = vmatprep.subr.mxu0 0.0
  %1722 = vmatpush1.msra.mxu0 0.0
  %1723 = vmatprep.subr.mxu0 0.0
  %1724 = vmatpush1.msra.mxu0 0.0
  %1725 = vmatprep.subr.mxu0 0.0
  %1726 = vmatpush1.msra.mxu0 0.0
  %1727 = vmatprep.subr.mxu0 0.0
  %1728 = vmatpush1.msra.mxu0 0.0
  %1729 = vmatprep.subr.mxu0 0.0
  %1730 = vmatpush1.msra.mxu0 0.0
  %1731 = vmatprep.subr.mxu0 0.0
  %1732 = vmatpush1.msra.mxu0 0.0
  %1733 = vmatprep.mubr.f32.mxu0 0.0
  %1734 = vmatmul.mubr.f32.gmra.mrb[0].mxu0 %v1595
  %v1735 = vpop.f32.mrb[0].mxu0
  %v1736 = vadd.f32 0.0, %v1735
  %v1737 = vpop.f32.mrb[0].mxu0
  %v1738 = vadd.f32 0.0, %v1737
  %1739 = vdwg.mxu0
  %1740 = vmatprep.subr.mxu0 %v1608
  %1741 = vmatpush1.msra.mxu0 %v1607
  %1742 = vmatprep.subr.mxu0 %v1612
  %1743 = vmatpush1.msra.mxu0 %v1611
  %1744 = vmatprep.subr.mxu0 %v1616
  %1745 = vmatpush1.msra.mxu0 %v1615
  %1746 = vmatprep.subr.mxu0 %v1620
  %1747 = vmatpush1.msra.mxu0 %v1619
  %1748 = vmatprep.subr.mxu0 %v1624
  %1749 = vmatpush1.msra.mxu0 %v1623
  %1750 = vmatprep.subr.mxu0 %v1628
  %1751 = vmatpush1.msra.mxu0 %v1627
  %1752 = vmatprep.subr.mxu0 %v1632
  %1753 = vmatpush1.msra.mxu0 %v1631
  %1754 = vmatprep.subr.mxu0 %v1636
  %1755 = vmatpush1.msra.mxu0 %v1635
  %1756 = vmatprep.subr.mxu0 %v1640
  %1757 = vmatpush1.msra.mxu0 %v1639
  %1758 = vmatprep.subr.mxu0 %v1644
  %1759 = vmatpush1.msra.mxu0 %v1643
  %1760 = vmatprep.subr.mxu0 %v1648
  %1761 = vmatpush1.msra.mxu0 %v1647
  %1762 = vmatprep.subr.mxu0 %v1652
  %1763 = vmatpush1.msra.mxu0 %v1651
  %1764 = vmatprep.subr.mxu0 %v1656
  %1765 = vmatpush1.msra.mxu0 %v1655
  %1766 = vmatprep.subr.mxu0 %v1660
  %1767 = vmatpush1.msra.mxu0 %v1659
  %1768 = vmatprep.subr.mxu0 %v1664
  %1769 = vmatpush1.msra.mxu0 %v1663
  %1770 = vmatprep.subr.mxu0 %v1668
  %1771 = vmatpush1.msra.mxu0 %v1667
  %1772 = vmatprep.subr.mxu0 0.0
  %1773 = vmatpush1.msra.mxu0 0.0
  %1774 = vmatprep.subr.mxu0 0.0
  %1775 = vmatpush1.msra.mxu0 0.0
  %1776 = vmatprep.subr.mxu0 0.0
  %1777 = vmatpush1.msra.mxu0 0.0
  %1778 = vmatprep.subr.mxu0 0.0
  %1779 = vmatpush1.msra.mxu0 0.0
  %1780 = vmatprep.subr.mxu0 0.0
  %1781 = vmatpush1.msra.mxu0 0.0
  %1782 = vmatprep.subr.mxu0 0.0
  %1783 = vmatpush1.msra.mxu0 0.0
  %1784 = vmatprep.subr.mxu0 0.0
  %1785 = vmatpush1.msra.mxu0 0.0
  %1786 = vmatprep.subr.mxu0 0.0
  %1787 = vmatpush1.msra.mxu0 0.0
  %1788 = vmatprep.subr.mxu0 0.0
  %1789 = vmatpush1.msra.mxu0 0.0
  %1790 = vmatprep.subr.mxu0 0.0
  %1791 = vmatpush1.msra.mxu0 0.0
  %1792 = vmatprep.subr.mxu0 0.0
  %1793 = vmatpush1.msra.mxu0 0.0
  %1794 = vmatprep.subr.mxu0 0.0
  %1795 = vmatpush1.msra.mxu0 0.0
  %1796 = vmatprep.subr.mxu0 0.0
  %1797 = vmatpush1.msra.mxu0 0.0
  %1798 = vmatprep.subr.mxu0 0.0
  %1799 = vmatpush1.msra.mxu0 0.0
  %1800 = vmatprep.subr.mxu0 0.0
  %1801 = vmatpush1.msra.mxu0 0.0
  %1802 = vmatprep.subr.mxu0 0.0
  %1803 = vmatpush1.msra.mxu0 0.0
  %1804 = vmatprep.mubr.f32.mxu0 0.0
  %1805 = vmatmul.mubr.f32.gmra.mrb[0].mxu0 %v1595
  %v1806 = vpop.f32.mrb[0].mxu0
  %v1807 = vadd.f32 0.0, %v1806
  %v1808 = vpop.f32.mrb[0].mxu0
  %v1809 = vadd.f32 0.0, %v1808
  %1810 = vdwg.mxu0
  %v1811 = vadd.f32 %v1601, %v1736
  %v1812 = vadd.f32 %v1602, %v1738
  %v1813 = vadd.f32 %v1603, %v1807
  %v1814 = vadd.f32 %v1604, %v1809
  %v1815 = vxor.u32 %v1811, 2147483648
  %v1816 = vmul.f32 %v1815, 1.442695
  %v1817 = vpow.pop %v1816
  %v1818 = vadd.f32 %v1817, 1.0
  %v1819 = vrcp.pop %v1818
  %v1820 = vmul.f32 1.0, %v1819
  %v1821 = vxor.u32 %v1812, 2147483648
  %v1822 = vmul.f32 %v1821, 1.442695
  %v1823 = vpow.pop %v1822
  %v1824 = vadd.f32 %v1823, 1.0
  %v1825 = vrcp.pop %v1824
  %v1826 = vmul.f32 1.0, %v1825
  %v1827 = vtanh.pop %v1813
  %v1828 = vxor.u32 %v1814, 2147483648
  %v1829 = vmul.f32 %v1828, 1.442695
  %v1830 = vpow.pop %v1829
  %v1831 = vadd.f32 %v1830, 1.0
  %v1832 = vrcp.pop %v1831
  %v1833 = vmul.f32 1.0, %v1832
  %v1834 = vmul.f32 %v1826, %v1593
  %v1835 = vmul.f32 %v1820, %v1827
  %v1836 = vadd.f32 %v1834, %v1835
  %v1837 = vtanh.pop %v1836
  %v1838 = vmul.f32 %v1833, %v1837
  %s1839 = scalar_lea.vmem [#allocation2], 40
  %1840 = vst [vmem:[%s1839] sm:$0xff] %v1838
  %s1841 = smul.u32 6, 4
  %s1842 = smul.addr %s1841, 8
  %s1843 = scalar_lea.vmem [#allocation3], %s1842
  %v1844 = vld [vmem:[%s1843] sm:$0xff]
  %v1845 = vld [vmem:[%s1843 + $0x8] sm:$0xff]
  %v1846 = vld [vmem:[%s1843 + $0x10] sm:$0xff]
  %v1847 = vld [vmem:[%s1843 + $0x18] sm:$0xff]
  %v1848 = vld [vmem:[%s2] sm:$0xff]
  %v1849 = vld [vmem:[%s2 + $0x8] sm:$0xff]
  %v1850 = vld [vmem:[%s2 + $0x10] sm:$0xff]
  %v1851 = vld [vmem:[%s2 + $0x18] sm:$0xff]
  %v1852 = vld [vmem:[%s2 + $0x20] sm:$0xff]
  %v1853 = vld [vmem:[%s2 + $0x28] sm:$0xff]
  %v1854 = vld [vmem:[%s2 + $0x30] sm:$0xff]
  %v1855 = vld [vmem:[%s2 + $0x38] sm:$0xff]
  %v1856 = vld [vmem:[%s2 + $0x40] sm:$0xff]
  %v1857 = vld [vmem:[%s2 + $0x48] sm:$0xff]
  %v1858 = vld [vmem:[%s2 + $0x50] sm:$0xff]
  %v1859 = vld [vmem:[%s2 + $0x58] sm:$0xff]
  %v1860 = vld [vmem:[%s2 + $0x60] sm:$0xff]
  %v1861 = vld [vmem:[%s2 + $0x68] sm:$0xff]
  %v1862 = vld [vmem:[%s2 + $0x70] sm:$0xff]
  %v1863 = vld [vmem:[%s2 + $0x78] sm:$0xff]
  %v1864 = vld [vmem:[%s2 + $0x80] sm:$0xff]
  %v1865 = vld [vmem:[%s2 + $0x88] sm:$0xff]
  %v1866 = vld [vmem:[%s2 + $0x90] sm:$0xff]
  %v1867 = vld [vmem:[%s2 + $0x98] sm:$0xff]
  %v1868 = vld [vmem:[%s2 + $0xa0] sm:$0xff]
  %v1869 = vld [vmem:[%s2 + $0xa8] sm:$0xff]
  %v1870 = vld [vmem:[%s2 + $0xb0] sm:$0xff]
  %v1871 = vld [vmem:[%s2 + $0xb8] sm:$0xff]
  %v1872 = vld [vmem:[%s2 + $0xc0] sm:$0xff]
  %v1873 = vld [vmem:[%s2 + $0xc8] sm:$0xff]
  %v1874 = vld [vmem:[%s2 + $0xd0] sm:$0xff]
  %v1875 = vld [vmem:[%s2 + $0xd8] sm:$0xff]
  %v1876 = vld [vmem:[%s2 + $0xe0] sm:$0xff]
  %v1877 = vld [vmem:[%s2 + $0xe8] sm:$0xff]
  %v1878 = vld [vmem:[%s2 + $0xf0] sm:$0xff]
  %v1879 = vld [vmem:[%s2 + $0xf8] sm:$0xff]
  %v1880 = vld [vmem:[%s2 + $0x100] sm:$0xff]
  %v1881 = vld [vmem:[%s2 + $0x108] sm:$0xff]
  %v1882 = vld [vmem:[%s2 + $0x110] sm:$0xff]
  %v1883 = vld [vmem:[%s2 + $0x118] sm:$0xff]
  %v1884 = vld [vmem:[%s2 + $0x120] sm:$0xff]
  %v1885 = vld [vmem:[%s2 + $0x128] sm:$0xff]
  %v1886 = vld [vmem:[%s2 + $0x130] sm:$0xff]
  %v1887 = vld [vmem:[%s2 + $0x138] sm:$0xff]
  %v1888 = vld [vmem:[%s2 + $0x140] sm:$0xff]
  %v1889 = vld [vmem:[%s2 + $0x148] sm:$0xff]
  %v1890 = vld [vmem:[%s2 + $0x150] sm:$0xff]
  %v1891 = vld [vmem:[%s2 + $0x158] sm:$0xff]
  %v1892 = vld [vmem:[%s2 + $0x160] sm:$0xff]
  %v1893 = vld [vmem:[%s2 + $0x168] sm:$0xff]
  %v1894 = vld [vmem:[%s2 + $0x170] sm:$0xff]
  %v1895 = vld [vmem:[%s2 + $0x178] sm:$0xff]
  %v1896 = vld [vmem:[%s2 + $0x180] sm:$0xff]
  %v1897 = vld [vmem:[%s2 + $0x188] sm:$0xff]
  %v1898 = vld [vmem:[%s2 + $0x190] sm:$0xff]
  %v1899 = vld [vmem:[%s2 + $0x198] sm:$0xff]
  %v1900 = vld [vmem:[%s2 + $0x1a0] sm:$0xff]
  %v1901 = vld [vmem:[%s2 + $0x1a8] sm:$0xff]
  %v1902 = vld [vmem:[%s2 + $0x1b0] sm:$0xff]
  %v1903 = vld [vmem:[%s2 + $0x1b8] sm:$0xff]
  %v1904 = vld [vmem:[%s2 + $0x1c0] sm:$0xff]
  %v1905 = vld [vmem:[%s2 + $0x1c8] sm:$0xff]
  %v1906 = vld [vmem:[%s2 + $0x1d0] sm:$0xff]
  %v1907 = vld [vmem:[%s2 + $0x1d8] sm:$0xff]
  %v1908 = vld [vmem:[%s2 + $0x1e0] sm:$0xff]
  %v1909 = vld [vmem:[%s2 + $0x1e8] sm:$0xff]
  %v1910 = vld [vmem:[%s2 + $0x1f0] sm:$0xff]
  %v1911 = vld [vmem:[%s2 + $0x1f8] sm:$0xff]
  %1912 = vmatprep.subr.mxu0 %v1849
  %1913 = vmatpush1.msra.mxu0 %v1848
  %1914 = vmatprep.subr.mxu0 %v1853
  %1915 = vmatpush1.msra.mxu0 %v1852
  %1916 = vmatprep.subr.mxu0 %v1857
  %1917 = vmatpush1.msra.mxu0 %v1856
  %1918 = vmatprep.subr.mxu0 %v1861
  %1919 = vmatpush1.msra.mxu0 %v1860
  %1920 = vmatprep.subr.mxu0 %v1865
  %1921 = vmatpush1.msra.mxu0 %v1864
  %1922 = vmatprep.subr.mxu0 %v1869
  %1923 = vmatpush1.msra.mxu0 %v1868
  %1924 = vmatprep.subr.mxu0 %v1873
  %1925 = vmatpush1.msra.mxu0 %v1872
  %1926 = vmatprep.subr.mxu0 %v1877
  %1927 = vmatpush1.msra.mxu0 %v1876
  %1928 = vmatprep.subr.mxu0 %v1881
  %1929 = vmatpush1.msra.mxu0 %v1880
  %1930 = vmatprep.subr.mxu0 %v1885
  %1931 = vmatpush1.msra.mxu0 %v1884
  %1932 = vmatprep.subr.mxu0 %v1889
  %1933 = vmatpush1.msra.mxu0 %v1888
  %1934 = vmatprep.subr.mxu0 %v1893
  %1935 = vmatpush1.msra.mxu0 %v1892
  %1936 = vmatprep.subr.mxu0 %v1897
  %1937 = vmatpush1.msra.mxu0 %v1896
  %1938 = vmatprep.subr.mxu0 %v1901
  %1939 = vmatpush1.msra.mxu0 %v1900
  %1940 = vmatprep.subr.mxu0 %v1905
  %1941 = vmatpush1.msra.mxu0 %v1904
  %1942 = vmatprep.subr.mxu0 %v1909
  %1943 = vmatpush1.msra.mxu0 %v1908
  %1944 = vmatprep.subr.mxu0 0.0
  %1945 = vmatpush1.msra.mxu0 0.0
  %1946 = vmatprep.subr.mxu0 0.0
  %1947 = vmatpush1.msra.mxu0 0.0
  %1948 = vmatprep.subr.mxu0 0.0
  %1949 = vmatpush1.msra.mxu0 0.0
  %1950 = vmatprep.subr.mxu0 0.0
  %1951 = vmatpush1.msra.mxu0 0.0
  %1952 = vmatprep.subr.mxu0 0.0
  %1953 = vmatpush1.msra.mxu0 0.0
  %1954 = vmatprep.subr.mxu0 0.0
  %1955 = vmatpush1.msra.mxu0 0.0
  %1956 = vmatprep.subr.mxu0 0.0
  %1957 = vmatpush1.msra.mxu0 0.0
  %1958 = vmatprep.subr.mxu0 0.0
  %1959 = vmatpush1.msra.mxu0 0.0
  %1960 = vmatprep.subr.mxu0 0.0
  %1961 = vmatpush1.msra.mxu0 0.0
  %1962 = vmatprep.subr.mxu0 0.0
  %1963 = vmatpush1.msra.mxu0 0.0
  %1964 = vmatprep.subr.mxu0 0.0
  %1965 = vmatpush1.msra.mxu0 0.0
  %1966 = vmatprep.subr.mxu0 0.0
  %1967 = vmatpush1.msra.mxu0 0.0
  %1968 = vmatprep.subr.mxu0 0.0
  %1969 = vmatpush1.msra.mxu0 0.0
  %1970 = vmatprep.subr.mxu0 0.0
  %1971 = vmatpush1.msra.mxu0 0.0
  %1972 = vmatprep.subr.mxu0 0.0
  %1973 = vmatpush1.msra.mxu0 0.0
  %1974 = vmatprep.subr.mxu0 0.0
  %1975 = vmatpush1.msra.mxu0 0.0
  %1976 = vmatprep.mubr.f32.mxu0 0.0
  %1977 = vmatmul.mubr.f32.gmra.mrb[0].mxu0 %v1838
  %v1978 = vpop.f32.mrb[0].mxu0
  %v1979 = vadd.f32 0.0, %v1978
  %v1980 = vpop.f32.mrb[0].mxu0
  %v1981 = vadd.f32 0.0, %v1980
  %1982 = vdwg.mxu0
  %1983 = vmatprep.subr.mxu0 %v1851
  %1984 = vmatpush1.msra.mxu0 %v1850
  %1985 = vmatprep.subr.mxu0 %v1855
  %1986 = vmatpush1.msra.mxu0 %v1854
  %1987 = vmatprep.subr.mxu0 %v1859
  %1988 = vmatpush1.msra.mxu0 %v1858
  %1989 = vmatprep.subr.mxu0 %v1863
  %1990 = vmatpush1.msra.mxu0 %v1862
  %1991 = vmatprep.subr.mxu0 %v1867
  %1992 = vmatpush1.msra.mxu0 %v1866
  %1993 = vmatprep.subr.mxu0 %v1871
  %1994 = vmatpush1.msra.mxu0 %v1870
  %1995 = vmatprep.subr.mxu0 %v1875
  %1996 = vmatpush1.msra.mxu0 %v1874
  %1997 = vmatprep.subr.mxu0 %v1879
  %1998 = vmatpush1.msra.mxu0 %v1878
  %1999 = vmatprep.subr.mxu0 %v1883
  %2000 = vmatpush1.msra.mxu0 %v1882
  %2001 = vmatprep.subr.mxu0 %v1887
  %2002 = vmatpush1.msra.mxu0 %v1886
  %2003 = vmatprep.subr.mxu0 %v1891
  %2004 = vmatpush1.msra.mxu0 %v1890
  %2005 = vmatprep.subr.mxu0 %v1895
  %2006 = vmatpush1.msra.mxu0 %v1894
  %2007 = vmatprep.subr.mxu0 %v1899
  %2008 = vmatpush1.msra.mxu0 %v1898
  %2009 = vmatprep.subr.mxu0 %v1903
  %2010 = vmatpush1.msra.mxu0 %v1902
  %2011 = vmatprep.subr.mxu0 %v1907
  %2012 = vmatpush1.msra.mxu0 %v1906
  %2013 = vmatprep.subr.mxu0 %v1911
  %2014 = vmatpush1.msra.mxu0 %v1910
  %2015 = vmatprep.subr.mxu0 0.0
  %2016 = vmatpush1.msra.mxu0 0.0
  %2017 = vmatprep.subr.mxu0 0.0
  %2018 = vmatpush1.msra.mxu0 0.0
  %2019 = vmatprep.subr.mxu0 0.0
  %2020 = vmatpush1.msra.mxu0 0.0
  %2021 = vmatprep.subr.mxu0 0.0
  %2022 = vmatpush1.msra.mxu0 0.0
  %2023 = vmatprep.subr.mxu0 0.0
  %2024 = vmatpush1.msra.mxu0 0.0
  %2025 = vmatprep.subr.mxu0 0.0
  %2026 = vmatpush1.msra.mxu0 0.0
  %2027 = vmatprep.subr.mxu0 0.0
  %2028 = vmatpush1.msra.mxu0 0.0
  %2029 = vmatprep.subr.mxu0 0.0
  %2030 = vmatpush1.msra.mxu0 0.0
  %2031 = vmatprep.subr.mxu0 0.0
  %2032 = vmatpush1.msra.mxu0 0.0
  %2033 = vmatprep.subr.mxu0 0.0
  %2034 = vmatpush1.msra.mxu0 0.0
  %2035 = vmatprep.subr.mxu0 0.0
  %2036 = vmatpush1.msra.mxu0 0.0
  %2037 = vmatprep.subr.mxu0 0.0
  %2038 = vmatpush1.msra.mxu0 0.0
  %2039 = vmatprep.subr.mxu0 0.0
  %2040 = vmatpush1.msra.mxu0 0.0
  %2041 = vmatprep.subr.mxu0 0.0
  %2042 = vmatpush1.msra.mxu0 0.0
  %2043 = vmatprep.subr.mxu0 0.0
  %2044 = vmatpush1.msra.mxu0 0.0
  %2045 = vmatprep.subr.mxu0 0.0
  %2046 = vmatpush1.msra.mxu0 0.0
  %2047 = vmatprep.mubr.f32.mxu0 0.0
  %2048 = vmatmul.mubr.f32.gmra.mrb[0].mxu0 %v1838
  %v2049 = vpop.f32.mrb[0].mxu0
  %v2050 = vadd.f32 0.0, %v2049
  %v2051 = vpop.f32.mrb[0].mxu0
  %v2052 = vadd.f32 0.0, %v2051
  %2053 = vdwg.mxu0
  %v2054 = vadd.f32 %v1844, %v1979
  %v2055 = vadd.f32 %v1845, %v1981
  %v2056 = vadd.f32 %v1846, %v2050
  %v2057 = vadd.f32 %v1847, %v2052
  %v2058 = vxor.u32 %v2054, 2147483648
  %v2059 = vmul.f32 %v2058, 1.442695
  %v2060 = vpow.pop %v2059
  %v2061 = vadd.f32 %v2060, 1.0
  %v2062 = vrcp.pop %v2061
  %v2063 = vmul.f32 1.0, %v2062
  %v2064 = vxor.u32 %v2055, 2147483648
  %v2065 = vmul.f32 %v2064, 1.442695
  %v2066 = vpow.pop %v2065
  %v2067 = vadd.f32 %v2066, 1.0
  %v2068 = vrcp.pop %v2067
  %v2069 = vmul.f32 1.0, %v2068
  %v2070 = vtanh.pop %v2056
  %v2071 = vxor.u32 %v2057, 2147483648
  %v2072 = vmul.f32 %v2071, 1.442695
  %v2073 = vpow.pop %v2072
  %v2074 = vadd.f32 %v2073, 1.0
  %v2075 = vrcp.pop %v2074
  %v2076 = vmul.f32 1.0, %v2075
  %v2077 = vmul.f32 %v2069, %v1836
  %v2078 = vmul.f32 %v2063, %v2070
  %v2079 = vadd.f32 %v2077, %v2078
  %v2080 = vtanh.pop %v2079
  %v2081 = vmul.f32 %v2076, %v2080
  %s2082 = scalar_lea.vmem [#allocation2], 48
  %2083 = vst [vmem:[%s2082] sm:$0xff] %v2081
  %s2084 = smul.u32 7, 4
  %s2085 = smul.addr %s2084, 8
  %s2086 = scalar_lea.vmem [#allocation3], %s2085
  %v2087 = vld [vmem:[%s2086] sm:$0xff]
  %v2088 = vld [vmem:[%s2086 + $0x8] sm:$0xff]
  %v2089 = vld [vmem:[%s2086 + $0x10] sm:$0xff]
  %v2090 = vld [vmem:[%s2086 + $0x18] sm:$0xff]
  %v2091 = vld [vmem:[%s2] sm:$0xff]
  %v2092 = vld [vmem:[%s2 + $0x8] sm:$0xff]
  %v2093 = vld [vmem:[%s2 + $0x10] sm:$0xff]
  %v2094 = vld [vmem:[%s2 + $0x18] sm:$0xff]
  %v2095 = vld [vmem:[%s2 + $0x20] sm:$0xff]
  %v2096 = vld [vmem:[%s2 + $0x28] sm:$0xff]
  %v2097 = vld [vmem:[%s2 + $0x30] sm:$0xff]
  %v2098 = vld [vmem:[%s2 + $0x38] sm:$0xff]
  %v2099 = vld [vmem:[%s2 + $0x40] sm:$0xff]
  %v2100 = vld [vmem:[%s2 + $0x48] sm:$0xff]
  %v2101 = vld [vmem:[%s2 + $0x50] sm:$0xff]
  %v2102 = vld [vmem:[%s2 + $0x58] sm:$0xff]
  %v2103 = vld [vmem:[%s2 + $0x60] sm:$0xff]
  %v2104 = vld [vmem:[%s2 + $0x68] sm:$0xff]
  %v2105 = vld [vmem:[%s2 + $0x70] sm:$0xff]
  %v2106 = vld [vmem:[%s2 + $0x78] sm:$0xff]
  %v2107 = vld [vmem:[%s2 + $0x80] sm:$0xff]
  %v2108 = vld [vmem:[%s2 + $0x88] sm:$0xff]
  %v2109 = vld [vmem:[%s2 + $0x90] sm:$0xff]
  %v2110 = vld [vmem:[%s2 + $0x98] sm:$0xff]
  %v2111 = vld [vmem:[%s2 + $0xa0] sm:$0xff]
  %v2112 = vld [vmem:[%s2 + $0xa8] sm:$0xff]
  %v2113 = vld [vmem:[%s2 + $0xb0] sm:$0xff]
  %v2114 = vld [vmem:[%s2 + $0xb8] sm:$0xff]
  %v2115 = vld [vmem:[%s2 + $0xc0] sm:$0xff]
  %v2116 = vld [vmem:[%s2 + $0xc8] sm:$0xff]
  %v2117 = vld [vmem:[%s2 + $0xd0] sm:$0xff]
  %v2118 = vld [vmem:[%s2 + $0xd8] sm:$0xff]
  %v2119 = vld [vmem:[%s2 + $0xe0] sm:$0xff]
  %v2120 = vld [vmem:[%s2 + $0xe8] sm:$0xff]
  %v2121 = vld [vmem:[%s2 + $0xf0] sm:$0xff]
  %v2122 = vld [vmem:[%s2 + $0xf8] sm:$0xff]
  %v2123 = vld [vmem:[%s2 + $0x100] sm:$0xff]
  %v2124 = vld [vmem:[%s2 + $0x108] sm:$0xff]
  %v2125 = vld [vmem:[%s2 + $0x110] sm:$0xff]
  %v2126 = vld [vmem:[%s2 + $0x118] sm:$0xff]
  %v2127 = vld [vmem:[%s2 + $0x120] sm:$0xff]
  %v2128 = vld [vmem:[%s2 + $0x128] sm:$0xff]
  %v2129 = vld [vmem:[%s2 + $0x130] sm:$0xff]
  %v2130 = vld [vmem:[%s2 + $0x138] sm:$0xff]
  %v2131 = vld [vmem:[%s2 + $0x140] sm:$0xff]
  %v2132 = vld [vmem:[%s2 + $0x148] sm:$0xff]
  %v2133 = vld [vmem:[%s2 + $0x150] sm:$0xff]
  %v2134 = vld [vmem:[%s2 + $0x158] sm:$0xff]
  %v2135 = vld [vmem:[%s2 + $0x160] sm:$0xff]
  %v2136 = vld [vmem:[%s2 + $0x168] sm:$0xff]
  %v2137 = vld [vmem:[%s2 + $0x170] sm:$0xff]
  %v2138 = vld [vmem:[%s2 + $0x178] sm:$0xff]
  %v2139 = vld [vmem:[%s2 + $0x180] sm:$0xff]
  %v2140 = vld [vmem:[%s2 + $0x188] sm:$0xff]
  %v2141 = vld [vmem:[%s2 + $0x190] sm:$0xff]
  %v2142 = vld [vmem:[%s2 + $0x198] sm:$0xff]
  %v2143 = vld [vmem:[%s2 + $0x1a0] sm:$0xff]
  %v2144 = vld [vmem:[%s2 + $0x1a8] sm:$0xff]
  %v2145 = vld [vmem:[%s2 + $0x1b0] sm:$0xff]
  %v2146 = vld [vmem:[%s2 + $0x1b8] sm:$0xff]
  %v2147 = vld [vmem:[%s2 + $0x1c0] sm:$0xff]
  %v2148 = vld [vmem:[%s2 + $0x1c8] sm:$0xff]
  %v2149 = vld [vmem:[%s2 + $0x1d0] sm:$0xff]
  %v2150 = vld [vmem:[%s2 + $0x1d8] sm:$0xff]
  %v2151 = vld [vmem:[%s2 + $0x1e0] sm:$0xff]
  %v2152 = vld [vmem:[%s2 + $0x1e8] sm:$0xff]
  %v2153 = vld [vmem:[%s2 + $0x1f0] sm:$0xff]
  %v2154 = vld [vmem:[%s2 + $0x1f8] sm:$0xff]
  %2155 = vmatprep.subr.mxu0 %v2092
  %2156 = vmatpush1.msra.mxu0 %v2091
  %2157 = vmatprep.subr.mxu0 %v2096
  %2158 = vmatpush1.msra.mxu0 %v2095
  %2159 = vmatprep.subr.mxu0 %v2100
  %2160 = vmatpush1.msra.mxu0 %v2099
  %2161 = vmatprep.subr.mxu0 %v2104
  %2162 = vmatpush1.msra.mxu0 %v2103
  %2163 = vmatprep.subr.mxu0 %v2108
  %2164 = vmatpush1.msra.mxu0 %v2107
  %2165 = vmatprep.subr.mxu0 %v2112
  %2166 = vmatpush1.msra.mxu0 %v2111
  %2167 = vmatprep.subr.mxu0 %v2116
  %2168 = vmatpush1.msra.mxu0 %v2115
  %2169 = vmatprep.subr.mxu0 %v2120
  %2170 = vmatpush1.msra.mxu0 %v2119
  %2171 = vmatprep.subr.mxu0 %v2124
  %2172 = vmatpush1.msra.mxu0 %v2123
  %2173 = vmatprep.subr.mxu0 %v2128
  %2174 = vmatpush1.msra.mxu0 %v2127
  %2175 = vmatprep.subr.mxu0 %v2132
  %2176 = vmatpush1.msra.mxu0 %v2131
  %2177 = vmatprep.subr.mxu0 %v2136
  %2178 = vmatpush1.msra.mxu0 %v2135
  %2179 = vmatprep.subr.mxu0 %v2140
  %2180 = vmatpush1.msra.mxu0 %v2139
  %2181 = vmatprep.subr.mxu0 %v2144
  %2182 = vmatpush1.msra.mxu0 %v2143
  %2183 = vmatprep.subr.mxu0 %v2148
  %2184 = vmatpush1.msra.mxu0 %v2147
  %2185 = vmatprep.subr.mxu0 %v2152
  %2186 = vmatpush1.msra.mxu0 %v2151
  %2187 = vmatprep.subr.mxu0 0.0
  %2188 = vmatpush1.msra.mxu0 0.0
  %2189 = vmatprep.subr.mxu0 0.0
  %2190 = vmatpush1.msra.mxu0 0.0
  %2191 = vmatprep.subr.mxu0 0.0
  %2192 = vmatpush1.msra.mxu0 0.0
  %2193 = vmatprep.subr.mxu0 0.0
  %2194 = vmatpush1.msra.mxu0 0.0
  %2195 = vmatprep.subr.mxu0 0.0
  %2196 = vmatpush1.msra.mxu0 0.0
  %2197 = vmatprep.subr.mxu0 0.0
  %2198 = vmatpush1.msra.mxu0 0.0
  %2199 = vmatprep.subr.mxu0 0.0
  %2200 = vmatpush1.msra.mxu0 0.0
  %2201 = vmatprep.subr.mxu0 0.0
  %2202 = vmatpush1.msra.mxu0 0.0
  %2203 = vmatprep.subr.mxu0 0.0
  %2204 = vmatpush1.msra.mxu0 0.0
  %2205 = vmatprep.subr.mxu0 0.0
  %2206 = vmatpush1.msra.mxu0 0.0
  %2207 = vmatprep.subr.mxu0 0.0
  %2208 = vmatpush1.msra.mxu0 0.0
  %2209 = vmatprep.subr.mxu0 0.0
  %2210 = vmatpush1.msra.mxu0 0.0
  %2211 = vmatprep.subr.mxu0 0.0
  %2212 = vmatpush1.msra.mxu0 0.0
  %2213 = vmatprep.subr.mxu0 0.0
  %2214 = vmatpush1.msra.mxu0 0.0
  %2215 = vmatprep.subr.mxu0 0.0
  %2216 = vmatpush1.msra.mxu0 0.0
  %2217 = vmatprep.subr.mxu0 0.0
  %2218 = vmatpush1.msra.mxu0 0.0
  %2219 = vmatprep.mubr.f32.mxu0 0.0
  %2220 = vmatmul.mubr.f32.gmra.mrb[0].mxu0 %v2081
  %v2221 = vpop.f32.mrb[0].mxu0
  %v2222 = vadd.f32 0.0, %v2221
  %v2223 = vpop.f32.mrb[0].mxu0
  %v2224 = vadd.f32 0.0, %v2223
  %2225 = vdwg.mxu0
  %2226 = vmatprep.subr.mxu0 %v2094
  %2227 = vmatpush1.msra.mxu0 %v2093
  %2228 = vmatprep.subr.mxu0 %v2098
  %2229 = vmatpush1.msra.mxu0 %v2097
  %2230 = vmatprep.subr.mxu0 %v2102
  %2231 = vmatpush1.msra.mxu0 %v2101
  %2232 = vmatprep.subr.mxu0 %v2106
  %2233 = vmatpush1.msra.mxu0 %v2105
  %2234 = vmatprep.subr.mxu0 %v2110
  %2235 = vmatpush1.msra.mxu0 %v2109
  %2236 = vmatprep.subr.mxu0 %v2114
  %2237 = vmatpush1.msra.mxu0 %v2113
  %2238 = vmatprep.subr.mxu0 %v2118
  %2239 = vmatpush1.msra.mxu0 %v2117
  %2240 = vmatprep.subr.mxu0 %v2122
  %2241 = vmatpush1.msra.mxu0 %v2121
  %2242 = vmatprep.subr.mxu0 %v2126
  %2243 = vmatpush1.msra.mxu0 %v2125
  %2244 = vmatprep.subr.mxu0 %v2130
  %2245 = vmatpush1.msra.mxu0 %v2129
  %2246 = vmatprep.subr.mxu0 %v2134
  %2247 = vmatpush1.msra.mxu0 %v2133
  %2248 = vmatprep.subr.mxu0 %v2138
  %2249 = vmatpush1.msra.mxu0 %v2137
  %2250 = vmatprep.subr.mxu0 %v2142
  %2251 = vmatpush1.msra.mxu0 %v2141
  %2252 = vmatprep.subr.mxu0 %v2146
  %2253 = vmatpush1.msra.mxu0 %v2145
  %2254 = vmatprep.subr.mxu0 %v2150
  %2255 = vmatpush1.msra.mxu0 %v2149
  %2256 = vmatprep.subr.mxu0 %v2154
  %2257 = vmatpush1.msra.mxu0 %v2153
  %2258 = vmatprep.subr.mxu0 0.0
  %2259 = vmatpush1.msra.mxu0 0.0
  %2260 = vmatprep.subr.mxu0 0.0
  %2261 = vmatpush1.msra.mxu0 0.0
  %2262 = vmatprep.subr.mxu0 0.0
  %2263 = vmatpush1.msra.mxu0 0.0
  %2264 = vmatprep.subr.mxu0 0.0
  %2265 = vmatpush1.msra.mxu0 0.0
  %2266 = vmatprep.subr.mxu0 0.0
  %2267 = vmatpush1.msra.mxu0 0.0
  %2268 = vmatprep.subr.mxu0 0.0
  %2269 = vmatpush1.msra.mxu0 0.0
  %2270 = vmatprep.subr.mxu0 0.0
  %2271 = vmatpush1.msra.mxu0 0.0
  %2272 = vmatprep.subr.mxu0 0.0
  %2273 = vmatpush1.msra.mxu0 0.0
  %2274 = vmatprep.subr.mxu0 0.0
  %2275 = vmatpush1.msra.mxu0 0.0
  %2276 = vmatprep.subr.mxu0 0.0
  %2277 = vmatpush1.msra.mxu0 0.0
  %2278 = vmatprep.subr.mxu0 0.0
  %2279 = vmatpush1.msra.mxu0 0.0
  %2280 = vmatprep.subr.mxu0 0.0
  %2281 = vmatpush1.msra.mxu0 0.0
  %2282 = vmatprep.subr.mxu0 0.0
  %2283 = vmatpush1.msra.mxu0 0.0
  %2284 = vmatprep.subr.mxu0 0.0
  %2285 = vmatpush1.msra.mxu0 0.0
  %2286 = vmatprep.subr.mxu0 0.0
  %2287 = vmatpush1.msra.mxu0 0.0
  %2288 = vmatprep.subr.mxu0 0.0
  %2289 = vmatpush1.msra.mxu0 0.0
  %2290 = vmatprep.mubr.f32.mxu0 0.0
  %2291 = vmatmul.mubr.f32.gmra.mrb[0].mxu0 %v2081
  %v2292 = vpop.f32.mrb[0].mxu0
  %v2293 = vadd.f32 0.0, %v2292
  %v2294 = vpop.f32.mrb[0].mxu0
  %v2295 = vadd.f32 0.0, %v2294
  %2296 = vdwg.mxu0
  %v2297 = vadd.f32 %v2087, %v2222
  %v2298 = vadd.f32 %v2088, %v2224
  %v2299 = vadd.f32 %v2089, %v2293
  %v2300 = vadd.f32 %v2090, %v2295
  %v2301 = vxor.u32 %v2297, 2147483648
  %v2302 = vmul.f32 %v2301, 1.442695
  %v2303 = vpow.pop %v2302
  %v2304 = vadd.f32 %v2303, 1.0
  %v2305 = vrcp.pop %v2304
  %v2306 = vmul.f32 1.0, %v2305
  %v2307 = vxor.u32 %v2298, 2147483648
  %v2308 = vmul.f32 %v2307, 1.442695
  %v2309 = vpow.pop %v2308
  %v2310 = vadd.f32 %v2309, 1.0
  %v2311 = vrcp.pop %v2310
  %v2312 = vmul.f32 1.0, %v2311
  %v2313 = vtanh.pop %v2299
  %v2314 = vxor.u32 %v2300, 2147483648
  %v2315 = vmul.f32 %v2314, 1.442695
  %v2316 = vpow.pop %v2315
  %v2317 = vadd.f32 %v2316, 1.0
  %v2318 = vrcp.pop %v2317
  %v2319 = vmul.f32 1.0, %v2318
  %v2320 = vmul.f32 %v2312, %v2079
  %v2321 = vmul.f32 %v2306, %v2313
  %v2322 = vadd.f32 %v2320, %v2321
  %v2323 = vtanh.pop %v2322
  %v2324 = vmul.f32 %v2319, %v2323
  %s2325 = scalar_lea.vmem [#allocation2], 56
  %2326 = vst [vmem:[%s2325] sm:$0xff] %v2324
  %v2327 = vld [vmem:[#allocation2] sm:$0xff]
  %v2328 = vld [vmem:[#allocation2 + $0x8] sm:$0xff]
  %v2329 = vld [vmem:[#allocation2 + $0x10] sm:$0xff]
  %v2330 = vld [vmem:[#allocation2 + $0x18] sm:$0xff]
  %v2331 = vld [vmem:[#allocation2 + $0x20] sm:$0xff]
  %v2332 = vld [vmem:[#allocation2 + $0x28] sm:$0xff]
  %v2333 = vld [vmem:[#allocation2 + $0x30] sm:$0xff]
  %v2334 = vld [vmem:[#allocation2 + $0x38] sm:$0xff]
  %v2335 = vld [vmem:[%s4] sm:$0xff]
  %v2336 = vld [vmem:[%s4 + $0x8] sm:$0xff]
  %v2337 = vld [vmem:[%s4 + $0x10] sm:$0xff]
  %v2338 = vld [vmem:[%s4 + $0x18] sm:$0xff]
  %v2339 = vld [vmem:[%s4 + $0x20] sm:$0xff]
  %v2340 = vld [vmem:[%s4 + $0x28] sm:$0xff]
  %v2341 = vld [vmem:[%s4 + $0x30] sm:$0xff]
  %v2342 = vld [vmem:[%s4 + $0x38] sm:$0xff]
  %v2343 = vld [vmem:[%s4 + $0x40] sm:$0xff]
  %v2344 = vld [vmem:[%s4 + $0x48] sm:$0xff]
  %v2345 = vld [vmem:[%s4 + $0x50] sm:$0xff]
  %v2346 = vld [vmem:[%s4 + $0x58] sm:$0xff]
  %v2347 = vld [vmem:[%s4 + $0x60] sm:$0xff]
  %v2348 = vld [vmem:[%s4 + $0x68] sm:$0xff]
  %v2349 = vld [vmem:[%s4 + $0x70] sm:$0xff]
  %v2350 = vld [vmem:[%s4 + $0x78] sm:$0xff]
  %v2351 = vld [vmem:[%s4 + $0x80] sm:$0xff]
  %v2352 = vld [vmem:[%s4 + $0x88] sm:$0xff]
  %v2353 = vld [vmem:[%s4 + $0x90] sm:$0xff]
  %v2354 = vld [vmem:[%s4 + $0x98] sm:$0xff]
  %v2355 = vld [vmem:[%s4 + $0xa0] sm:$0xff]
  %v2356 = vld [vmem:[%s4 + $0xa8] sm:$0xff]
  %v2357 = vld [vmem:[%s4 + $0xb0] sm:$0xff]
  %v2358 = vld [vmem:[%s4 + $0xb8] sm:$0xff]
  %v2359 = vld [vmem:[%s4 + $0xc0] sm:$0xff]
  %v2360 = vld [vmem:[%s4 + $0xc8] sm:$0xff]
  %v2361 = vld [vmem:[%s4 + $0xd0] sm:$0xff]
  %v2362 = vld [vmem:[%s4 + $0xd8] sm:$0xff]
  %v2363 = vld [vmem:[%s4 + $0xe0] sm:$0xff]
  %v2364 = vld [vmem:[%s4 + $0xe8] sm:$0xff]
  %v2365 = vld [vmem:[%s4 + $0xf0] sm:$0xff]
  %v2366 = vld [vmem:[%s4 + $0xf8] sm:$0xff]
  %v2367 = vld [vmem:[%s4 + $0x100] sm:$0xff]
  %v2368 = vld [vmem:[%s4 + $0x108] sm:$0xff]
  %v2369 = vld [vmem:[%s4 + $0x110] sm:$0xff]
  %v2370 = vld [vmem:[%s4 + $0x118] sm:$0xff]
  %v2371 = vld [vmem:[%s4 + $0x120] sm:$0xff]
  %v2372 = vld [vmem:[%s4 + $0x128] sm:$0xff]
  %v2373 = vld [vmem:[%s4 + $0x130] sm:$0xff]
  %v2374 = vld [vmem:[%s4 + $0x138] sm:$0xff]
  %v2375 = vld [vmem:[%s4 + $0x140] sm:$0xff]
  %v2376 = vld [vmem:[%s4 + $0x148] sm:$0xff]
  %v2377 = vld [vmem:[%s4 + $0x150] sm:$0xff]
  %v2378 = vld [vmem:[%s4 + $0x158] sm:$0xff]
  %v2379 = vld [vmem:[%s4 + $0x160] sm:$0xff]
  %v2380 = vld [vmem:[%s4 + $0x168] sm:$0xff]
  %v2381 = vld [vmem:[%s4 + $0x170] sm:$0xff]
  %v2382 = vld [vmem:[%s4 + $0x178] sm:$0xff]
  %v2383 = vld [vmem:[%s4 + $0x180] sm:$0xff]
  %v2384 = vld [vmem:[%s4 + $0x188] sm:$0xff]
  %v2385 = vld [vmem:[%s4 + $0x190] sm:$0xff]
  %v2386 = vld [vmem:[%s4 + $0x198] sm:$0xff]
  %v2387 = vld [vmem:[%s4 + $0x1a0] sm:$0xff]
  %v2388 = vld [vmem:[%s4 + $0x1a8] sm:$0xff]
  %v2389 = vld [vmem:[%s4 + $0x1b0] sm:$0xff]
  %v2390 = vld [vmem:[%s4 + $0x1b8] sm:$0xff]
  %v2391 = vld [vmem:[%s4 + $0x1c0] sm:$0xff]
  %v2392 = vld [vmem:[%s4 + $0x1c8] sm:$0xff]
  %v2393 = vld [vmem:[%s4 + $0x1d0] sm:$0xff]
  %v2394 = vld [vmem:[%s4 + $0x1d8] sm:$0xff]
  %v2395 = vld [vmem:[%s4 + $0x1e0] sm:$0xff]
  %v2396 = vld [vmem:[%s4 + $0x1e8] sm:$0xff]
  %v2397 = vld [vmem:[%s4 + $0x1f0] sm:$0xff]
  %v2398 = vld [vmem:[%s4 + $0x1f8] sm:$0xff]
  %v2399 = vld [vmem:[%s6] sm:$0xf]
  %v2401 = vlaneseq
  %v2402 = vshrl.u32 %v2401, 7
  %v2403 = vsub.s32 0, %v2402
  %v2404 = vrot.slane %v2399, %v2403
  %v2405 = vlaneseq
  %v2406 = vshrl.u32 %v2405, 7
  %v2407 = vsub.s32 1, %v2406
  %v2408 = vrot.slane %v2399, %v2407
  %v2409 = vlaneseq
  %v2410 = vshrl.u32 %v2409, 7
  %v2411 = vsub.s32 2, %v2410
  %v2412 = vrot.slane %v2399, %v2411
  %v2413 = vlaneseq
  %v2414 = vshrl.u32 %v2413, 7
  %v2415 = vsub.s32 3, %v2414
  %v2416 = vrot.slane %v2399, %v2415
  %2421 = vmatprep.subr.mxu0 %v2336
  %2422 = vmatpush1.msra.mxu0 %v2335
  %2423 = vmatprep.subr.mxu0 %v2340
  %2424 = vmatpush1.msra.mxu0 %v2339
  %2425 = vmatprep.subr.mxu0 %v2344
  %2426 = vmatpush1.msra.mxu0 %v2343
  %2427 = vmatprep.subr.mxu0 %v2348
  %2428 = vmatpush1.msra.mxu0 %v2347
  %2429 = vmatprep.subr.mxu0 %v2352
  %2430 = vmatpush1.msra.mxu0 %v2351
  %2431 = vmatprep.subr.mxu0 %v2356
  %2432 = vmatpush1.msra.mxu0 %v2355
  %2433 = vmatprep.subr.mxu0 %v2360
  %2434 = vmatpush1.msra.mxu0 %v2359
  %2435 = vmatprep.subr.mxu0 %v2364
  %2436 = vmatpush1.msra.mxu0 %v2363
  %2437 = vmatprep.subr.mxu0 %v2368
  %2438 = vmatpush1.msra.mxu0 %v2367
  %2439 = vmatprep.subr.mxu0 %v2372
  %2440 = vmatpush1.msra.mxu0 %v2371
  %2441 = vmatprep.subr.mxu0 %v2376
  %2442 = vmatpush1.msra.mxu0 %v2375
  %2443 = vmatprep.subr.mxu0 %v2380
  %2444 = vmatpush1.msra.mxu0 %v2379
  %2445 = vmatprep.subr.mxu0 %v2384
  %2446 = vmatpush1.msra.mxu0 %v2383
  %2447 = vmatprep.subr.mxu0 %v2388
  %2448 = vmatpush1.msra.mxu0 %v2387
  %2449 = vmatprep.subr.mxu0 %v2392
  %2450 = vmatpush1.msra.mxu0 %v2391
  %2451 = vmatprep.subr.mxu0 %v2396
  %2452 = vmatpush1.msra.mxu0 %v2395
  %2453 = vmatprep.subr.mxu0 0.0
  %2454 = vmatpush1.msra.mxu0 0.0
  %2455 = vmatprep.subr.mxu0 0.0
  %2456 = vmatpush1.msra.mxu0 0.0
  %2457 = vmatprep.subr.mxu0 0.0
  %2458 = vmatpush1.msra.mxu0 0.0
  %2459 = vmatprep.subr.mxu0 0.0
  %2460 = vmatpush1.msra.mxu0 0.0
  %2461 = vmatprep.subr.mxu0 0.0
  %2462 = vmatpush1.msra.mxu0 0.0
  %2463 = vmatprep.subr.mxu0 0.0
  %2464 = vmatpush1.msra.mxu0 0.0
  %2465 = vmatprep.subr.mxu0 0.0
  %2466 = vmatpush1.msra.mxu0 0.0
  %2467 = vmatprep.subr.mxu0 0.0
  %2468 = vmatpush1.msra.mxu0 0.0
  %2469 = vmatprep.subr.mxu0 0.0
  %2470 = vmatpush1.msra.mxu0 0.0
  %2471 = vmatprep.subr.mxu0 0.0
  %2472 = vmatpush1.msra.mxu0 0.0
  %2473 = vmatprep.subr.mxu0 0.0
  %2474 = vmatpush1.msra.mxu0 0.0
  %2475 = vmatprep.subr.mxu0 0.0
  %2476 = vmatpush1.msra.mxu0 0.0
  %2477 = vmatprep.subr.mxu0 0.0
  %2478 = vmatpush1.msra.mxu0 0.0
  %2479 = vmatprep.subr.mxu0 0.0
  %2480 = vmatpush1.msra.mxu0 0.0
  %2481 = vmatprep.subr.mxu0 0.0
  %2482 = vmatpush1.msra.mxu0 0.0
  %2483 = vmatprep.subr.mxu0 0.0
  %2484 = vmatpush1.msra.mxu0 0.0
  %2485 = vmatprep.mubr.f32.mxu0 0.0
  %2486 = vmatmul.mubr.f32.gmra.mrb[0].mxu0 %v2327
  %v2487 = vpop.f32.mrb[0].mxu0
  %v2488 = vadd.f32 %v2404, %v2487
  %v2489 = vpop.f32.mrb[0].mxu0
  %v2490 = vadd.f32 %v2408, %v2489
  %2491 = vmatprep.mubr.f32.mxu0 0.0
  %2492 = vmatmul.mubr.f32.gmra.mrb[0].mxu0 %v2328
  %v2493 = vpop.f32.mrb[0].mxu0
  %v2494 = vadd.f32 %v2404, %v2493
  %v2495 = vpop.f32.mrb[0].mxu0
  %v2496 = vadd.f32 %v2408, %v2495
  %2497 = vmatprep.mubr.f32.mxu0 0.0
  %2498 = vmatmul.mubr.f32.gmra.mrb[0].mxu0 %v2329
  %v2499 = vpop.f32.mrb[0].mxu0
  %v2500 = vadd.f32 %v2404, %v2499
  %v2501 = vpop.f32.mrb[0].mxu0
  %v2502 = vadd.f32 %v2408, %v2501
  %2503 = vmatprep.mubr.f32.mxu0 0.0
  %2504 = vmatmul.mubr.f32.gmra.mrb[0].mxu0 %v2330
  %v2505 = vpop.f32.mrb[0].mxu0
  %v2506 = vadd.f32 %v2404, %v2505
  %v2507 = vpop.f32.mrb[0].mxu0
  %v2508 = vadd.f32 %v2408, %v2507
  %2509 = vmatprep.mubr.f32.mxu0 0.0
  %2510 = vmatmul.mubr.f32.gmra.mrb[0].mxu0 %v2331
  %v2511 = vpop.f32.mrb[0].mxu0
  %v2512 = vadd.f32 %v2404, %v2511
  %v2513 = vpop.f32.mrb[0].mxu0
  %v2514 = vadd.f32 %v2408, %v2513
  %2515 = vmatprep.mubr.f32.mxu0 0.0
  %2516 = vmatmul.mubr.f32.gmra.mrb[0].mxu0 %v2332
  %v2517 = vpop.f32.mrb[0].mxu0
  %v2518 = vadd.f32 %v2404, %v2517
  %v2519 = vpop.f32.mrb[0].mxu0
  %v2520 = vadd.f32 %v2408, %v2519
  %2521 = vmatprep.mubr.f32.mxu0 0.0
  %2522 = vmatmul.mubr.f32.gmra.mrb[0].mxu0 %v2333
  %v2523 = vpop.f32.mrb[0].mxu0
  %v2524 = vadd.f32 %v2404, %v2523
  %v2525 = vpop.f32.mrb[0].mxu0
  %v2526 = vadd.f32 %v2408, %v2525
  %2527 = vmatprep.mubr.f32.mxu0 0.0
  %2528 = vmatmul.mubr.f32.gmra.mrb[0].mxu0 %v2334
  %v2529 = vpop.f32.mrb[0].mxu0
  %v2530 = vadd.f32 %v2404, %v2529
  %v2531 = vpop.f32.mrb[0].mxu0
  %v2532 = vadd.f32 %v2408, %v2531
  %2533 = vdwg.mxu0
  %2534 = vmatprep.subr.mxu0 %v2338
  %2535 = vmatpush1.msra.mxu0 %v2337
  %2536 = vmatprep.subr.mxu0 %v2342
  %2537 = vmatpush1.msra.mxu0 %v2341
  %2538 = vmatprep.subr.mxu0 %v2346
  %2539 = vmatpush1.msra.mxu0 %v2345
  %2540 = vmatprep.subr.mxu0 %v2350
  %2541 = vmatpush1.msra.mxu0 %v2349
  %2542 = vmatprep.subr.mxu0 %v2354
  %2543 = vmatpush1.msra.mxu0 %v2353
  %2544 = vmatprep.subr.mxu0 %v2358
  %2545 = vmatpush1.msra.mxu0 %v2357
  %2546 = vmatprep.subr.mxu0 %v2362
  %2547 = vmatpush1.msra.mxu0 %v2361
  %2548 = vmatprep.subr.mxu0 %v2366
  %2549 = vmatpush1.msra.mxu0 %v2365
  %2550 = vmatprep.subr.mxu0 %v2370
  %2551 = vmatpush1.msra.mxu0 %v2369
  %2552 = vmatprep.subr.mxu0 %v2374
  %2553 = vmatpush1.msra.mxu0 %v2373
  %2554 = vmatprep.subr.mxu0 %v2378
  %2555 = vmatpush1.msra.mxu0 %v2377
  %2556 = vmatprep.subr.mxu0 %v2382
  %2557 = vmatpush1.msra.mxu0 %v2381
  %2558 = vmatprep.subr.mxu0 %v2386
  %2559 = vmatpush1.msra.mxu0 %v2385
  %2560 = vmatprep.subr.mxu0 %v2390
  %2561 = vmatpush1.msra.mxu0 %v2389
  %2562 = vmatprep.subr.mxu0 %v2394
  %2563 = vmatpush1.msra.mxu0 %v2393
  %2564 = vmatprep.subr.mxu0 %v2398
  %2565 = vmatpush1.msra.mxu0 %v2397
  %2566 = vmatprep.subr.mxu0 0.0
  %2567 = vmatpush1.msra.mxu0 0.0
  %2568 = vmatprep.subr.mxu0 0.0
  %2569 = vmatpush1.msra.mxu0 0.0
  %2570 = vmatprep.subr.mxu0 0.0
  %2571 = vmatpush1.msra.mxu0 0.0
  %2572 = vmatprep.subr.mxu0 0.0
  %2573 = vmatpush1.msra.mxu0 0.0
  %2574 = vmatprep.subr.mxu0 0.0
  %2575 = vmatpush1.msra.mxu0 0.0
  %2576 = vmatprep.subr.mxu0 0.0
  %2577 = vmatpush1.msra.mxu0 0.0
  %2578 = vmatprep.subr.mxu0 0.0
  %2579 = vmatpush1.msra.mxu0 0.0
  %2580 = vmatprep.subr.mxu0 0.0
  %2581 = vmatpush1.msra.mxu0 0.0
  %2582 = vmatprep.subr.mxu0 0.0
  %2583 = vmatpush1.msra.mxu0 0.0
  %2584 = vmatprep.subr.mxu0 0.0
  %2585 = vmatpush1.msra.mxu0 0.0
  %2586 = vmatprep.subr.mxu0 0.0
  %2587 = vmatpush1.msra.mxu0 0.0
  %2588 = vmatprep.subr.mxu0 0.0
  %2589 = vmatpush1.msra.mxu0 0.0
  %2590 = vmatprep.subr.mxu0 0.0
  %2591 = vmatpush1.msra.mxu0 0.0
  %2592 = vmatprep.subr.mxu0 0.0
  %2593 = vmatpush1.msra.mxu0 0.0
  %2594 = vmatprep.subr.mxu0 0.0
  %2595 = vmatpush1.msra.mxu0 0.0
  %2596 = vmatprep.subr.mxu0 0.0
  %2597 = vmatpush1.msra.mxu0 0.0
  %2598 = vmatprep.mubr.f32.mxu0 0.0
  %2599 = vmatmul.mubr.f32.gmra.mrb[0].mxu0 %v2327
  %v2600 = vpop.f32.mrb[0].mxu0
  %v2601 = vadd.f32 %v2412, %v2600
  %v2602 = vpop.f32.mrb[0].mxu0
  %v2603 = vadd.f32 %v2416, %v2602
  %2604 = vmatprep.mubr.f32.mxu0 0.0
  %2605 = vmatmul.mubr.f32.gmra.mrb[0].mxu0 %v2328
  %v2606 = vpop.f32.mrb[0].mxu0
  %v2607 = vadd.f32 %v2412, %v2606
  %v2608 = vpop.f32.mrb[0].mxu0
  %v2609 = vadd.f32 %v2416, %v2608
  %2610 = vmatprep.mubr.f32.mxu0 0.0
  %2611 = vmatmul.mubr.f32.gmra.mrb[0].mxu0 %v2329
  %v2612 = vpop.f32.mrb[0].mxu0
  %v2613 = vadd.f32 %v2412, %v2612
  %v2614 = vpop.f32.mrb[0].mxu0
  %v2615 = vadd.f32 %v2416, %v2614
  %2616 = vmatprep.mubr.f32.mxu0 0.0
  %2617 = vmatmul.mubr.f32.gmra.mrb[0].mxu0 %v2330
  %v2618 = vpop.f32.mrb[0].mxu0
  %v2619 = vadd.f32 %v2412, %v2618
  %v2620 = vpop.f32.mrb[0].mxu0
  %v2621 = vadd.f32 %v2416, %v2620
  %2622 = vmatprep.mubr.f32.mxu0 0.0
  %2623 = vmatmul.mubr.f32.gmra.mrb[0].mxu0 %v2331
  %v2624 = vpop.f32.mrb[0].mxu0
  %v2625 = vadd.f32 %v2412, %v2624
  %v2626 = vpop.f32.mrb[0].mxu0
  %v2627 = vadd.f32 %v2416, %v2626
  %2628 = vmatprep.mubr.f32.mxu0 0.0
  %2629 = vmatmul.mubr.f32.gmra.mrb[0].mxu0 %v2332
  %v2630 = vpop.f32.mrb[0].mxu0
  %v2631 = vadd.f32 %v2412, %v2630
  %v2632 = vpop.f32.mrb[0].mxu0
  %v2633 = vadd.f32 %v2416, %v2632
  %2634 = vmatprep.mubr.f32.mxu0 0.0
  %2635 = vmatmul.mubr.f32.gmra.mrb[0].mxu0 %v2333
  %v2636 = vpop.f32.mrb[0].mxu0
  %v2637 = vadd.f32 %v2412, %v2636
  %v2638 = vpop.f32.mrb[0].mxu0
  %v2639 = vadd.f32 %v2416, %v2638
  %2640 = vmatprep.mubr.f32.mxu0 0.0
  %2641 = vmatmul.mubr.f32.gmra.mrb[0].mxu0 %v2334
  %v2642 = vpop.f32.mrb[0].mxu0
  %v2643 = vadd.f32 %v2412, %v2642
  %v2644 = vpop.f32.mrb[0].mxu0
  %v2645 = vadd.f32 %v2416, %v2644
  %2646 = vdwg.mxu0
  %2647 = vst [vmem:[#allocation3] sm:$0xff] %v2488
  %2648 = vst [vmem:[#allocation3 + $0x8] sm:$0xff] %v2490
  %2649 = vst [vmem:[#allocation3 + $0x10] sm:$0xff] %v2601
  %2650 = vst [vmem:[#allocation3 + $0x18] sm:$0xff] %v2603
  %2651 = vst [vmem:[#allocation3 + $0x20] sm:$0xff] %v2494
  %2652 = vst [vmem:[#allocation3 + $0x28] sm:$0xff] %v2496
  %2653 = vst [vmem:[#allocation3 + $0x30] sm:$0xff] %v2607
  %2654 = vst [vmem:[#allocation3 + $0x38] sm:$0xff] %v2609
  %2655 = vst [vmem:[#allocation3 + $0x40] sm:$0xff] %v2500
  %2656 = vst [vmem:[#allocation3 + $0x48] sm:$0xff] %v2502
  %2657 = vst [vmem:[#allocation3 + $0x50] sm:$0xff] %v2613
  %2658 = vst [vmem:[#allocation3 + $0x58] sm:$0xff] %v2615
  %2659 = vst [vmem:[#allocation3 + $0x60] sm:$0xff] %v2506
  %2660 = vst [vmem:[#allocation3 + $0x68] sm:$0xff] %v2508
  %2661 = vst [vmem:[#allocation3 + $0x70] sm:$0xff] %v2619
  %2662 = vst [vmem:[#allocation3 + $0x78] sm:$0xff] %v2621
  %2663 = vst [vmem:[#allocation3 + $0x80] sm:$0xff] %v2512
  %2664 = vst [vmem:[#allocation3 + $0x88] sm:$0xff] %v2514
  %2665 = vst [vmem:[#allocation3 + $0x90] sm:$0xff] %v2625
  %2666 = vst [vmem:[#allocation3 + $0x98] sm:$0xff] %v2627
  %2667 = vst [vmem:[#allocation3 + $0xa0] sm:$0xff] %v2518
  %2668 = vst [vmem:[#allocation3 + $0xa8] sm:$0xff] %v2520
  %2669 = vst [vmem:[#allocation3 + $0xb0] sm:$0xff] %v2631
  %2670 = vst [vmem:[#allocation3 + $0xb8] sm:$0xff] %v2633
  %2671 = vst [vmem:[#allocation3 + $0xc0] sm:$0xff] %v2524
  %2672 = vst [vmem:[#allocation3 + $0xc8] sm:$0xff] %v2526
  %2673 = vst [vmem:[#allocation3 + $0xd0] sm:$0xff] %v2637
  %2674 = vst [vmem:[#allocation3 + $0xd8] sm:$0xff] %v2639
  %2675 = vst [vmem:[#allocation3 + $0xe0] sm:$0xff] %v2530
  %2676 = vst [vmem:[#allocation3 + $0xe8] sm:$0xff] %v2532
  %2677 = vst [vmem:[#allocation3 + $0xf0] sm:$0xff] %v2643
  %2678 = vst [vmem:[#allocation3 + $0xf8] sm:$0xff] %v2645
  %v2679 = vld [vmem:[%s386] sm:$0xff]
  %v2680 = vld [vmem:[%s386 + $0x8] sm:$0xff]
  %v2681 = vld [vmem:[%s386 + $0x10] sm:$0xff]
  %v2682 = vld [vmem:[%s386 + $0x18] sm:$0xff]
  %v2683 = vld [vmem:[%s5] sm:$0xff]
  %v2684 = vld [vmem:[%s5 + $0x8] sm:$0xff]
  %v2685 = vld [vmem:[%s5 + $0x10] sm:$0xff]
  %v2686 = vld [vmem:[%s5 + $0x18] sm:$0xff]
  %v2687 = vld [vmem:[%s5 + $0x20] sm:$0xff]
  %v2688 = vld [vmem:[%s5 + $0x28] sm:$0xff]
  %v2689 = vld [vmem:[%s5 + $0x30] sm:$0xff]
  %v2690 = vld [vmem:[%s5 + $0x38] sm:$0xff]
  %v2691 = vld [vmem:[%s5 + $0x40] sm:$0xff]
  %v2692 = vld [vmem:[%s5 + $0x48] sm:$0xff]
  %v2693 = vld [vmem:[%s5 + $0x50] sm:$0xff]
  %v2694 = vld [vmem:[%s5 + $0x58] sm:$0xff]
  %v2695 = vld [vmem:[%s5 + $0x60] sm:$0xff]
  %v2696 = vld [vmem:[%s5 + $0x68] sm:$0xff]
  %v2697 = vld [vmem:[%s5 + $0x70] sm:$0xff]
  %v2698 = vld [vmem:[%s5 + $0x78] sm:$0xff]
  %v2699 = vld [vmem:[%s5 + $0x80] sm:$0xff]
  %v2700 = vld [vmem:[%s5 + $0x88] sm:$0xff]
  %v2701 = vld [vmem:[%s5 + $0x90] sm:$0xff]
  %v2702 = vld [vmem:[%s5 + $0x98] sm:$0xff]
  %v2703 = vld [vmem:[%s5 + $0xa0] sm:$0xff]
  %v2704 = vld [vmem:[%s5 + $0xa8] sm:$0xff]
  %v2705 = vld [vmem:[%s5 + $0xb0] sm:$0xff]
  %v2706 = vld [vmem:[%s5 + $0xb8] sm:$0xff]
  %v2707 = vld [vmem:[%s5 + $0xc0] sm:$0xff]
  %v2708 = vld [vmem:[%s5 + $0xc8] sm:$0xff]
  %v2709 = vld [vmem:[%s5 + $0xd0] sm:$0xff]
  %v2710 = vld [vmem:[%s5 + $0xd8] sm:$0xff]
  %v2711 = vld [vmem:[%s5 + $0xe0] sm:$0xff]
  %v2712 = vld [vmem:[%s5 + $0xe8] sm:$0xff]
  %v2713 = vld [vmem:[%s5 + $0xf0] sm:$0xff]
  %v2714 = vld [vmem:[%s5 + $0xf8] sm:$0xff]
  %v2715 = vld [vmem:[%s5 + $0x100] sm:$0xff]
  %v2716 = vld [vmem:[%s5 + $0x108] sm:$0xff]
  %v2717 = vld [vmem:[%s5 + $0x110] sm:$0xff]
  %v2718 = vld [vmem:[%s5 + $0x118] sm:$0xff]
  %v2719 = vld [vmem:[%s5 + $0x120] sm:$0xff]
  %v2720 = vld [vmem:[%s5 + $0x128] sm:$0xff]
  %v2721 = vld [vmem:[%s5 + $0x130] sm:$0xff]
  %v2722 = vld [vmem:[%s5 + $0x138] sm:$0xff]
  %v2723 = vld [vmem:[%s5 + $0x140] sm:$0xff]
  %v2724 = vld [vmem:[%s5 + $0x148] sm:$0xff]
  %v2725 = vld [vmem:[%s5 + $0x150] sm:$0xff]
  %v2726 = vld [vmem:[%s5 + $0x158] sm:$0xff]
  %v2727 = vld [vmem:[%s5 + $0x160] sm:$0xff]
  %v2728 = vld [vmem:[%s5 + $0x168] sm:$0xff]
  %v2729 = vld [vmem:[%s5 + $0x170] sm:$0xff]
  %v2730 = vld [vmem:[%s5 + $0x178] sm:$0xff]
  %v2731 = vld [vmem:[%s5 + $0x180] sm:$0xff]
  %v2732 = vld [vmem:[%s5 + $0x188] sm:$0xff]
  %v2733 = vld [vmem:[%s5 + $0x190] sm:$0xff]
  %v2734 = vld [vmem:[%s5 + $0x198] sm:$0xff]
  %v2735 = vld [vmem:[%s5 + $0x1a0] sm:$0xff]
  %v2736 = vld [vmem:[%s5 + $0x1a8] sm:$0xff]
  %v2737 = vld [vmem:[%s5 + $0x1b0] sm:$0xff]
  %v2738 = vld [vmem:[%s5 + $0x1b8] sm:$0xff]
  %v2739 = vld [vmem:[%s5 + $0x1c0] sm:$0xff]
  %v2740 = vld [vmem:[%s5 + $0x1c8] sm:$0xff]
  %v2741 = vld [vmem:[%s5 + $0x1d0] sm:$0xff]
  %v2742 = vld [vmem:[%s5 + $0x1d8] sm:$0xff]
  %v2743 = vld [vmem:[%s5 + $0x1e0] sm:$0xff]
  %v2744 = vld [vmem:[%s5 + $0x1e8] sm:$0xff]
  %v2745 = vld [vmem:[%s5 + $0x1f0] sm:$0xff]
  %v2746 = vld [vmem:[%s5 + $0x1f8] sm:$0xff]
  %2747 = vmatprep.subr.mxu0 %v2684
  %2748 = vmatpush1.msra.mxu0 %v2683
  %2749 = vmatprep.subr.mxu0 %v2688
  %2750 = vmatpush1.msra.mxu0 %v2687
  %2751 = vmatprep.subr.mxu0 %v2692
  %2752 = vmatpush1.msra.mxu0 %v2691
  %2753 = vmatprep.subr.mxu0 %v2696
  %2754 = vmatpush1.msra.mxu0 %v2695
  %2755 = vmatprep.subr.mxu0 %v2700
  %2756 = vmatpush1.msra.mxu0 %v2699
  %2757 = vmatprep.subr.mxu0 %v2704
  %2758 = vmatpush1.msra.mxu0 %v2703
  %2759 = vmatprep.subr.mxu0 %v2708
  %2760 = vmatpush1.msra.mxu0 %v2707
  %2761 = vmatprep.subr.mxu0 %v2712
  %2762 = vmatpush1.msra.mxu0 %v2711
  %2763 = vmatprep.subr.mxu0 %v2716
  %2764 = vmatpush1.msra.mxu0 %v2715
  %2765 = vmatprep.subr.mxu0 %v2720
  %2766 = vmatpush1.msra.mxu0 %v2719
  %2767 = vmatprep.subr.mxu0 %v2724
  %2768 = vmatpush1.msra.mxu0 %v2723
  %2769 = vmatprep.subr.mxu0 %v2728
  %2770 = vmatpush1.msra.mxu0 %v2727
  %2771 = vmatprep.subr.mxu0 %v2732
  %2772 = vmatpush1.msra.mxu0 %v2731
  %2773 = vmatprep.subr.mxu0 %v2736
  %2774 = vmatpush1.msra.mxu0 %v2735
  %2775 = vmatprep.subr.mxu0 %v2740
  %2776 = vmatpush1.msra.mxu0 %v2739
  %2777 = vmatprep.subr.mxu0 %v2744
  %2778 = vmatpush1.msra.mxu0 %v2743
  %2779 = vmatprep.subr.mxu0 0.0
  %2780 = vmatpush1.msra.mxu0 0.0
  %2781 = vmatprep.subr.mxu0 0.0
  %2782 = vmatpush1.msra.mxu0 0.0
  %2783 = vmatprep.subr.mxu0 0.0
  %2784 = vmatpush1.msra.mxu0 0.0
  %2785 = vmatprep.subr.mxu0 0.0
  %2786 = vmatpush1.msra.mxu0 0.0
  %2787 = vmatprep.subr.mxu0 0.0
  %2788 = vmatpush1.msra.mxu0 0.0
  %2789 = vmatprep.subr.mxu0 0.0
  %2790 = vmatpush1.msra.mxu0 0.0
  %2791 = vmatprep.subr.mxu0 0.0
  %2792 = vmatpush1.msra.mxu0 0.0
  %2793 = vmatprep.subr.mxu0 0.0
  %2794 = vmatpush1.msra.mxu0 0.0
  %2795 = vmatprep.subr.mxu0 0.0
  %2796 = vmatpush1.msra.mxu0 0.0
  %2797 = vmatprep.subr.mxu0 0.0
  %2798 = vmatpush1.msra.mxu0 0.0
  %2799 = vmatprep.subr.mxu0 0.0
  %2800 = vmatpush1.msra.mxu0 0.0
  %2801 = vmatprep.subr.mxu0 0.0
  %2802 = vmatpush1.msra.mxu0 0.0
  %2803 = vmatprep.subr.mxu0 0.0
  %2804 = vmatpush1.msra.mxu0 0.0
  %2805 = vmatprep.subr.mxu0 0.0
  %2806 = vmatpush1.msra.mxu0 0.0
  %2807 = vmatprep.subr.mxu0 0.0
  %2808 = vmatpush1.msra.mxu0 0.0
  %2809 = vmatprep.subr.mxu0 0.0
  %2810 = vmatpush1.msra.mxu0 0.0
  %2811 = vmatprep.mubr.f32.mxu0 0.0
  %2812 = vmatmul.mubr.f32.gmra.mrb[0].mxu0 0.0
  %v2813 = vpop.f32.mrb[0].mxu0
  %v2814 = vadd.f32 0.0, %v2813
  %v2815 = vpop.f32.mrb[0].mxu0
  %v2816 = vadd.f32 0.0, %v2815
  %2817 = vdwg.mxu0
  %2818 = vmatprep.subr.mxu0 %v2686
  %2819 = vmatpush1.msra.mxu0 %v2685
  %2820 = vmatprep.subr.mxu0 %v2690
  %2821 = vmatpush1.msra.mxu0 %v2689
  %2822 = vmatprep.subr.mxu0 %v2694
  %2823 = vmatpush1.msra.mxu0 %v2693
  %2824 = vmatprep.subr.mxu0 %v2698
  %2825 = vmatpush1.msra.mxu0 %v2697
  %2826 = vmatprep.subr.mxu0 %v2702
  %2827 = vmatpush1.msra.mxu0 %v2701
  %2828 = vmatprep.subr.mxu0 %v2706
  %2829 = vmatpush1.msra.mxu0 %v2705
  %2830 = vmatprep.subr.mxu0 %v2710
  %2831 = vmatpush1.msra.mxu0 %v2709
  %2832 = vmatprep.subr.mxu0 %v2714
  %2833 = vmatpush1.msra.mxu0 %v2713
  %2834 = vmatprep.subr.mxu0 %v2718
  %2835 = vmatpush1.msra.mxu0 %v2717
  %2836 = vmatprep.subr.mxu0 %v2722
  %2837 = vmatpush1.msra.mxu0 %v2721
  %2838 = vmatprep.subr.mxu0 %v2726
  %2839 = vmatpush1.msra.mxu0 %v2725
  %2840 = vmatprep.subr.mxu0 %v2730
  %2841 = vmatpush1.msra.mxu0 %v2729
  %2842 = vmatprep.subr.mxu0 %v2734
  %2843 = vmatpush1.msra.mxu0 %v2733
  %2844 = vmatprep.subr.mxu0 %v2738
  %2845 = vmatpush1.msra.mxu0 %v2737
  %2846 = vmatprep.subr.mxu0 %v2742
  %2847 = vmatpush1.msra.mxu0 %v2741
  %2848 = vmatprep.subr.mxu0 %v2746
  %2849 = vmatpush1.msra.mxu0 %v2745
  %2850 = vmatprep.subr.mxu0 0.0
  %2851 = vmatpush1.msra.mxu0 0.0
  %2852 = vmatprep.subr.mxu0 0.0
  %2853 = vmatpush1.msra.mxu0 0.0
  %2854 = vmatprep.subr.mxu0 0.0
  %2855 = vmatpush1.msra.mxu0 0.0
  %2856 = vmatprep.subr.mxu0 0.0
  %2857 = vmatpush1.msra.mxu0 0.0
  %2858 = vmatprep.subr.mxu0 0.0
  %2859 = vmatpush1.msra.mxu0 0.0
  %2860 = vmatprep.subr.mxu0 0.0
  %2861 = vmatpush1.msra.mxu0 0.0
  %2862 = vmatprep.subr.mxu0 0.0
  %2863 = vmatpush1.msra.mxu0 0.0
  %2864 = vmatprep.subr.mxu0 0.0
  %2865 = vmatpush1.msra.mxu0 0.0
  %2866 = vmatprep.subr.mxu0 0.0
  %2867 = vmatpush1.msra.mxu0 0.0
  %2868 = vmatprep.subr.mxu0 0.0
  %2869 = vmatpush1.msra.mxu0 0.0
  %2870 = vmatprep.subr.mxu0 0.0
  %2871 = vmatpush1.msra.mxu0 0.0
  %2872 = vmatprep.subr.mxu0 0.0
  %2873 = vmatpush1.msra.mxu0 0.0
  %2874 = vmatprep.subr.mxu0 0.0
  %2875 = vmatpush1.msra.mxu0 0.0
  %2876 = vmatprep.subr.mxu0 0.0
  %2877 = vmatpush1.msra.mxu0 0.0
  %2878 = vmatprep.subr.mxu0 0.0
  %2879 = vmatpush1.msra.mxu0 0.0
  %2880 = vmatprep.subr.mxu0 0.0
  %2881 = vmatpush1.msra.mxu0 0.0
  %2882 = vmatprep.mubr.f32.mxu0 0.0
  %2883 = vmatmul.mubr.f32.gmra.mrb[0].mxu0 0.0
  %v2884 = vpop.f32.mrb[0].mxu0
  %v2885 = vadd.f32 0.0, %v2884
  %v2886 = vpop.f32.mrb[0].mxu0
  %v2887 = vadd.f32 0.0, %v2886
  %2888 = vdwg.mxu0
  %v2889 = vadd.f32 %v2679, %v2814
  %v2890 = vadd.f32 %v2680, %v2816
  %v2891 = vadd.f32 %v2681, %v2885
  %v2892 = vadd.f32 %v2682, %v2887
  %v2893 = vxor.u32 %v2889, 2147483648
  %v2894 = vmul.f32 %v2893, 1.442695
  %v2895 = vpow.pop %v2894
  %v2896 = vadd.f32 %v2895, 1.0
  %v2897 = vrcp.pop %v2896
  %v2898 = vmul.f32 1.0, %v2897
  %v2899 = vxor.u32 %v2890, 2147483648
  %v2900 = vmul.f32 %v2899, 1.442695
  %v2901 = vpow.pop %v2900
  %v2902 = vadd.f32 %v2901, 1.0
  %v2903 = vrcp.pop %v2902
  %v2904 = vmul.f32 1.0, %v2903
  %v2905 = vtanh.pop %v2891
  %v2906 = vxor.u32 %v2892, 2147483648
  %v2907 = vmul.f32 %v2906, 1.442695
  %v2908 = vpow.pop %v2907
  %v2909 = vadd.f32 %v2908, 1.0
  %v2910 = vrcp.pop %v2909
  %v2911 = vmul.f32 1.0, %v2910
  %v2912 = vmul.f32 %v2904, 0.0
  %v2913 = vmul.f32 %v2898, %v2905
  %v2914 = vadd.f32 %v2912, %v2913
  %v2915 = vtanh.pop %v2914
  %v2916 = vmul.f32 %v2911, %v2915
  %v2917 = vld [vmem:[%s628] sm:$0xff]
  %v2918 = vld [vmem:[%s628 + $0x8] sm:$0xff]
  %v2919 = vld [vmem:[%s628 + $0x10] sm:$0xff]
  %v2920 = vld [vmem:[%s628 + $0x18] sm:$0xff]
  %2921 = vmatprep.subr.mxu0 %v2684
  %2922 = vmatpush1.msra.mxu0 %v2683
  %2923 = vmatprep.subr.mxu0 %v2688
  %2924 = vmatpush1.msra.mxu0 %v2687
  %2925 = vmatprep.subr.mxu0 %v2692
  %2926 = vmatpush1.msra.mxu0 %v2691
  %2927 = vmatprep.subr.mxu0 %v2696
  %2928 = vmatpush1.msra.mxu0 %v2695
  %2929 = vmatprep.subr.mxu0 %v2700
  %2930 = vmatpush1.msra.mxu0 %v2699
  %2931 = vmatprep.subr.mxu0 %v2704
  %2932 = vmatpush1.msra.mxu0 %v2703
  %2933 = vmatprep.subr.mxu0 %v2708
  %2934 = vmatpush1.msra.mxu0 %v2707
  %2935 = vmatprep.subr.mxu0 %v2712
  %2936 = vmatpush1.msra.mxu0 %v2711
  %2937 = vmatprep.subr.mxu0 %v2716
  %2938 = vmatpush1.msra.mxu0 %v2715
  %2939 = vmatprep.subr.mxu0 %v2720
  %2940 = vmatpush1.msra.mxu0 %v2719
  %2941 = vmatprep.subr.mxu0 %v2724
  %2942 = vmatpush1.msra.mxu0 %v2723
  %2943 = vmatprep.subr.mxu0 %v2728
  %2944 = vmatpush1.msra.mxu0 %v2727
  %2945 = vmatprep.subr.mxu0 %v2732
  %2946 = vmatpush1.msra.mxu0 %v2731
  %2947 = vmatprep.subr.mxu0 %v2736
  %2948 = vmatpush1.msra.mxu0 %v2735
  %2949 = vmatprep.subr.mxu0 %v2740
  %2950 = vmatpush1.msra.mxu0 %v2739
  %2951 = vmatprep.subr.mxu0 %v2744
  %2952 = vmatpush1.msra.mxu0 %v2743
  %2953 = vmatprep.subr.mxu0 0.0
  %2954 = vmatpush1.msra.mxu0 0.0
  %2955 = vmatprep.subr.mxu0 0.0
  %2956 = vmatpush1.msra.mxu0 0.0
  %2957 = vmatprep.subr.mxu0 0.0
  %2958 = vmatpush1.msra.mxu0 0.0
  %2959 = vmatprep.subr.mxu0 0.0
  %2960 = vmatpush1.msra.mxu0 0.0
  %2961 = vmatprep.subr.mxu0 0.0
  %2962 = vmatpush1.msra.mxu0 0.0
  %2963 = vmatprep.subr.mxu0 0.0
  %2964 = vmatpush1.msra.mxu0 0.0
  %2965 = vmatprep.subr.mxu0 0.0
  %2966 = vmatpush1.msra.mxu0 0.0
  %2967 = vmatprep.subr.mxu0 0.0
  %2968 = vmatpush1.msra.mxu0 0.0
  %2969 = vmatprep.subr.mxu0 0.0
  %2970 = vmatpush1.msra.mxu0 0.0
  %2971 = vmatprep.subr.mxu0 0.0
  %2972 = vmatpush1.msra.mxu0 0.0
  %2973 = vmatprep.subr.mxu0 0.0
  %2974 = vmatpush1.msra.mxu0 0.0
  %2975 = vmatprep.subr.mxu0 0.0
  %2976 = vmatpush1.msra.mxu0 0.0
  %2977 = vmatprep.subr.mxu0 0.0
  %2978 = vmatpush1.msra.mxu0 0.0
  %2979 = vmatprep.subr.mxu0 0.0
  %2980 = vmatpush1.msra.mxu0 0.0
  %2981 = vmatprep.subr.mxu0 0.0
  %2982 = vmatpush1.msra.mxu0 0.0
  %2983 = vmatprep.subr.mxu0 0.0
  %2984 = vmatpush1.msra.mxu0 0.0
  %2985 = vmatprep.mubr.f32.mxu0 0.0
  %2986 = vmatmul.mubr.f32.gmra.mrb[0].mxu0 %v2916
  %v2987 = vpop.f32.mrb[0].mxu0
  %v2988 = vadd.f32 0.0, %v2987
  %v2989 = vpop.f32.mrb[0].mxu0
  %v2990 = vadd.f32 0.0, %v2989
  %2991 = vdwg.mxu0
  %2992 = vmatprep.subr.mxu0 %v2686
  %2993 = vmatpush1.msra.mxu0 %v2685
  %2994 = vmatprep.subr.mxu0 %v2690
  %2995 = vmatpush1.msra.mxu0 %v2689
  %2996 = vmatprep.subr.mxu0 %v2694
  %2997 = vmatpush1.msra.mxu0 %v2693
  %2998 = vmatprep.subr.mxu0 %v2698
  %2999 = vmatpush1.msra.mxu0 %v2697
  %3000 = vmatprep.subr.mxu0 %v2702
  %3001 = vmatpush1.msra.mxu0 %v2701
  %3002 = vmatprep.subr.mxu0 %v2706
  %3003 = vmatpush1.msra.mxu0 %v2705
  %3004 = vmatprep.subr.mxu0 %v2710
  %3005 = vmatpush1.msra.mxu0 %v2709
  %3006 = vmatprep.subr.mxu0 %v2714
  %3007 = vmatpush1.msra.mxu0 %v2713
  %3008 = vmatprep.subr.mxu0 %v2718
  %3009 = vmatpush1.msra.mxu0 %v2717
  %3010 = vmatprep.subr.mxu0 %v2722
  %3011 = vmatpush1.msra.mxu0 %v2721
  %3012 = vmatprep.subr.mxu0 %v2726
  %3013 = vmatpush1.msra.mxu0 %v2725
  %3014 = vmatprep.subr.mxu0 %v2730
  %3015 = vmatpush1.msra.mxu0 %v2729
  %3016 = vmatprep.subr.mxu0 %v2734
  %3017 = vmatpush1.msra.mxu0 %v2733
  %3018 = vmatprep.subr.mxu0 %v2738
  %3019 = vmatpush1.msra.mxu0 %v2737
  %3020 = vmatprep.subr.mxu0 %v2742
  %3021 = vmatpush1.msra.mxu0 %v2741
  %3022 = vmatprep.subr.mxu0 %v2746
  %3023 = vmatpush1.msra.mxu0 %v2745
  %3024 = vmatprep.subr.mxu0 0.0
  %3025 = vmatpush1.msra.mxu0 0.0
  %3026 = vmatprep.subr.mxu0 0.0
  %3027 = vmatpush1.msra.mxu0 0.0
  %3028 = vmatprep.subr.mxu0 0.0
  %3029 = vmatpush1.msra.mxu0 0.0
  %3030 = vmatprep.subr.mxu0 0.0
  %3031 = vmatpush1.msra.mxu0 0.0
  %3032 = vmatprep.subr.mxu0 0.0
  %3033 = vmatpush1.msra.mxu0 0.0
  %3034 = vmatprep.subr.mxu0 0.0
  %3035 = vmatpush1.msra.mxu0 0.0
  %3036 = vmatprep.subr.mxu0 0.0
  %3037 = vmatpush1.msra.mxu0 0.0
  %3038 = vmatprep.subr.mxu0 0.0
  %3039 = vmatpush1.msra.mxu0 0.0
  %3040 = vmatprep.subr.mxu0 0.0
  %3041 = vmatpush1.msra.mxu0 0.0
  %3042 = vmatprep.subr.mxu0 0.0
  %3043 = vmatpush1.msra.mxu0 0.0
  %3044 = vmatprep.subr.mxu0 0.0
  %3045 = vmatpush1.msra.mxu0 0.0
  %3046 = vmatprep.subr.mxu0 0.0
  %3047 = vmatpush1.msra.mxu0 0.0
  %3048 = vmatprep.subr.mxu0 0.0
  %3049 = vmatpush1.msra.mxu0 0.0
  %3050 = vmatprep.subr.mxu0 0.0
  %3051 = vmatpush1.msra.mxu0 0.0
  %3052 = vmatprep.subr.mxu0 0.0
  %3053 = vmatpush1.msra.mxu0 0.0
  %3054 = vmatprep.subr.mxu0 0.0
  %3055 = vmatpush1.msra.mxu0 0.0
  %3056 = vmatprep.mubr.f32.mxu0 0.0
  %3057 = vmatmul.mubr.f32.gmra.mrb[0].mxu0 %v2916
  %v3058 = vpop.f32.mrb[0].mxu0
  %v3059 = vadd.f32 0.0, %v3058
  %v3060 = vpop.f32.mrb[0].mxu0
  %v3061 = vadd.f32 0.0, %v3060
  %3062 = vdwg.mxu0
  %v3063 = vadd.f32 %v2917, %v2988
  %v3064 = vadd.f32 %v2918, %v2990
  %v3065 = vadd.f32 %v2919, %v3059
  %v3066 = vadd.f32 %v2920, %v3061
  %v3067 = vxor.u32 %v3063, 2147483648
  %v3068 = vmul.f32 %v3067, 1.442695
  %v3069 = vpow.pop %v3068
  %v3070 = vadd.f32 %v3069, 1.0
  %v3071 = vrcp.pop %v3070
  %v3072 = vmul.f32 1.0, %v3071
  %v3073 = vxor.u32 %v3064, 2147483648
  %v3074 = vmul.f32 %v3073, 1.442695
  %v3075 = vpow.pop %v3074
  %v3076 = vadd.f32 %v3075, 1.0
  %v3077 = vrcp.pop %v3076
  %v3078 = vmul.f32 1.0, %v3077
  %v3079 = vtanh.pop %v3065
  %v3080 = vxor.u32 %v3066, 2147483648
  %v3081 = vmul.f32 %v3080, 1.442695
  %v3082 = vpow.pop %v3081
  %v3083 = vadd.f32 %v3082, 1.0
  %v3084 = vrcp.pop %v3083
  %v3085 = vmul.f32 1.0, %v3084
  %v3086 = vmul.f32 %v3078, %v2914
  %v3087 = vmul.f32 %v3072, %v3079
  %v3088 = vadd.f32 %v3086, %v3087
  %v3089 = vtanh.pop %v3088
  %v3090 = vmul.f32 %v3085, %v3089
  %v3091 = vld [vmem:[%s871] sm:$0xff]
  %v3092 = vld [vmem:[%s871 + $0x8] sm:$0xff]
  %v3093 = vld [vmem:[%s871 + $0x10] sm:$0xff]
  %v3094 = vld [vmem:[%s871 + $0x18] sm:$0xff]
  %3095 = vmatprep.subr.mxu0 %v2684
  %3096 = vmatpush1.msra.mxu0 %v2683
  %3097 = vmatprep.subr.mxu0 %v2688
  %3098 = vmatpush1.msra.mxu0 %v2687
  %3099 = vmatprep.subr.mxu0 %v2692
  %3100 = vmatpush1.msra.mxu0 %v2691
  %3101 = vmatprep.subr.mxu0 %v2696
  %3102 = vmatpush1.msra.mxu0 %v2695
  %3103 = vmatprep.subr.mxu0 %v2700
  %3104 = vmatpush1.msra.mxu0 %v2699
  %3105 = vmatprep.subr.mxu0 %v2704
  %3106 = vmatpush1.msra.mxu0 %v2703
  %3107 = vmatprep.subr.mxu0 %v2708
  %3108 = vmatpush1.msra.mxu0 %v2707
  %3109 = vmatprep.subr.mxu0 %v2712
  %3110 = vmatpush1.msra.mxu0 %v2711
  %3111 = vmatprep.subr.mxu0 %v2716
  %3112 = vmatpush1.msra.mxu0 %v2715
  %3113 = vmatprep.subr.mxu0 %v2720
  %3114 = vmatpush1.msra.mxu0 %v2719
  %3115 = vmatprep.subr.mxu0 %v2724
  %3116 = vmatpush1.msra.mxu0 %v2723
  %3117 = vmatprep.subr.mxu0 %v2728
  %3118 = vmatpush1.msra.mxu0 %v2727
  %3119 = vmatprep.subr.mxu0 %v2732
  %3120 = vmatpush1.msra.mxu0 %v2731
  %3121 = vmatprep.subr.mxu0 %v2736
  %3122 = vmatpush1.msra.mxu0 %v2735
  %3123 = vmatprep.subr.mxu0 %v2740
  %3124 = vmatpush1.msra.mxu0 %v2739
  %3125 = vmatprep.subr.mxu0 %v2744
  %3126 = vmatpush1.msra.mxu0 %v2743
  %3127 = vmatprep.subr.mxu0 0.0
  %3128 = vmatpush1.msra.mxu0 0.0
  %3129 = vmatprep.subr.mxu0 0.0
  %3130 = vmatpush1.msra.mxu0 0.0
  %3131 = vmatprep.subr.mxu0 0.0
  %3132 = vmatpush1.msra.mxu0 0.0
  %3133 = vmatprep.subr.mxu0 0.0
  %3134 = vmatpush1.msra.mxu0 0.0
  %3135 = vmatprep.subr.mxu0 0.0
  %3136 = vmatpush1.msra.mxu0 0.0
  %3137 = vmatprep.subr.mxu0 0.0
  %3138 = vmatpush1.msra.mxu0 0.0
  %3139 = vmatprep.subr.mxu0 0.0
  %3140 = vmatpush1.msra.mxu0 0.0
  %3141 = vmatprep.subr.mxu0 0.0
  %3142 = vmatpush1.msra.mxu0 0.0
  %3143 = vmatprep.subr.mxu0 0.0
  %3144 = vmatpush1.msra.mxu0 0.0
  %3145 = vmatprep.subr.mxu0 0.0
  %3146 = vmatpush1.msra.mxu0 0.0
  %3147 = vmatprep.subr.mxu0 0.0
  %3148 = vmatpush1.msra.mxu0 0.0
  %3149 = vmatprep.subr.mxu0 0.0
  %3150 = vmatpush1.msra.mxu0 0.0
  %3151 = vmatprep.subr.mxu0 0.0
  %3152 = vmatpush1.msra.mxu0 0.0
  %3153 = vmatprep.subr.mxu0 0.0
  %3154 = vmatpush1.msra.mxu0 0.0
  %3155 = vmatprep.subr.mxu0 0.0
  %3156 = vmatpush1.msra.mxu0 0.0
  %3157 = vmatprep.subr.mxu0 0.0
  %3158 = vmatpush1.msra.mxu0 0.0
  %3159 = vmatprep.mubr.f32.mxu0 0.0
  %3160 = vmatmul.mubr.f32.gmra.mrb[0].mxu0 %v3090
  %v3161 = vpop.f32.mrb[0].mxu0
  %v3162 = vadd.f32 0.0, %v3161
  %v3163 = vpop.f32.mrb[0].mxu0
  %v3164 = vadd.f32 0.0, %v3163
  %3165 = vdwg.mxu0
  %3166 = vmatprep.subr.mxu0 %v2686
  %3167 = vmatpush1.msra.mxu0 %v2685
  %3168 = vmatprep.subr.mxu0 %v2690
  %3169 = vmatpush1.msra.mxu0 %v2689
  %3170 = vmatprep.subr.mxu0 %v2694
  %3171 = vmatpush1.msra.mxu0 %v2693
  %3172 = vmatprep.subr.mxu0 %v2698
  %3173 = vmatpush1.msra.mxu0 %v2697
  %3174 = vmatprep.subr.mxu0 %v2702
  %3175 = vmatpush1.msra.mxu0 %v2701
  %3176 = vmatprep.subr.mxu0 %v2706
  %3177 = vmatpush1.msra.mxu0 %v2705
  %3178 = vmatprep.subr.mxu0 %v2710
  %3179 = vmatpush1.msra.mxu0 %v2709
  %3180 = vmatprep.subr.mxu0 %v2714
  %3181 = vmatpush1.msra.mxu0 %v2713
  %3182 = vmatprep.subr.mxu0 %v2718
  %3183 = vmatpush1.msra.mxu0 %v2717
  %3184 = vmatprep.subr.mxu0 %v2722
  %3185 = vmatpush1.msra.mxu0 %v2721
  %3186 = vmatprep.subr.mxu0 %v2726
  %3187 = vmatpush1.msra.mxu0 %v2725
  %3188 = vmatprep.subr.mxu0 %v2730
  %3189 = vmatpush1.msra.mxu0 %v2729
  %3190 = vmatprep.subr.mxu0 %v2734
  %3191 = vmatpush1.msra.mxu0 %v2733
  %3192 = vmatprep.subr.mxu0 %v2738
  %3193 = vmatpush1.msra.mxu0 %v2737
  %3194 = vmatprep.subr.mxu0 %v2742
  %3195 = vmatpush1.msra.mxu0 %v2741
  %3196 = vmatprep.subr.mxu0 %v2746
  %3197 = vmatpush1.msra.mxu0 %v2745
  %3198 = vmatprep.subr.mxu0 0.0
  %3199 = vmatpush1.msra.mxu0 0.0
  %3200 = vmatprep.subr.mxu0 0.0
  %3201 = vmatpush1.msra.mxu0 0.0
  %3202 = vmatprep.subr.mxu0 0.0
  %3203 = vmatpush1.msra.mxu0 0.0
  %3204 = vmatprep.subr.mxu0 0.0
  %3205 = vmatpush1.msra.mxu0 0.0
  %3206 = vmatprep.subr.mxu0 0.0
  %3207 = vmatpush1.msra.mxu0 0.0
  %3208 = vmatprep.subr.mxu0 0.0
  %3209 = vmatpush1.msra.mxu0 0.0
  %3210 = vmatprep.subr.mxu0 0.0
  %3211 = vmatpush1.msra.mxu0 0.0
  %3212 = vmatprep.subr.mxu0 0.0
  %3213 = vmatpush1.msra.mxu0 0.0
  %3214 = vmatprep.subr.mxu0 0.0
  %3215 = vmatpush1.msra.mxu0 0.0
  %3216 = vmatprep.subr.mxu0 0.0
  %3217 = vmatpush1.msra.mxu0 0.0
  %3218 = vmatprep.subr.mxu0 0.0
  %3219 = vmatpush1.msra.mxu0 0.0
  %3220 = vmatprep.subr.mxu0 0.0
  %3221 = vmatpush1.msra.mxu0 0.0
  %3222 = vmatprep.subr.mxu0 0.0
  %3223 = vmatpush1.msra.mxu0 0.0
  %3224 = vmatprep.subr.mxu0 0.0
  %3225 = vmatpush1.msra.mxu0 0.0
  %3226 = vmatprep.subr.mxu0 0.0
  %3227 = vmatpush1.msra.mxu0 0.0
  %3228 = vmatprep.subr.mxu0 0.0
  %3229 = vmatpush1.msra.mxu0 0.0
  %3230 = vmatprep.mubr.f32.mxu0 0.0
  %3231 = vmatmul.mubr.f32.gmra.mrb[0].mxu0 %v3090
  %v3232 = vpop.f32.mrb[0].mxu0
  %v3233 = vadd.f32 0.0, %v3232
  %v3234 = vpop.f32.mrb[0].mxu0
  %v3235 = vadd.f32 0.0, %v3234
  %3236 = vdwg.mxu0
  %v3237 = vadd.f32 %v3091, %v3162
  %v3238 = vadd.f32 %v3092, %v3164
  %v3239 = vadd.f32 %v3093, %v3233
  %v3240 = vadd.f32 %v3094, %v3235
  %v3241 = vxor.u32 %v3237, 2147483648
  %v3242 = vmul.f32 %v3241, 1.442695
  %v3243 = vpow.pop %v3242
  %v3244 = vadd.f32 %v3243, 1.0
  %v3245 = vrcp.pop %v3244
  %v3246 = vmul.f32 1.0, %v3245
  %v3247 = vxor.u32 %v3238, 2147483648
  %v3248 = vmul.f32 %v3247, 1.442695
  %v3249 = vpow.pop %v3248
  %v3250 = vadd.f32 %v3249, 1.0
  %v3251 = vrcp.pop %v3250
  %v3252 = vmul.f32 1.0, %v3251
  %v3253 = vtanh.pop %v3239
  %v3254 = vxor.u32 %v3240, 2147483648
  %v3255 = vmul.f32 %v3254, 1.442695
  %v3256 = vpow.pop %v3255
  %v3257 = vadd.f32 %v3256, 1.0
  %v3258 = vrcp.pop %v3257
  %v3259 = vmul.f32 1.0, %v3258
  %v3260 = vmul.f32 %v3252, %v3088
  %v3261 = vmul.f32 %v3246, %v3253
  %v3262 = vadd.f32 %v3260, %v3261
  %v3263 = vtanh.pop %v3262
  %v3264 = vmul.f32 %v3259, %v3263
  %v3265 = vld [vmem:[%s1114] sm:$0xff]
  %v3266 = vld [vmem:[%s1114 + $0x8] sm:$0xff]
  %v3267 = vld [vmem:[%s1114 + $0x10] sm:$0xff]
  %v3268 = vld [vmem:[%s1114 + $0x18] sm:$0xff]
  %3269 = vmatprep.subr.mxu0 %v2684
  %3270 = vmatpush1.msra.mxu0 %v2683
  %3271 = vmatprep.subr.mxu0 %v2688
  %3272 = vmatpush1.msra.mxu0 %v2687
  %3273 = vmatprep.subr.mxu0 %v2692
  %3274 = vmatpush1.msra.mxu0 %v2691
  %3275 = vmatprep.subr.mxu0 %v2696
  %3276 = vmatpush1.msra.mxu0 %v2695
  %3277 = vmatprep.subr.mxu0 %v2700
  %3278 = vmatpush1.msra.mxu0 %v2699
  %3279 = vmatprep.subr.mxu0 %v2704
  %3280 = vmatpush1.msra.mxu0 %v2703
  %3281 = vmatprep.subr.mxu0 %v2708
  %3282 = vmatpush1.msra.mxu0 %v2707
  %3283 = vmatprep.subr.mxu0 %v2712
  %3284 = vmatpush1.msra.mxu0 %v2711
  %3285 = vmatprep.subr.mxu0 %v2716
  %3286 = vmatpush1.msra.mxu0 %v2715
  %3287 = vmatprep.subr.mxu0 %v2720
  %3288 = vmatpush1.msra.mxu0 %v2719
  %3289 = vmatprep.subr.mxu0 %v2724
  %3290 = vmatpush1.msra.mxu0 %v2723
  %3291 = vmatprep.subr.mxu0 %v2728
  %3292 = vmatpush1.msra.mxu0 %v2727
  %3293 = vmatprep.subr.mxu0 %v2732
  %3294 = vmatpush1.msra.mxu0 %v2731
  %3295 = vmatprep.subr.mxu0 %v2736
  %3296 = vmatpush1.msra.mxu0 %v2735
  %3297 = vmatprep.subr.mxu0 %v2740
  %3298 = vmatpush1.msra.mxu0 %v2739
  %3299 = vmatprep.subr.mxu0 %v2744
  %3300 = vmatpush1.msra.mxu0 %v2743
  %3301 = vmatprep.subr.mxu0 0.0
  %3302 = vmatpush1.msra.mxu0 0.0
  %3303 = vmatprep.subr.mxu0 0.0
  %3304 = vmatpush1.msra.mxu0 0.0
  %3305 = vmatprep.subr.mxu0 0.0
  %3306 = vmatpush1.msra.mxu0 0.0
  %3307 = vmatprep.subr.mxu0 0.0
  %3308 = vmatpush1.msra.mxu0 0.0
  %3309 = vmatprep.subr.mxu0 0.0
  %3310 = vmatpush1.msra.mxu0 0.0
  %3311 = vmatprep.subr.mxu0 0.0
  %3312 = vmatpush1.msra.mxu0 0.0
  %3313 = vmatprep.subr.mxu0 0.0
  %3314 = vmatpush1.msra.mxu0 0.0
  %3315 = vmatprep.subr.mxu0 0.0
  %3316 = vmatpush1.msra.mxu0 0.0
  %3317 = vmatprep.subr.mxu0 0.0
  %3318 = vmatpush1.msra.mxu0 0.0
  %3319 = vmatprep.subr.mxu0 0.0
  %3320 = vmatpush1.msra.mxu0 0.0
  %3321 = vmatprep.subr.mxu0 0.0
  %3322 = vmatpush1.msra.mxu0 0.0
  %3323 = vmatprep.subr.mxu0 0.0
  %3324 = vmatpush1.msra.mxu0 0.0
  %3325 = vmatprep.subr.mxu0 0.0
  %3326 = vmatpush1.msra.mxu0 0.0
  %3327 = vmatprep.subr.mxu0 0.0
  %3328 = vmatpush1.msra.mxu0 0.0
  %3329 = vmatprep.subr.mxu0 0.0
  %3330 = vmatpush1.msra.mxu0 0.0
  %3331 = vmatprep.subr.mxu0 0.0
  %3332 = vmatpush1.msra.mxu0 0.0
  %3333 = vmatprep.mubr.f32.mxu0 0.0
  %3334 = vmatmul.mubr.f32.gmra.mrb[0].mxu0 %v3264
  %v3335 = vpop.f32.mrb[0].mxu0
  %v3336 = vadd.f32 0.0, %v3335
  %v3337 = vpop.f32.mrb[0].mxu0
  %v3338 = vadd.f32 0.0, %v3337
  %3339 = vdwg.mxu0
  %3340 = vmatprep.subr.mxu0 %v2686
  %3341 = vmatpush1.msra.mxu0 %v2685
  %3342 = vmatprep.subr.mxu0 %v2690
  %3343 = vmatpush1.msra.mxu0 %v2689
  %3344 = vmatprep.subr.mxu0 %v2694
  %3345 = vmatpush1.msra.mxu0 %v2693
  %3346 = vmatprep.subr.mxu0 %v2698
  %3347 = vmatpush1.msra.mxu0 %v2697
  %3348 = vmatprep.subr.mxu0 %v2702
  %3349 = vmatpush1.msra.mxu0 %v2701
  %3350 = vmatprep.subr.mxu0 %v2706
  %3351 = vmatpush1.msra.mxu0 %v2705
  %3352 = vmatprep.subr.mxu0 %v2710
  %3353 = vmatpush1.msra.mxu0 %v2709
  %3354 = vmatprep.subr.mxu0 %v2714
  %3355 = vmatpush1.msra.mxu0 %v2713
  %3356 = vmatprep.subr.mxu0 %v2718
  %3357 = vmatpush1.msra.mxu0 %v2717
  %3358 = vmatprep.subr.mxu0 %v2722
  %3359 = vmatpush1.msra.mxu0 %v2721
  %3360 = vmatprep.subr.mxu0 %v2726
  %3361 = vmatpush1.msra.mxu0 %v2725
  %3362 = vmatprep.subr.mxu0 %v2730
  %3363 = vmatpush1.msra.mxu0 %v2729
  %3364 = vmatprep.subr.mxu0 %v2734
  %3365 = vmatpush1.msra.mxu0 %v2733
  %3366 = vmatprep.subr.mxu0 %v2738
  %3367 = vmatpush1.msra.mxu0 %v2737
  %3368 = vmatprep.subr.mxu0 %v2742
  %3369 = vmatpush1.msra.mxu0 %v2741
  %3370 = vmatprep.subr.mxu0 %v2746
  %3371 = vmatpush1.msra.mxu0 %v2745
  %3372 = vmatprep.subr.mxu0 0.0
  %3373 = vmatpush1.msra.mxu0 0.0
  %3374 = vmatprep.subr.mxu0 0.0
  %3375 = vmatpush1.msra.mxu0 0.0
  %3376 = vmatprep.subr.mxu0 0.0
  %3377 = vmatpush1.msra.mxu0 0.0
  %3378 = vmatprep.subr.mxu0 0.0
  %3379 = vmatpush1.msra.mxu0 0.0
  %3380 = vmatprep.subr.mxu0 0.0
  %3381 = vmatpush1.msra.mxu0 0.0
  %3382 = vmatprep.subr.mxu0 0.0
  %3383 = vmatpush1.msra.mxu0 0.0
  %3384 = vmatprep.subr.mxu0 0.0
  %3385 = vmatpush1.msra.mxu0 0.0
  %3386 = vmatprep.subr.mxu0 0.0
  %3387 = vmatpush1.msra.mxu0 0.0
  %3388 = vmatprep.subr.mxu0 0.0
  %3389 = vmatpush1.msra.mxu0 0.0
  %3390 = vmatprep.subr.mxu0 0.0
  %3391 = vmatpush1.msra.mxu0 0.0
  %3392 = vmatprep.subr.mxu0 0.0
  %3393 = vmatpush1.msra.mxu0 0.0
  %3394 = vmatprep.subr.mxu0 0.0
  %3395 = vmatpush1.msra.mxu0 0.0
  %3396 = vmatprep.subr.mxu0 0.0
  %3397 = vmatpush1.msra.mxu0 0.0
  %3398 = vmatprep.subr.mxu0 0.0
  %3399 = vmatpush1.msra.mxu0 0.0
  %3400 = vmatprep.subr.mxu0 0.0
  %3401 = vmatpush1.msra.mxu0 0.0
  %3402 = vmatprep.subr.mxu0 0.0
  %3403 = vmatpush1.msra.mxu0 0.0
  %3404 = vmatprep.mubr.f32.mxu0 0.0
  %3405 = vmatmul.mubr.f32.gmra.mrb[0].mxu0 %v3264
  %v3406 = vpop.f32.mrb[0].mxu0
  %v3407 = vadd.f32 0.0, %v3406
  %v3408 = vpop.f32.mrb[0].mxu0
  %v3409 = vadd.f32 0.0, %v3408
  %3410 = vdwg.mxu0
  %v3411 = vadd.f32 %v3265, %v3336
  %v3412 = vadd.f32 %v3266, %v3338
  %v3413 = vadd.f32 %v3267, %v3407
  %v3414 = vadd.f32 %v3268, %v3409
  %v3415 = vxor.u32 %v3411, 2147483648
  %v3416 = vmul.f32 %v3415, 1.442695
  %v3417 = vpow.pop %v3416
  %v3418 = vadd.f32 %v3417, 1.0
  %v3419 = vrcp.pop %v3418
  %v3420 = vmul.f32 1.0, %v3419
  %v3421 = vxor.u32 %v3412, 2147483648
  %v3422 = vmul.f32 %v3421, 1.442695
  %v3423 = vpow.pop %v3422
  %v3424 = vadd.f32 %v3423, 1.0
  %v3425 = vrcp.pop %v3424
  %v3426 = vmul.f32 1.0, %v3425
  %v3427 = vtanh.pop %v3413
  %v3428 = vxor.u32 %v3414, 2147483648
  %v3429 = vmul.f32 %v3428, 1.442695
  %v3430 = vpow.pop %v3429
  %v3431 = vadd.f32 %v3430, 1.0
  %v3432 = vrcp.pop %v3431
  %v3433 = vmul.f32 1.0, %v3432
  %v3434 = vmul.f32 %v3426, %v3262
  %v3435 = vmul.f32 %v3420, %v3427
  %v3436 = vadd.f32 %v3434, %v3435
  %v3437 = vtanh.pop %v3436
  %v3438 = vmul.f32 %v3433, %v3437
  %v3439 = vld [vmem:[%s1357] sm:$0xff]
  %v3440 = vld [vmem:[%s1357 + $0x8] sm:$0xff]
  %v3441 = vld [vmem:[%s1357 + $0x10] sm:$0xff]
  %v3442 = vld [vmem:[%s1357 + $0x18] sm:$0xff]
  %3443 = vmatprep.subr.mxu0 %v2684
  %3444 = vmatpush1.msra.mxu0 %v2683
  %3445 = vmatprep.subr.mxu0 %v2688
  %3446 = vmatpush1.msra.mxu0 %v2687
  %3447 = vmatprep.subr.mxu0 %v2692
  %3448 = vmatpush1.msra.mxu0 %v2691
  %3449 = vmatprep.subr.mxu0 %v2696
  %3450 = vmatpush1.msra.mxu0 %v2695
  %3451 = vmatprep.subr.mxu0 %v2700
  %3452 = vmatpush1.msra.mxu0 %v2699
  %3453 = vmatprep.subr.mxu0 %v2704
  %3454 = vmatpush1.msra.mxu0 %v2703
  %3455 = vmatprep.subr.mxu0 %v2708
  %3456 = vmatpush1.msra.mxu0 %v2707
  %3457 = vmatprep.subr.mxu0 %v2712
  %3458 = vmatpush1.msra.mxu0 %v2711
  %3459 = vmatprep.subr.mxu0 %v2716
  %3460 = vmatpush1.msra.mxu0 %v2715
  %3461 = vmatprep.subr.mxu0 %v2720
  %3462 = vmatpush1.msra.mxu0 %v2719
  %3463 = vmatprep.subr.mxu0 %v2724
  %3464 = vmatpush1.msra.mxu0 %v2723
  %3465 = vmatprep.subr.mxu0 %v2728
  %3466 = vmatpush1.msra.mxu0 %v2727
  %3467 = vmatprep.subr.mxu0 %v2732
  %3468 = vmatpush1.msra.mxu0 %v2731
  %3469 = vmatprep.subr.mxu0 %v2736
  %3470 = vmatpush1.msra.mxu0 %v2735
  %3471 = vmatprep.subr.mxu0 %v2740
  %3472 = vmatpush1.msra.mxu0 %v2739
  %3473 = vmatprep.subr.mxu0 %v2744
  %3474 = vmatpush1.msra.mxu0 %v2743
  %3475 = vmatprep.subr.mxu0 0.0
  %3476 = vmatpush1.msra.mxu0 0.0
  %3477 = vmatprep.subr.mxu0 0.0
  %3478 = vmatpush1.msra.mxu0 0.0
  %3479 = vmatprep.subr.mxu0 0.0
  %3480 = vmatpush1.msra.mxu0 0.0
  %3481 = vmatprep.subr.mxu0 0.0
  %3482 = vmatpush1.msra.mxu0 0.0
  %3483 = vmatprep.subr.mxu0 0.0
  %3484 = vmatpush1.msra.mxu0 0.0
  %3485 = vmatprep.subr.mxu0 0.0
  %3486 = vmatpush1.msra.mxu0 0.0
  %3487 = vmatprep.subr.mxu0 0.0
  %3488 = vmatpush1.msra.mxu0 0.0
  %3489 = vmatprep.subr.mxu0 0.0
  %3490 = vmatpush1.msra.mxu0 0.0
  %3491 = vmatprep.subr.mxu0 0.0
  %3492 = vmatpush1.msra.mxu0 0.0
  %3493 = vmatprep.subr.mxu0 0.0
  %3494 = vmatpush1.msra.mxu0 0.0
  %3495 = vmatprep.subr.mxu0 0.0
  %3496 = vmatpush1.msra.mxu0 0.0
  %3497 = vmatprep.subr.mxu0 0.0
  %3498 = vmatpush1.msra.mxu0 0.0
  %3499 = vmatprep.subr.mxu0 0.0
  %3500 = vmatpush1.msra.mxu0 0.0
  %3501 = vmatprep.subr.mxu0 0.0
  %3502 = vmatpush1.msra.mxu0 0.0
  %3503 = vmatprep.subr.mxu0 0.0
  %3504 = vmatpush1.msra.mxu0 0.0
  %3505 = vmatprep.subr.mxu0 0.0
  %3506 = vmatpush1.msra.mxu0 0.0
  %3507 = vmatprep.mubr.f32.mxu0 0.0
  %3508 = vmatmul.mubr.f32.gmra.mrb[0].mxu0 %v3438
  %v3509 = vpop.f32.mrb[0].mxu0
  %v3510 = vadd.f32 0.0, %v3509
  %v3511 = vpop.f32.mrb[0].mxu0
  %v3512 = vadd.f32 0.0, %v3511
  %3513 = vdwg.mxu0
  %3514 = vmatprep.subr.mxu0 %v2686
  %3515 = vmatpush1.msra.mxu0 %v2685
  %3516 = vmatprep.subr.mxu0 %v2690
  %3517 = vmatpush1.msra.mxu0 %v2689
  %3518 = vmatprep.subr.mxu0 %v2694
  %3519 = vmatpush1.msra.mxu0 %v2693
  %3520 = vmatprep.subr.mxu0 %v2698
  %3521 = vmatpush1.msra.mxu0 %v2697
  %3522 = vmatprep.subr.mxu0 %v2702
  %3523 = vmatpush1.msra.mxu0 %v2701
  %3524 = vmatprep.subr.mxu0 %v2706
  %3525 = vmatpush1.msra.mxu0 %v2705
  %3526 = vmatprep.subr.mxu0 %v2710
  %3527 = vmatpush1.msra.mxu0 %v2709
  %3528 = vmatprep.subr.mxu0 %v2714
  %3529 = vmatpush1.msra.mxu0 %v2713
  %3530 = vmatprep.subr.mxu0 %v2718
  %3531 = vmatpush1.msra.mxu0 %v2717
  %3532 = vmatprep.subr.mxu0 %v2722
  %3533 = vmatpush1.msra.mxu0 %v2721
  %3534 = vmatprep.subr.mxu0 %v2726
  %3535 = vmatpush1.msra.mxu0 %v2725
  %3536 = vmatprep.subr.mxu0 %v2730
  %3537 = vmatpush1.msra.mxu0 %v2729
  %3538 = vmatprep.subr.mxu0 %v2734
  %3539 = vmatpush1.msra.mxu0 %v2733
  %3540 = vmatprep.subr.mxu0 %v2738
  %3541 = vmatpush1.msra.mxu0 %v2737
  %3542 = vmatprep.subr.mxu0 %v2742
  %3543 = vmatpush1.msra.mxu0 %v2741
  %3544 = vmatprep.subr.mxu0 %v2746
  %3545 = vmatpush1.msra.mxu0 %v2745
  %3546 = vmatprep.subr.mxu0 0.0
  %3547 = vmatpush1.msra.mxu0 0.0
  %3548 = vmatprep.subr.mxu0 0.0
  %3549 = vmatpush1.msra.mxu0 0.0
  %3550 = vmatprep.subr.mxu0 0.0
  %3551 = vmatpush1.msra.mxu0 0.0
  %3552 = vmatprep.subr.mxu0 0.0
  %3553 = vmatpush1.msra.mxu0 0.0
  %3554 = vmatprep.subr.mxu0 0.0
  %3555 = vmatpush1.msra.mxu0 0.0
  %3556 = vmatprep.subr.mxu0 0.0
  %3557 = vmatpush1.msra.mxu0 0.0
  %3558 = vmatprep.subr.mxu0 0.0
  %3559 = vmatpush1.msra.mxu0 0.0
  %3560 = vmatprep.subr.mxu0 0.0
  %3561 = vmatpush1.msra.mxu0 0.0
  %3562 = vmatprep.subr.mxu0 0.0
  %3563 = vmatpush1.msra.mxu0 0.0
  %3564 = vmatprep.subr.mxu0 0.0
  %3565 = vmatpush1.msra.mxu0 0.0
  %3566 = vmatprep.subr.mxu0 0.0
  %3567 = vmatpush1.msra.mxu0 0.0
  %3568 = vmatprep.subr.mxu0 0.0
  %3569 = vmatpush1.msra.mxu0 0.0
  %3570 = vmatprep.subr.mxu0 0.0
  %3571 = vmatpush1.msra.mxu0 0.0
  %3572 = vmatprep.subr.mxu0 0.0
  %3573 = vmatpush1.msra.mxu0 0.0
  %3574 = vmatprep.subr.mxu0 0.0
  %3575 = vmatpush1.msra.mxu0 0.0
  %3576 = vmatprep.subr.mxu0 0.0
  %3577 = vmatpush1.msra.mxu0 0.0
  %3578 = vmatprep.mubr.f32.mxu0 0.0
  %3579 = vmatmul.mubr.f32.gmra.mrb[0].mxu0 %v3438
  %v3580 = vpop.f32.mrb[0].mxu0
  %v3581 = vadd.f32 0.0, %v3580
  %v3582 = vpop.f32.mrb[0].mxu0
  %v3583 = vadd.f32 0.0, %v3582
  %3584 = vdwg.mxu0
  %v3585 = vadd.f32 %v3439, %v3510
  %v3586 = vadd.f32 %v3440, %v3512
  %v3587 = vadd.f32 %v3441, %v3581
  %v3588 = vadd.f32 %v3442, %v3583
  %v3589 = vxor.u32 %v3585, 2147483648
  %v3590 = vmul.f32 %v3589, 1.442695
  %v3591 = vpow.pop %v3590
  %v3592 = vadd.f32 %v3591, 1.0
  %v3593 = vrcp.pop %v3592
  %v3594 = vmul.f32 1.0, %v3593
  %v3595 = vxor.u32 %v3586, 2147483648
  %v3596 = vmul.f32 %v3595, 1.442695
  %v3597 = vpow.pop %v3596
  %v3598 = vadd.f32 %v3597, 1.0
  %v3599 = vrcp.pop %v3598
  %v3600 = vmul.f32 1.0, %v3599
  %v3601 = vtanh.pop %v3587
  %v3602 = vxor.u32 %v3588, 2147483648
  %v3603 = vmul.f32 %v3602, 1.442695
  %v3604 = vpow.pop %v3603
  %v3605 = vadd.f32 %v3604, 1.0
  %v3606 = vrcp.pop %v3605
  %v3607 = vmul.f32 1.0, %v3606
  %v3608 = vmul.f32 %v3600, %v3436
  %v3609 = vmul.f32 %v3594, %v3601
  %v3610 = vadd.f32 %v3608, %v3609
  %v3611 = vtanh.pop %v3610
  %v3612 = vmul.f32 %v3607, %v3611
  %v3613 = vld [vmem:[%s1600] sm:$0xff]
  %v3614 = vld [vmem:[%s1600 + $0x8] sm:$0xff]
  %v3615 = vld [vmem:[%s1600 + $0x10] sm:$0xff]
  %v3616 = vld [vmem:[%s1600 + $0x18] sm:$0xff]
  %3617 = vmatprep.subr.mxu0 %v2684
  %3618 = vmatpush1.msra.mxu0 %v2683
  %3619 = vmatprep.subr.mxu0 %v2688
  %3620 = vmatpush1.msra.mxu0 %v2687
  %3621 = vmatprep.subr.mxu0 %v2692
  %3622 = vmatpush1.msra.mxu0 %v2691
  %3623 = vmatprep.subr.mxu0 %v2696
  %3624 = vmatpush1.msra.mxu0 %v2695
  %3625 = vmatprep.subr.mxu0 %v2700
  %3626 = vmatpush1.msra.mxu0 %v2699
  %3627 = vmatprep.subr.mxu0 %v2704
  %3628 = vmatpush1.msra.mxu0 %v2703
  %3629 = vmatprep.subr.mxu0 %v2708
  %3630 = vmatpush1.msra.mxu0 %v2707
  %3631 = vmatprep.subr.mxu0 %v2712
  %3632 = vmatpush1.msra.mxu0 %v2711
  %3633 = vmatprep.subr.mxu0 %v2716
  %3634 = vmatpush1.msra.mxu0 %v2715
  %3635 = vmatprep.subr.mxu0 %v2720
  %3636 = vmatpush1.msra.mxu0 %v2719
  %3637 = vmatprep.subr.mxu0 %v2724
  %3638 = vmatpush1.msra.mxu0 %v2723
  %3639 = vmatprep.subr.mxu0 %v2728
  %3640 = vmatpush1.msra.mxu0 %v2727
  %3641 = vmatprep.subr.mxu0 %v2732
  %3642 = vmatpush1.msra.mxu0 %v2731
  %3643 = vmatprep.subr.mxu0 %v2736
  %3644 = vmatpush1.msra.mxu0 %v2735
  %3645 = vmatprep.subr.mxu0 %v2740
  %3646 = vmatpush1.msra.mxu0 %v2739
  %3647 = vmatprep.subr.mxu0 %v2744
  %3648 = vmatpush1.msra.mxu0 %v2743
  %3649 = vmatprep.subr.mxu0 0.0
  %3650 = vmatpush1.msra.mxu0 0.0
  %3651 = vmatprep.subr.mxu0 0.0
  %3652 = vmatpush1.msra.mxu0 0.0
  %3653 = vmatprep.subr.mxu0 0.0
  %3654 = vmatpush1.msra.mxu0 0.0
  %3655 = vmatprep.subr.mxu0 0.0
  %3656 = vmatpush1.msra.mxu0 0.0
  %3657 = vmatprep.subr.mxu0 0.0
  %3658 = vmatpush1.msra.mxu0 0.0
  %3659 = vmatprep.subr.mxu0 0.0
  %3660 = vmatpush1.msra.mxu0 0.0
  %3661 = vmatprep.subr.mxu0 0.0
  %3662 = vmatpush1.msra.mxu0 0.0
  %3663 = vmatprep.subr.mxu0 0.0
  %3664 = vmatpush1.msra.mxu0 0.0
  %3665 = vmatprep.subr.mxu0 0.0
  %3666 = vmatpush1.msra.mxu0 0.0
  %3667 = vmatprep.subr.mxu0 0.0
  %3668 = vmatpush1.msra.mxu0 0.0
  %3669 = vmatprep.subr.mxu0 0.0
  %3670 = vmatpush1.msra.mxu0 0.0
  %3671 = vmatprep.subr.mxu0 0.0
  %3672 = vmatpush1.msra.mxu0 0.0
  %3673 = vmatprep.subr.mxu0 0.0
  %3674 = vmatpush1.msra.mxu0 0.0
  %3675 = vmatprep.subr.mxu0 0.0
  %3676 = vmatpush1.msra.mxu0 0.0
  %3677 = vmatprep.subr.mxu0 0.0
  %3678 = vmatpush1.msra.mxu0 0.0
  %3679 = vmatprep.subr.mxu0 0.0
  %3680 = vmatpush1.msra.mxu0 0.0
  %3681 = vmatprep.mubr.f32.mxu0 0.0
  %3682 = vmatmul.mubr.f32.gmra.mrb[0].mxu0 %v3612
  %v3683 = vpop.f32.mrb[0].mxu0
  %v3684 = vadd.f32 0.0, %v3683
  %v3685 = vpop.f32.mrb[0].mxu0
  %v3686 = vadd.f32 0.0, %v3685
  %3687 = vdwg.mxu0
  %3688 = vmatprep.subr.mxu0 %v2686
  %3689 = vmatpush1.msra.mxu0 %v2685
  %3690 = vmatprep.subr.mxu0 %v2690
  %3691 = vmatpush1.msra.mxu0 %v2689
  %3692 = vmatprep.subr.mxu0 %v2694
  %3693 = vmatpush1.msra.mxu0 %v2693
  %3694 = vmatprep.subr.mxu0 %v2698
  %3695 = vmatpush1.msra.mxu0 %v2697
  %3696 = vmatprep.subr.mxu0 %v2702
  %3697 = vmatpush1.msra.mxu0 %v2701
  %3698 = vmatprep.subr.mxu0 %v2706
  %3699 = vmatpush1.msra.mxu0 %v2705
  %3700 = vmatprep.subr.mxu0 %v2710
  %3701 = vmatpush1.msra.mxu0 %v2709
  %3702 = vmatprep.subr.mxu0 %v2714
  %3703 = vmatpush1.msra.mxu0 %v2713
  %3704 = vmatprep.subr.mxu0 %v2718
  %3705 = vmatpush1.msra.mxu0 %v2717
  %3706 = vmatprep.subr.mxu0 %v2722
  %3707 = vmatpush1.msra.mxu0 %v2721
  %3708 = vmatprep.subr.mxu0 %v2726
  %3709 = vmatpush1.msra.mxu0 %v2725
  %3710 = vmatprep.subr.mxu0 %v2730
  %3711 = vmatpush1.msra.mxu0 %v2729
  %3712 = vmatprep.subr.mxu0 %v2734
  %3713 = vmatpush1.msra.mxu0 %v2733
  %3714 = vmatprep.subr.mxu0 %v2738
  %3715 = vmatpush1.msra.mxu0 %v2737
  %3716 = vmatprep.subr.mxu0 %v2742
  %3717 = vmatpush1.msra.mxu0 %v2741
  %3718 = vmatprep.subr.mxu0 %v2746
  %3719 = vmatpush1.msra.mxu0 %v2745
  %3720 = vmatprep.subr.mxu0 0.0
  %3721 = vmatpush1.msra.mxu0 0.0
  %3722 = vmatprep.subr.mxu0 0.0
  %3723 = vmatpush1.msra.mxu0 0.0
  %3724 = vmatprep.subr.mxu0 0.0
  %3725 = vmatpush1.msra.mxu0 0.0
  %3726 = vmatprep.subr.mxu0 0.0
  %3727 = vmatpush1.msra.mxu0 0.0
  %3728 = vmatprep.subr.mxu0 0.0
  %3729 = vmatpush1.msra.mxu0 0.0
  %3730 = vmatprep.subr.mxu0 0.0
  %3731 = vmatpush1.msra.mxu0 0.0
  %3732 = vmatprep.subr.mxu0 0.0
  %3733 = vmatpush1.msra.mxu0 0.0
  %3734 = vmatprep.subr.mxu0 0.0
  %3735 = vmatpush1.msra.mxu0 0.0
  %3736 = vmatprep.subr.mxu0 0.0
  %3737 = vmatpush1.msra.mxu0 0.0
  %3738 = vmatprep.subr.mxu0 0.0
  %3739 = vmatpush1.msra.mxu0 0.0
  %3740 = vmatprep.subr.mxu0 0.0
  %3741 = vmatpush1.msra.mxu0 0.0
  %3742 = vmatprep.subr.mxu0 0.0
  %3743 = vmatpush1.msra.mxu0 0.0
  %3744 = vmatprep.subr.mxu0 0.0
  %3745 = vmatpush1.msra.mxu0 0.0
  %3746 = vmatprep.subr.mxu0 0.0
  %3747 = vmatpush1.msra.mxu0 0.0
  %3748 = vmatprep.subr.mxu0 0.0
  %3749 = vmatpush1.msra.mxu0 0.0
  %3750 = vmatprep.subr.mxu0 0.0
  %3751 = vmatpush1.msra.mxu0 0.0
  %3752 = vmatprep.mubr.f32.mxu0 0.0
  %3753 = vmatmul.mubr.f32.gmra.mrb[0].mxu0 %v3612
  %v3754 = vpop.f32.mrb[0].mxu0
  %v3755 = vadd.f32 0.0, %v3754
  %v3756 = vpop.f32.mrb[0].mxu0
  %v3757 = vadd.f32 0.0, %v3756
  %3758 = vdwg.mxu0
  %v3759 = vadd.f32 %v3613, %v3684
  %v3760 = vadd.f32 %v3614, %v3686
  %v3761 = vadd.f32 %v3615, %v3755
  %v3762 = vadd.f32 %v3616, %v3757
  %v3763 = vxor.u32 %v3759, 2147483648
  %v3764 = vmul.f32 %v3763, 1.442695
  %v3765 = vpow.pop %v3764
  %v3766 = vadd.f32 %v3765, 1.0
  %v3767 = vrcp.pop %v3766
  %v3768 = vmul.f32 1.0, %v3767
  %v3769 = vxor.u32 %v3760, 2147483648
  %v3770 = vmul.f32 %v3769, 1.442695
  %v3771 = vpow.pop %v3770
  %v3772 = vadd.f32 %v3771, 1.0
  %v3773 = vrcp.pop %v3772
  %v3774 = vmul.f32 1.0, %v3773
  %v3775 = vtanh.pop %v3761
  %v3776 = vxor.u32 %v3762, 2147483648
  %v3777 = vmul.f32 %v3776, 1.442695
  %v3778 = vpow.pop %v3777
  %v3779 = vadd.f32 %v3778, 1.0
  %v3780 = vrcp.pop %v3779
  %v3781 = vmul.f32 1.0, %v3780
  %v3782 = vmul.f32 %v3774, %v3610
  %v3783 = vmul.f32 %v3768, %v3775
  %v3784 = vadd.f32 %v3782, %v3783
  %v3785 = vtanh.pop %v3784
  %v3786 = vmul.f32 %v3781, %v3785
  %v3787 = vld [vmem:[%s1843] sm:$0xff]
  %v3788 = vld [vmem:[%s1843 + $0x8] sm:$0xff]
  %v3789 = vld [vmem:[%s1843 + $0x10] sm:$0xff]
  %v3790 = vld [vmem:[%s1843 + $0x18] sm:$0xff]
  %3791 = vmatprep.subr.mxu0 %v2684
  %3792 = vmatpush1.msra.mxu0 %v2683
  %3793 = vmatprep.subr.mxu0 %v2688
  %3794 = vmatpush1.msra.mxu0 %v2687
  %3795 = vmatprep.subr.mxu0 %v2692
  %3796 = vmatpush1.msra.mxu0 %v2691
  %3797 = vmatprep.subr.mxu0 %v2696
  %3798 = vmatpush1.msra.mxu0 %v2695
  %3799 = vmatprep.subr.mxu0 %v2700
  %3800 = vmatpush1.msra.mxu0 %v2699
  %3801 = vmatprep.subr.mxu0 %v2704
  %3802 = vmatpush1.msra.mxu0 %v2703
  %3803 = vmatprep.subr.mxu0 %v2708
  %3804 = vmatpush1.msra.mxu0 %v2707
  %3805 = vmatprep.subr.mxu0 %v2712
  %3806 = vmatpush1.msra.mxu0 %v2711
  %3807 = vmatprep.subr.mxu0 %v2716
  %3808 = vmatpush1.msra.mxu0 %v2715
  %3809 = vmatprep.subr.mxu0 %v2720
  %3810 = vmatpush1.msra.mxu0 %v2719
  %3811 = vmatprep.subr.mxu0 %v2724
  %3812 = vmatpush1.msra.mxu0 %v2723
  %3813 = vmatprep.subr.mxu0 %v2728
  %3814 = vmatpush1.msra.mxu0 %v2727
  %3815 = vmatprep.subr.mxu0 %v2732
  %3816 = vmatpush1.msra.mxu0 %v2731
  %3817 = vmatprep.subr.mxu0 %v2736
  %3818 = vmatpush1.msra.mxu0 %v2735
  %3819 = vmatprep.subr.mxu0 %v2740
  %3820 = vmatpush1.msra.mxu0 %v2739
  %3821 = vmatprep.subr.mxu0 %v2744
  %3822 = vmatpush1.msra.mxu0 %v2743
  %3823 = vmatprep.subr.mxu0 0.0
  %3824 = vmatpush1.msra.mxu0 0.0
  %3825 = vmatprep.subr.mxu0 0.0
  %3826 = vmatpush1.msra.mxu0 0.0
  %3827 = vmatprep.subr.mxu0 0.0
  %3828 = vmatpush1.msra.mxu0 0.0
  %3829 = vmatprep.subr.mxu0 0.0
  %3830 = vmatpush1.msra.mxu0 0.0
  %3831 = vmatprep.subr.mxu0 0.0
  %3832 = vmatpush1.msra.mxu0 0.0
  %3833 = vmatprep.subr.mxu0 0.0
  %3834 = vmatpush1.msra.mxu0 0.0
  %3835 = vmatprep.subr.mxu0 0.0
  %3836 = vmatpush1.msra.mxu0 0.0
  %3837 = vmatprep.subr.mxu0 0.0
  %3838 = vmatpush1.msra.mxu0 0.0
  %3839 = vmatprep.subr.mxu0 0.0
  %3840 = vmatpush1.msra.mxu0 0.0
  %3841 = vmatprep.subr.mxu0 0.0
  %3842 = vmatpush1.msra.mxu0 0.0
  %3843 = vmatprep.subr.mxu0 0.0
  %3844 = vmatpush1.msra.mxu0 0.0
  %3845 = vmatprep.subr.mxu0 0.0
  %3846 = vmatpush1.msra.mxu0 0.0
  %3847 = vmatprep.subr.mxu0 0.0
  %3848 = vmatpush1.msra.mxu0 0.0
  %3849 = vmatprep.subr.mxu0 0.0
  %3850 = vmatpush1.msra.mxu0 0.0
  %3851 = vmatprep.subr.mxu0 0.0
  %3852 = vmatpush1.msra.mxu0 0.0
  %3853 = vmatprep.subr.mxu0 0.0
  %3854 = vmatpush1.msra.mxu0 0.0
  %3855 = vmatprep.mubr.f32.mxu0 0.0
  %3856 = vmatmul.mubr.f32.gmra.mrb[0].mxu0 %v3786
  %v3857 = vpop.f32.mrb[0].mxu0
  %v3858 = vadd.f32 0.0, %v3857
  %v3859 = vpop.f32.mrb[0].mxu0
  %v3860 = vadd.f32 0.0, %v3859
  %3861 = vdwg.mxu0
  %3862 = vmatprep.subr.mxu0 %v2686
  %3863 = vmatpush1.msra.mxu0 %v2685
  %3864 = vmatprep.subr.mxu0 %v2690
  %3865 = vmatpush1.msra.mxu0 %v2689
  %3866 = vmatprep.subr.mxu0 %v2694
  %3867 = vmatpush1.msra.mxu0 %v2693
  %3868 = vmatprep.subr.mxu0 %v2698
  %3869 = vmatpush1.msra.mxu0 %v2697
  %3870 = vmatprep.subr.mxu0 %v2702
  %3871 = vmatpush1.msra.mxu0 %v2701
  %3872 = vmatprep.subr.mxu0 %v2706
  %3873 = vmatpush1.msra.mxu0 %v2705
  %3874 = vmatprep.subr.mxu0 %v2710
  %3875 = vmatpush1.msra.mxu0 %v2709
  %3876 = vmatprep.subr.mxu0 %v2714
  %3877 = vmatpush1.msra.mxu0 %v2713
  %3878 = vmatprep.subr.mxu0 %v2718
  %3879 = vmatpush1.msra.mxu0 %v2717
  %3880 = vmatprep.subr.mxu0 %v2722
  %3881 = vmatpush1.msra.mxu0 %v2721
  %3882 = vmatprep.subr.mxu0 %v2726
  %3883 = vmatpush1.msra.mxu0 %v2725
  %3884 = vmatprep.subr.mxu0 %v2730
  %3885 = vmatpush1.msra.mxu0 %v2729
  %3886 = vmatprep.subr.mxu0 %v2734
  %3887 = vmatpush1.msra.mxu0 %v2733
  %3888 = vmatprep.subr.mxu0 %v2738
  %3889 = vmatpush1.msra.mxu0 %v2737
  %3890 = vmatprep.subr.mxu0 %v2742
  %3891 = vmatpush1.msra.mxu0 %v2741
  %3892 = vmatprep.subr.mxu0 %v2746
  %3893 = vmatpush1.msra.mxu0 %v2745
  %3894 = vmatprep.subr.mxu0 0.0
  %3895 = vmatpush1.msra.mxu0 0.0
  %3896 = vmatprep.subr.mxu0 0.0
  %3897 = vmatpush1.msra.mxu0 0.0
  %3898 = vmatprep.subr.mxu0 0.0
  %3899 = vmatpush1.msra.mxu0 0.0
  %3900 = vmatprep.subr.mxu0 0.0
  %3901 = vmatpush1.msra.mxu0 0.0
  %3902 = vmatprep.subr.mxu0 0.0
  %3903 = vmatpush1.msra.mxu0 0.0
  %3904 = vmatprep.subr.mxu0 0.0
  %3905 = vmatpush1.msra.mxu0 0.0
  %3906 = vmatprep.subr.mxu0 0.0
  %3907 = vmatpush1.msra.mxu0 0.0
  %3908 = vmatprep.subr.mxu0 0.0
  %3909 = vmatpush1.msra.mxu0 0.0
  %3910 = vmatprep.subr.mxu0 0.0
  %3911 = vmatpush1.msra.mxu0 0.0
  %3912 = vmatprep.subr.mxu0 0.0
  %3913 = vmatpush1.msra.mxu0 0.0
  %3914 = vmatprep.subr.mxu0 0.0
  %3915 = vmatpush1.msra.mxu0 0.0
  %3916 = vmatprep.subr.mxu0 0.0
  %3917 = vmatpush1.msra.mxu0 0.0
  %3918 = vmatprep.subr.mxu0 0.0
  %3919 = vmatpush1.msra.mxu0 0.0
  %3920 = vmatprep.subr.mxu0 0.0
  %3921 = vmatpush1.msra.mxu0 0.0
  %3922 = vmatprep.subr.mxu0 0.0
  %3923 = vmatpush1.msra.mxu0 0.0
  %3924 = vmatprep.subr.mxu0 0.0
  %3925 = vmatpush1.msra.mxu0 0.0
  %3926 = vmatprep.mubr.f32.mxu0 0.0
  %3927 = vmatmul.mubr.f32.gmra.mrb[0].mxu0 %v3786
  %v3928 = vpop.f32.mrb[0].mxu0
  %v3929 = vadd.f32 0.0, %v3928
  %v3930 = vpop.f32.mrb[0].mxu0
  %v3931 = vadd.f32 0.0, %v3930
  %3932 = vdwg.mxu0
  %v3933 = vadd.f32 %v3787, %v3858
  %v3934 = vadd.f32 %v3788, %v3860
  %v3935 = vadd.f32 %v3789, %v3929
  %v3936 = vadd.f32 %v3790, %v3931
  %v3937 = vxor.u32 %v3933, 2147483648
  %v3938 = vmul.f32 %v3937, 1.442695
  %v3939 = vpow.pop %v3938
  %v3940 = vadd.f32 %v3939, 1.0
  %v3941 = vrcp.pop %v3940
  %v3942 = vmul.f32 1.0, %v3941
  %v3943 = vxor.u32 %v3934, 2147483648
  %v3944 = vmul.f32 %v3943, 1.442695
  %v3945 = vpow.pop %v3944
  %v3946 = vadd.f32 %v3945, 1.0
  %v3947 = vrcp.pop %v3946
  %v3948 = vmul.f32 1.0, %v3947
  %v3949 = vtanh.pop %v3935
  %v3950 = vxor.u32 %v3936, 2147483648
  %v3951 = vmul.f32 %v3950, 1.442695
  %v3952 = vpow.pop %v3951
  %v3953 = vadd.f32 %v3952, 1.0
  %v3954 = vrcp.pop %v3953
  %v3955 = vmul.f32 1.0, %v3954
  %v3956 = vmul.f32 %v3948, %v3784
  %v3957 = vmul.f32 %v3942, %v3949
  %v3958 = vadd.f32 %v3956, %v3957
  %v3959 = vtanh.pop %v3958
  %v3960 = vmul.f32 %v3955, %v3959
  %v3961 = vld [vmem:[%s2086] sm:$0xff]
  %v3962 = vld [vmem:[%s2086 + $0x8] sm:$0xff]
  %v3963 = vld [vmem:[%s2086 + $0x10] sm:$0xff]
  %v3964 = vld [vmem:[%s2086 + $0x18] sm:$0xff]
  %3965 = vmatprep.subr.mxu0 %v2684
  %3966 = vmatpush1.msra.mxu0 %v2683
  %3967 = vmatprep.subr.mxu0 %v2688
  %3968 = vmatpush1.msra.mxu0 %v2687
  %3969 = vmatprep.subr.mxu0 %v2692
  %3970 = vmatpush1.msra.mxu0 %v2691
  %3971 = vmatprep.subr.mxu0 %v2696
  %3972 = vmatpush1.msra.mxu0 %v2695
  %3973 = vmatprep.subr.mxu0 %v2700
  %3974 = vmatpush1.msra.mxu0 %v2699
  %3975 = vmatprep.subr.mxu0 %v2704
  %3976 = vmatpush1.msra.mxu0 %v2703
  %3977 = vmatprep.subr.mxu0 %v2708
  %3978 = vmatpush1.msra.mxu0 %v2707
  %3979 = vmatprep.subr.mxu0 %v2712
  %3980 = vmatpush1.msra.mxu0 %v2711
  %3981 = vmatprep.subr.mxu0 %v2716
  %3982 = vmatpush1.msra.mxu0 %v2715
  %3983 = vmatprep.subr.mxu0 %v2720
  %3984 = vmatpush1.msra.mxu0 %v2719
  %3985 = vmatprep.subr.mxu0 %v2724
  %3986 = vmatpush1.msra.mxu0 %v2723
  %3987 = vmatprep.subr.mxu0 %v2728
  %3988 = vmatpush1.msra.mxu0 %v2727
  %3989 = vmatprep.subr.mxu0 %v2732
  %3990 = vmatpush1.msra.mxu0 %v2731
  %3991 = vmatprep.subr.mxu0 %v2736
  %3992 = vmatpush1.msra.mxu0 %v2735
  %3993 = vmatprep.subr.mxu0 %v2740
  %3994 = vmatpush1.msra.mxu0 %v2739
  %3995 = vmatprep.subr.mxu0 %v2744
  %3996 = vmatpush1.msra.mxu0 %v2743
  %3997 = vmatprep.subr.mxu0 0.0
  %3998 = vmatpush1.msra.mxu0 0.0
  %3999 = vmatprep.subr.mxu0 0.0
  %4000 = vmatpush1.msra.mxu0 0.0
  %4001 = vmatprep.subr.mxu0 0.0
  %4002 = vmatpush1.msra.mxu0 0.0
  %4003 = vmatprep.subr.mxu0 0.0
  %4004 = vmatpush1.msra.mxu0 0.0
  %4005 = vmatprep.subr.mxu0 0.0
  %4006 = vmatpush1.msra.mxu0 0.0
  %4007 = vmatprep.subr.mxu0 0.0
  %4008 = vmatpush1.msra.mxu0 0.0
  %4009 = vmatprep.subr.mxu0 0.0
  %4010 = vmatpush1.msra.mxu0 0.0
  %4011 = vmatprep.subr.mxu0 0.0
  %4012 = vmatpush1.msra.mxu0 0.0
  %4013 = vmatprep.subr.mxu0 0.0
  %4014 = vmatpush1.msra.mxu0 0.0
  %4015 = vmatprep.subr.mxu0 0.0
  %4016 = vmatpush1.msra.mxu0 0.0
  %4017 = vmatprep.subr.mxu0 0.0
  %4018 = vmatpush1.msra.mxu0 0.0
  %4019 = vmatprep.subr.mxu0 0.0
  %4020 = vmatpush1.msra.mxu0 0.0
  %4021 = vmatprep.subr.mxu0 0.0
  %4022 = vmatpush1.msra.mxu0 0.0
  %4023 = vmatprep.subr.mxu0 0.0
  %4024 = vmatpush1.msra.mxu0 0.0
  %4025 = vmatprep.subr.mxu0 0.0
  %4026 = vmatpush1.msra.mxu0 0.0
  %4027 = vmatprep.subr.mxu0 0.0
  %4028 = vmatpush1.msra.mxu0 0.0
  %4029 = vmatprep.mubr.f32.mxu0 0.0
  %4030 = vmatmul.mubr.f32.gmra.mrb[0].mxu0 %v3960
  %v4031 = vpop.f32.mrb[0].mxu0
  %v4032 = vadd.f32 0.0, %v4031
  %v4033 = vpop.f32.mrb[0].mxu0
  %v4034 = vadd.f32 0.0, %v4033
  %4035 = vdwg.mxu0
  %4036 = vmatprep.subr.mxu0 %v2686
  %4037 = vmatpush1.msra.mxu0 %v2685
  %4038 = vmatprep.subr.mxu0 %v2690
  %4039 = vmatpush1.msra.mxu0 %v2689
  %4040 = vmatprep.subr.mxu0 %v2694
  %4041 = vmatpush1.msra.mxu0 %v2693
  %4042 = vmatprep.subr.mxu0 %v2698
  %4043 = vmatpush1.msra.mxu0 %v2697
  %4044 = vmatprep.subr.mxu0 %v2702
  %4045 = vmatpush1.msra.mxu0 %v2701
  %4046 = vmatprep.subr.mxu0 %v2706
  %4047 = vmatpush1.msra.mxu0 %v2705
  %4048 = vmatprep.subr.mxu0 %v2710
  %4049 = vmatpush1.msra.mxu0 %v2709
  %4050 = vmatprep.subr.mxu0 %v2714
  %4051 = vmatpush1.msra.mxu0 %v2713
  %4052 = vmatprep.subr.mxu0 %v2718
  %4053 = vmatpush1.msra.mxu0 %v2717
  %4054 = vmatprep.subr.mxu0 %v2722
  %4055 = vmatpush1.msra.mxu0 %v2721
  %4056 = vmatprep.subr.mxu0 %v2726
  %4057 = vmatpush1.msra.mxu0 %v2725
  %4058 = vmatprep.subr.mxu0 %v2730
  %4059 = vmatpush1.msra.mxu0 %v2729
  %4060 = vmatprep.subr.mxu0 %v2734
  %4061 = vmatpush1.msra.mxu0 %v2733
  %4062 = vmatprep.subr.mxu0 %v2738
  %4063 = vmatpush1.msra.mxu0 %v2737
  %4064 = vmatprep.subr.mxu0 %v2742
  %4065 = vmatpush1.msra.mxu0 %v2741
  %4066 = vmatprep.subr.mxu0 %v2746
  %4067 = vmatpush1.msra.mxu0 %v2745
  %4068 = vmatprep.subr.mxu0 0.0
  %4069 = vmatpush1.msra.mxu0 0.0
  %4070 = vmatprep.subr.mxu0 0.0
  %4071 = vmatpush1.msra.mxu0 0.0
  %4072 = vmatprep.subr.mxu0 0.0
  %4073 = vmatpush1.msra.mxu0 0.0
  %4074 = vmatprep.subr.mxu0 0.0
  %4075 = vmatpush1.msra.mxu0 0.0
  %4076 = vmatprep.subr.mxu0 0.0
  %4077 = vmatpush1.msra.mxu0 0.0
  %4078 = vmatprep.subr.mxu0 0.0
  %4079 = vmatpush1.msra.mxu0 0.0
  %4080 = vmatprep.subr.mxu0 0.0
  %4081 = vmatpush1.msra.mxu0 0.0
  %4082 = vmatprep.subr.mxu0 0.0
  %4083 = vmatpush1.msra.mxu0 0.0
  %4084 = vmatprep.subr.mxu0 0.0
  %4085 = vmatpush1.msra.mxu0 0.0
  %4086 = vmatprep.subr.mxu0 0.0
  %4087 = vmatpush1.msra.mxu0 0.0
  %4088 = vmatprep.subr.mxu0 0.0
  %4089 = vmatpush1.msra.mxu0 0.0
  %4090 = vmatprep.subr.mxu0 0.0
  %4091 = vmatpush1.msra.mxu0 0.0
  %4092 = vmatprep.subr.mxu0 0.0
  %4093 = vmatpush1.msra.mxu0 0.0
  %4094 = vmatprep.subr.mxu0 0.0
  %4095 = vmatpush1.msra.mxu0 0.0
  %4096 = vmatprep.subr.mxu0 0.0
  %4097 = vmatpush1.msra.mxu0 0.0
  %4098 = vmatprep.subr.mxu0 0.0
  %4099 = vmatpush1.msra.mxu0 0.0
  %4100 = vmatprep.mubr.f32.mxu0 0.0
  %4101 = vmatmul.mubr.f32.gmra.mrb[0].mxu0 %v3960
  %v4102 = vpop.f32.mrb[0].mxu0
  %v4103 = vadd.f32 0.0, %v4102
  %v4104 = vpop.f32.mrb[0].mxu0
  %v4105 = vadd.f32 0.0, %v4104
  %4106 = vdwg.mxu0
  %v4107 = vadd.f32 %v3961, %v4032
  %v4108 = vadd.f32 %v3962, %v4034
  %v4109 = vadd.f32 %v3963, %v4103
  %v4110 = vadd.f32 %v3964, %v4105
  %v4111 = vxor.u32 %v4107, 2147483648
  %v4112 = vmul.f32 %v4111, 1.442695
  %v4113 = vpow.pop %v4112
  %v4114 = vadd.f32 %v4113, 1.0
  %v4115 = vrcp.pop %v4114
  %v4116 = vmul.f32 1.0, %v4115
  %v4117 = vxor.u32 %v4108, 2147483648
  %v4118 = vmul.f32 %v4117, 1.442695
  %v4119 = vpow.pop %v4118
  %v4120 = vadd.f32 %v4119, 1.0
  %v4121 = vrcp.pop %v4120
  %v4122 = vmul.f32 1.0, %v4121
  %v4123 = vtanh.pop %v4109
  %v4124 = vxor.u32 %v4110, 2147483648
  %v4125 = vmul.f32 %v4124, 1.442695
  %v4126 = vpow.pop %v4125
  %v4127 = vadd.f32 %v4126, 1.0
  %v4128 = vrcp.pop %v4127
  %v4129 = vmul.f32 1.0, %v4128
  %v4130 = vmul.f32 %v4122, %v3958
  %v4131 = vmul.f32 %v4116, %v4123
  %v4132 = vadd.f32 %v4130, %v4131
  %v4133 = vtanh.pop %v4132
  %v4134 = vmul.f32 %v4129, %v4133
  %v4135 = vld [vmem:[%s7] sm:$0xff]
  %v4136 = vld [vmem:[%s7 + $0x8] sm:$0xff]
  %v4137 = vld [vmem:[%s7 + $0x10] sm:$0xff]
  %v4138 = vld [vmem:[%s7 + $0x18] sm:$0xff]
  %v4139 = vld [vmem:[%s7 + $0x20] sm:$0xff]
  %v4140 = vld [vmem:[%s7 + $0x28] sm:$0xff]
  %v4141 = vld [vmem:[%s7 + $0x30] sm:$0xff]
  %v4142 = vld [vmem:[%s7 + $0x38] sm:$0xff]
  %v4143 = vld [vmem:[%s7 + $0x40] sm:$0xff]
  %v4144 = vld [vmem:[%s7 + $0x48] sm:$0xff]
  %v4145 = vld [vmem:[%s7 + $0x50] sm:$0xff]
  %v4146 = vld [vmem:[%s7 + $0x58] sm:$0xff]
  %v4147 = vld [vmem:[%s7 + $0x60] sm:$0xff]
  %v4148 = vld [vmem:[%s7 + $0x68] sm:$0xff]
  %v4149 = vld [vmem:[%s7 + $0x70] sm:$0xff]
  %v4150 = vld [vmem:[%s7 + $0x78] sm:$0xff]
  %v4151 = vld [vmem:[%s8] sm:$0x1]
  %v4153 = vlaneseq
  %v4154 = vshrl.u32 %v4153, 7
  %v4155 = vsub.s32 0, %v4154
  %v4156 = vrot.slane %v4151, %v4155
  %4158 = vmatprep.subr.mxu0 0.0
  %4159 = vmatpush1.msra.mxu0 %v4135
  %4160 = vmatprep.subr.mxu0 0.0
  %4161 = vmatpush1.msra.mxu0 %v4136
  %4162 = vmatprep.subr.mxu0 0.0
  %4163 = vmatpush1.msra.mxu0 %v4137
  %4164 = vmatprep.subr.mxu0 0.0
  %4165 = vmatpush1.msra.mxu0 %v4138
  %4166 = vmatprep.subr.mxu0 0.0
  %4167 = vmatpush1.msra.mxu0 %v4139
  %4168 = vmatprep.subr.mxu0 0.0
  %4169 = vmatpush1.msra.mxu0 %v4140
  %4170 = vmatprep.subr.mxu0 0.0
  %4171 = vmatpush1.msra.mxu0 %v4141
  %4172 = vmatprep.subr.mxu0 0.0
  %4173 = vmatpush1.msra.mxu0 %v4142
  %4174 = vmatprep.subr.mxu0 0.0
  %4175 = vmatpush1.msra.mxu0 %v4143
  %4176 = vmatprep.subr.mxu0 0.0
  %4177 = vmatpush1.msra.mxu0 %v4144
  %4178 = vmatprep.subr.mxu0 0.0
  %4179 = vmatpush1.msra.mxu0 %v4145
  %4180 = vmatprep.subr.mxu0 0.0
  %4181 = vmatpush1.msra.mxu0 %v4146
  %4182 = vmatprep.subr.mxu0 0.0
  %4183 = vmatpush1.msra.mxu0 %v4147
  %4184 = vmatprep.subr.mxu0 0.0
  %4185 = vmatpush1.msra.mxu0 %v4148
  %4186 = vmatprep.subr.mxu0 0.0
  %4187 = vmatpush1.msra.mxu0 %v4149
  %4188 = vmatprep.subr.mxu0 0.0
  %4189 = vmatpush1.msra.mxu0 %v4150
  %4190 = vmatprep.subr.mxu0 0.0
  %4191 = vmatpush1.msra.mxu0 0.0
  %4192 = vmatprep.subr.mxu0 0.0
  %4193 = vmatpush1.msra.mxu0 0.0
  %4194 = vmatprep.subr.mxu0 0.0
  %4195 = vmatpush1.msra.mxu0 0.0
  %4196 = vmatprep.subr.mxu0 0.0
  %4197 = vmatpush1.msra.mxu0 0.0
  %4198 = vmatprep.subr.mxu0 0.0
  %4199 = vmatpush1.msra.mxu0 0.0
  %4200 = vmatprep.subr.mxu0 0.0
  %4201 = vmatpush1.msra.mxu0 0.0
  %4202 = vmatprep.subr.mxu0 0.0
  %4203 = vmatpush1.msra.mxu0 0.0
  %4204 = vmatprep.subr.mxu0 0.0
  %4205 = vmatpush1.msra.mxu0 0.0
  %4206 = vmatprep.subr.mxu0 0.0
  %4207 = vmatpush1.msra.mxu0 0.0
  %4208 = vmatprep.subr.mxu0 0.0
  %4209 = vmatpush1.msra.mxu0 0.0
  %4210 = vmatprep.subr.mxu0 0.0
  %4211 = vmatpush1.msra.mxu0 0.0
  %4212 = vmatprep.subr.mxu0 0.0
  %4213 = vmatpush1.msra.mxu0 0.0
  %4214 = vmatprep.subr.mxu0 0.0
  %4215 = vmatpush1.msra.mxu0 0.0
  %4216 = vmatprep.subr.mxu0 0.0
  %4217 = vmatpush1.msra.mxu0 0.0
  %4218 = vmatprep.subr.mxu0 0.0
  %4219 = vmatpush1.msra.mxu0 0.0
  %4220 = vmatprep.subr.mxu0 0.0
  %4221 = vmatpush1.msra.mxu0 0.0
  %4222 = vmatprep.mubr.f32.mxu0 0.0
  %4223 = vmatmul.mubr.f32.gmra.mrb[0].mxu0 %v4134
  %v4224 = vpop.f32.mrb[0].mxu0
  %v4225 = vadd.f32 %v4156, %v4224
  %v4226 = vpop.f32.mrb[0].mxu0
  %4227 = vdwg.mxu0
  %4228 = vst [vmem:[%s9] sm:$0xff] %v4225
  // Predicated region
  $region38: #{my_lstm_forward.1} parent=0 // pred_check
    _
  $region39: #{my_lstm_forward.1} parent=0 // pred_check_branch
    %4230 = sbr.rel (0) target = $region41
  $region40: #{my_lstm_forward.1} parent=0 // pred_region
    _
  $region41: #{my_lstm_forward.1} parent=0 // pred_fallthru
    _
  // Predicated region
  $region42: #{my_lstm_forward.1} parent=0 // pred_check
    _
  $region43: #{my_lstm_forward.1} parent=0 // pred_check_branch
    %4232 = sbr.rel (0) target = $region45
  $region44: #{my_lstm_forward.1} parent=0 // pred_region
    _
  $region45: #{my_lstm_forward.1} parent=0 // pred_fallthru
    _

</llo_original>
